<compile_context>
chip_gen: v5e
topology: v5e:2x2
jax: 0.10.0
libtpu: 0.0.40
codegen_flags: <defaults>
</compile_context>

<pallas_src>
import math
import functools

import numpy as np
import jax
import jax.numpy as jnp
from jax import lax
from jax.experimental import pallas as pl
from jax.experimental.pallas import tpu as pltpu

# ----- ConvDeconvFactor2 default hyper-parameters (repeat=1, conv_k=3, stream=False) -----
FILTERS = 32
LATENT = 16
KSIZE = 3
BN_EPS = 1e-5
NEG_SLOPE = 0.01      # nn.LeakyReLU() default


def _ceil_half(s):    # module: sz = sz // 2 + sz % 2
    return s // 2 + s % 2


# ---------------- constant spatial-selection ("tap") matrices ----------------

def _conv_tap_mats(hin, win, hout, wout, stride=2, pad=1, k=KSIZE):
    """G[t, i, o] = 1 iff input pixel i is read by output pixel o at kernel tap t
    for Conv2d(stride, pad).  All-zero columns implement the zero padding."""
    g = np.zeros((k * k, hin * win, hout * wout), np.float32)
    for ky in range(k):
        for kx in range(k):
            t = ky * k + kx
            for oy in range(hout):
                iy = oy * stride - pad + ky
                if not 0 <= iy < hin:
                    continue
                for ox in range(wout):
                    ix = ox * stride - pad + kx
                    if not 0 <= ix < win:
                        continue
                    g[t, iy * win + ix, oy * wout + ox] = 1.0
    return g


def _deconv_tap_mats(hin, win, hout, wout, stride=2, pad=1, k=KSIZE):
    """G[t, i, o] = 1 iff input pixel i contributes to output pixel o at tap t for
    ConvTranspose2d(stride, pad); output_padding is baked into hout/wout."""
    g = np.zeros((k * k, hin * win, hout * wout), np.float32)
    for ky in range(k):
        for kx in range(k):
            t = ky * k + kx
            for iy in range(hin):
                oy = iy * stride - pad + ky
                if not 0 <= oy < hout:
                    continue
                for ix in range(win):
                    ox = ix * stride - pad + kx
                    if not 0 <= ox < wout:
                        continue
                    g[t, iy * win + ix, oy * wout + ox] = 1.0
    return g


def _conv_w_taps(w):     # Conv2d weight (Cout, Cin, k, k) -> (k*k, Cout, Cin)
    return jnp.transpose(w, (2, 3, 0, 1)).reshape(KSIZE * KSIZE, w.shape[0], w.shape[1])


def _deconv_w_taps(w):   # ConvTranspose2d weight (Cin, Cout, k, k) -> (k*k, Cout, Cin)
    return jnp.transpose(w, (2, 3, 1, 0)).reshape(KSIZE * KSIZE, w.shape[1], w.shape[0])


def _fold_bn(w_taps, bias, g_taps, bn_scale, bn_shift):
    """Fold an eval-mode BatchNorm2d (per-input-channel scale/shift applied BEFORE the
    conv/deconv) into the tap weights + a per-(out-channel, out-pixel) effective bias map,
    so no BatchNorm op remains inside the kernel.  Trace-time only (plain XLA)."""
    w_f = w_taps * bn_scale[None, None, :]                 # scale input channels
    tap_colsum = jnp.sum(g_taps, axis=1)                   # (T, HWout): taps alive per out pixel
    w_shift = jnp.einsum("toc,c->to", w_taps, bn_shift)    # (T, Cout)
    b_eff = bias[:, None] + jnp.einsum("to,tp->op", w_shift, tap_colsum)   # (Cout, HWout)
    return w_f.astype(jnp.float32), b_eff.astype(jnp.float32)


# =========================== Pallas kernels ===========================

def _leaky_relu(v):
    return jnp.where(v > 0, v, NEG_SLOPE * v)


def _conv_block(x, w_ref, g_ref, b_ref):
    """Conv2d(k3, s2, p1) on a channels-first (Cin, Hin*Win) map.  Per tap t: select the
    tapped input pixels with the constant matrix G[t] (MXU), then contract channels.
    b_ref is the BN-folded (Cout, HWout) effective bias map."""
    n_taps = w_ref.shape[0]
    acc = b_ref[...]
    for t in range(n_taps):
        sel = jnp.dot(x, g_ref[t], preferred_element_type=jnp.float32)            # (Cin, HWout)
        acc = acc + jnp.dot(w_ref[t], sel, preferred_element_type=jnp.float32)    # (Cout, HWout)
    return acc


def _deconv_block(x, w_ref, g_ref, b_ref):
    """ConvTranspose2d(k3, s2, p1) on (Cin, Hin*Win): contract channels first (cheap),
    then expand spatially with the constant scatter matrix G[t]."""
    n_taps = w_ref.shape[0]
    acc = b_ref[...]
    for t in range(n_taps):
        ch = jnp.dot(w_ref[t], x, preferred_element_type=jnp.float32)             # (Cout, HWin)
        acc = acc + jnp.dot(ch, g_ref[t], preferred_element_type=jnp.float32)     # (Cout, HWout)
    return acc


def _encoder_kernel(x_ref, w1_ref, b1_ref, g1_ref, w2_ref, b2_ref, g2_ref, o_ref):
    x = x_ref[0]                                             # (Cin, H*W)  (BN1 folded)
    h = _leaky_relu(_conv_block(x, w1_ref, g1_ref, b1_ref))  # Conv2d(Cin -> filters), stride 2
    o_ref[0] = _conv_block(h, w2_ref, g2_ref, b2_ref)        # BN2+Conv2d(filters -> 2*filters)


def _latent_kernel(e_ref, pxp_ref, wenc_ref, benc_ref, wdec_ref, bdec_ref,
                   z_ref, d_ref, *, p_cols):
    z0 = jnp.dot(e_ref[...], wenc_ref[...], preferred_element_type=jnp.float32) + benc_ref[...]
    latent = z0.shape[-1]
    col = lax.broadcasted_iota(jnp.int32, z0.shape, 1)
    z = jnp.where(col >= latent - p_cols, pxp_ref[...], z0)     # z[:, -P:] = p_x
    z_ref[...] = z
    d_ref[...] = jnp.dot(z, wdec_ref[...], preferred_element_type=jnp.float32) + bdec_ref[...]


def _decoder_kernel(f_ref, w3_ref, b3_ref, g3_ref, w4_ref, b4_ref, g4_ref, o_ref):
    f = f_ref[0]                                                  # (2*filters, H2*W2) (BN3 folded)
    h = _leaky_relu(_deconv_block(f, w3_ref, g3_ref, b3_ref))     # ConvT -> (filters, H1*W1)
    o_ref[0] = _deconv_block(h, w4_ref, g4_ref, b4_ref)           # BN4+ConvT -> (Cin, H*W), lane-dense


# =========================== pallas_call wrappers ===========================

def _batch_spec(shape):
    nd = len(shape)
    return pl.BlockSpec((1,) + tuple(shape[1:]), lambda b: (b,) + (0,) * (nd - 1))


def _const_spec(arr):
    nd = arr.ndim
    return pl.BlockSpec(tuple(arr.shape), lambda b: (0,) * nd)


def _encoder_call(x_cm, p):
    bsz = x_cm.shape[0]
    c2, hw2 = p["w2"].shape[1], p["g2"].shape[2]
    ops = (p["w1"], p["b1"], p["g1"], p["w2"], p["b2"], p["g2"])
    return pl.pallas_call(
        _encoder_kernel,
        out_shape=jax.ShapeDtypeStruct((bsz, c2, hw2), jnp.float32),
        grid=(bsz,),
        in_specs=[_batch_spec(x_cm.shape)] + [_const_spec(a) for a in ops],
        out_specs=pl.BlockSpec((1, c2, hw2), lambda b: (b, 0, 0)),
        compiler_params=pltpu.CompilerParams(dimension_semantics=("parallel",)),
    )(x_cm, *ops)


def _latent_call(enc_flat, p_x_pad, p, p_cols):
    bsz, flat = enc_flat.shape
    latent = p["wenc"].shape[1]
    ops = (enc_flat, p_x_pad, p["wenc"], p["benc"], p["wdec"], p["bdec"])
    return pl.pallas_call(
        functools.partial(_latent_kernel, p_cols=p_cols),
        out_shape=(jax.ShapeDtypeStruct((bsz, latent), jnp.float32),
                   jax.ShapeDtypeStruct((bsz, flat), jnp.float32)),
        grid=(1,),
        in_specs=[_const_spec(a) for a in ops],
        out_specs=(pl.BlockSpec((bsz, latent), lambda i: (0, 0)),
                   pl.BlockSpec((bsz, flat), lambda i: (0, 0))),
        compiler_params=pltpu.CompilerParams(dimension_semantics=("arbitrary",)),
    )(*ops)


def _decoder_call(f_cm, p):
    bsz = f_cm.shape[0]
    cout, hw0 = p["w4"].shape[1], p["g4"].shape[2]
    ops = (p["w3"], p["b3"], p["g3"], p["w4"], p["b4"], p["g4"])
    return pl.pallas_call(
        _decoder_kernel,
        out_shape=jax.ShapeDtypeStruct((bsz, cout, hw0), jnp.float32),
        grid=(bsz,),
        in_specs=[_batch_spec(f_cm.shape)] + [_const_spec(a) for a in ops],
        out_specs=pl.BlockSpec((1, cout, hw0), lambda b: (b, 0, 0)),
        compiler_params=pltpu.CompilerParams(dimension_semantics=("parallel",)),
    )(f_cm, *ops)


# =========================== forward pass ===========================

def conv_deconv_forward(params, x, p_x):
    bsz, cin, h, w = x.shape
    latent = params["wenc"].shape[1]
    c2, hw2 = params["w2"].shape[1], params["g2"].shape[2]
    p_cols = p_x.shape[1]

    x_cm = x.reshape(bsz, cin, h * w)                     # contiguous, free
    feat = _encoder_call(x_cm, params)                    # (B, 2*filters, H2*W2)
    enc_flat = feat.reshape(bsz, c2 * hw2)                # == torch's (C,H,W) flatten order
    p_x_pad = jnp.pad(p_x, ((0, 0), (latent - p_cols, 0)))
    z, dec_flat = _latent_call(enc_flat, p_x_pad, params, p_cols)
    dec_feat = dec_flat.reshape(bsz, c2, hw2)             # == torch's Reshape(ch, sz, sz_y)
    out_cm = _decoder_call(dec_feat, params)              # (B, Cin, H*W)
    x_rec = out_cm.reshape(bsz, cin, h, w)
    return x_rec, z                                       # return_z=True


# =========================== parameters ===========================

def init_params(key, x_shape):
    _, cin, h, w = x_shape
    c1 = FILTERS
    c2 = 2 * FILTERS                       # repeat == 1
    h1, w1 = _ceil_half(h), _ceil_half(w)
    h2, w2 = _ceil_half(h1), _ceil_half(w1)
    flat = c2 * h2 * w2

    def unif(k, shape, fan_in):
        b = 1.0 / math.sqrt(fan_in)
        return jax.random.uniform(k, shape, jnp.float32, -b, b)

    ks = jax.random.split(key, 16)
    conv1_w = unif(ks[0], (c1, cin, KSIZE, KSIZE), cin * KSIZE * KSIZE)
    conv1_b = unif(ks[1], (c1,), cin * KSIZE * KSIZE)
    conv2_w = unif(ks[2], (c2, c1, KSIZE, KSIZE), c1 * KSIZE * KSIZE)
    conv2_b = unif(ks[3], (c2,), c1 * KSIZE * KSIZE)
    enc_w = unif(ks[4], (flat, LATENT), flat)             # torch Linear weight, transposed
    enc_b = unif(ks[5], (LATENT,), flat)
    dec_w = unif(ks[6], (LATENT, flat), LATENT)
    dec_b = unif(ks[7], (flat,), LATENT)
    deco1_w = unif(ks[8], (c2, c1, KSIZE, KSIZE), c1 * KSIZE * KSIZE)   # ConvT: (Cin,Cout,k,k)
    deco1_b = unif(ks[9], (c1,), c1 * KSIZE * KSIZE)
    deco2_w = unif(ks[10], (c1, cin, KSIZE, KSIZE), cin * KSIZE * KSIZE)
    deco2_b = unif(ks[11], (cin,), cin * KSIZE * KSIZE)

    def bn(kk, c):   # non-trivial eval-mode BatchNorm2d stats so the fold is exercised
        kg, kb, km, kv = jax.random.split(kk, 4)
        gamma = 1.0 + 0.2 * jax.random.normal(kg, (c,), jnp.float32)
        beta = 0.2 * jax.random.normal(kb, (c,), jnp.float32)
        mean = 0.2 * jax.random.normal(km, (c,), jnp.float32)
        var = jax.random.uniform(kv, (c,), jnp.float32, 0.5, 1.5)
        scale = gamma / jnp.sqrt(var + BN_EPS)
        shift = beta - mean * scale
        return scale, shift

    bn1s, bn1b = bn(ks[12], cin)
    bn2s, bn2b = bn(ks[13], c1)
    bn3s, bn3b = bn(ks[14], c2)
    bn4s, bn4b = bn(ks[15], c1)

    g1 = jnp.asarray(_conv_tap_mats(h, w, h1, w1))
    g2 = jnp.asarray(_conv_tap_mats(h1, w1, h2, w2))
    g3 = jnp.asarray(_deconv_tap_mats(h2, w2, h1, w1))
    g4 = jnp.asarray(_deconv_tap_mats(h1, w1, h, w))

    # Fold each BatchNorm (which precedes its conv/deconv) into tap weights + bias maps.
    w1f, b1e = _fold_bn(_conv_w_taps(conv1_w), conv1_b, g1, bn1s, bn1b)
    w2f, b2e = _fold_bn(_conv_w_taps(conv2_w), conv2_b, g2, bn2s, bn2b)
    w3f, b3e = _fold_bn(_deconv_w_taps(deco1_w), deco1_b, g3, bn3s, bn3b)
    w4f, b4e = _fold_bn(_deconv_w_taps(deco2_w), deco2_b, g4, bn4s, bn4b)

    return dict(
        # raw (torch-layout) weights + BN affine -- used only by the pure-JAX reference check
        conv1_w=conv1_w, conv1_b=conv1_b, conv2_w=conv2_w, conv2_b=conv2_b,
        deco1_w=deco1_w, deco1_b=deco1_b, deco2_w=deco2_w, deco2_b=deco2_b,
        bn1s=bn1s.reshape(cin, 1), bn1b=bn1b.reshape(cin, 1),
        bn2s=bn2s.reshape(c1, 1), bn2b=bn2b.reshape(c1, 1),
        bn3s=bn3s.reshape(c2, 1), bn3b=bn3b.reshape(c2, 1),
        bn4s=bn4s.reshape(c1, 1), bn4b=bn4b.reshape(c1, 1),
        # kernel-ready tensors (BatchNorm folded at trace time)
        w1=w1f, b1=b1e, g1=g1,
        w2=w2f, b2=b2e, g2=g2,
        w3=w3f, b3=b3e, g3=g3,
        w4=w4f, b4=b4e, g4=g4,
        wenc=enc_w, benc=enc_b.reshape(1, LATENT),
        wdec=dec_w, bdec=dec_b.reshape(1, flat),
    )


# =========================== pure-JAX reference ===========================

def reference_forward(params, x, p_x):
    """XLA reference of ConvDeconvFactor2.forward (eval-mode BatchNorm, unfolded)."""
    bsz, cin, h, w = x.shape
    h1, w1 = _ceil_half(h), _ceil_half(w)
    h2, w2 = _ceil_half(h1), _ceil_half(w1)
    c2 = params["w2"].shape[1]
    op1h, op1w = (h1 % 2) ^ 1, (w1 % 2) ^ 1     # output_padding of in-loop deconv
    op0h, op0w = (h % 2) ^ 1, (w % 2) ^ 1       # output_padding of final deconv
    dn = ("NCHW", "OIHW", "NCHW")

    def bn(t, s, b):
        return t * s.reshape(1, -1, 1, 1) + b.reshape(1, -1, 1, 1)

    def lrelu(t):
        return jnp.where(t > 0, t, NEG_SLOPE * t)

    def conv(t, wgt, bias):
        y = lax.conv_general_dilated(t, wgt, (2, 2), ((1, 1), (1, 1)), dimension_numbers=dn)
        return y + bias.reshape(1, -1, 1, 1)

    def tconv(t, wgt, bias, oph, opw):
        wf = jnp.transpose(wgt, (1, 0, 2, 3))[:, :, ::-1, ::-1]
        y = lax.conv_general_dilated(
            t, wf, (1, 1),
            ((KSIZE - 2, KSIZE - 2 + oph), (KSIZE - 2, KSIZE - 2 + opw)),
            lhs_dilation=(2, 2), dimension_numbers=dn)
        return y + bias.reshape(1, -1, 1, 1)

    e = bn(x, params["bn1s"], params["bn1b"])
    e = conv(e, params["conv1_w"], params["conv1_b"])
    e = lrelu(e)
    e = bn(e, params["bn2s"], params["bn2b"])
    e = conv(e, params["conv2_w"], params["conv2_b"])
    z = e.reshape(bsz, -1) @ params["wenc"] + params["benc"].reshape(-1)
    z = z.at[:, -p_x.shape[1]:].set(p_x)
    d = z @ params["wdec"] + params["bdec"].reshape(-1)
    d = d.reshape(bsz, c2, h2, w2)
    d = bn(d, params["bn3s"], params["bn3b"])
    d = tconv(d, params["deco1_w"], params["deco1_b"], op1h, op1w)
    d = lrelu(d)
    d = bn(d, params["bn4s"], params["bn4b"])
    d = tconv(d, params["deco2_w"], params["deco2_b"], op0h, op0w)
    return d, z


# =========================== driver ===========================

if __name__ == "__main__":
    key = jax.random.PRNGKey(0)
    kp, kx, kpx = jax.random.split(key, 3)

    B, CIN, H, W = 2, 4, 16, 16
    P = 8                                   # p_x columns (<= latentDim)

    params = init_params(kp, (B, CIN, H, W))
    x = jax.random.normal(kx, (B, CIN, H, W), jnp.float32)
    p_x = jax.random.normal(kpx, (B, P), jnp.float32)

    fwd = jax.jit(conv_deconv_forward)
    x_rec, z = fwd(params, x, p_x)
    jax.block_until_ready((x_rec, z))

    assert x_rec.shape == (B, CIN, H, W) and z.shape == (B, LATENT)
    assert bool(jnp.all(jnp.isfinite(x_rec))) and bool(jnp.all(jnp.isfinite(z)))
    # latent overwrite semantics: z[:, -P:] == p_x exactly
    assert bool(jnp.allclose(z[:, -P:], p_x))

    # validate against a pure-JAX/XLA reference of the same module (unfolded BatchNorm path)
    x_ref, z_ref = reference_forward(params, x, p_x)
    assert bool(jnp.allclose(z, z_ref, rtol=5e-4, atol=5e-4))
    assert bool(jnp.allclose(x_rec, x_ref, rtol=5e-4, atol=5e-4))

    print("KERNEL_OK")
</pallas_src>

<mosaic_0001>
module attributes {stable_mosaic.version = 11 : i64} {
  func.func @_encoder_kernel(%arg0: i32, %arg1: memref<1x4x256xf32, #tpu.memory_space<vmem>>, %arg2: memref<9x32x4xf32, #tpu.memory_space<vmem>>, %arg3: memref<32x64xf32, #tpu.memory_space<vmem>>, %arg4: memref<9x256x64xf32, #tpu.memory_space<vmem>>, %arg5: memref<9x64x32xf32, #tpu.memory_space<vmem>>, %arg6: memref<64x16xf32, #tpu.memory_space<vmem>>, %arg7: memref<9x64x16xf32, #tpu.memory_space<vmem>>, %arg8: memref<1x64x16xf32, #tpu.memory_space<vmem>>) attributes {dimension_semantics = [#tpu.dimension_semantics<parallel>], iteration_bounds = array<i64: 2>, scalar_prefetch = 0 : i64, scratch_operands = 0 : i64, tpu.core_type = #tpu.core_type<tc>, window_params = [{transform_indices = @transform_0, window_bounds = array<i64: 1, 4, 256>}, {pipeline_mode = #tpu.pipeline_mode<synchronous>, transform_indices = @transform_1, window_bounds = array<i64: 9, 32, 4>}, {pipeline_mode = #tpu.pipeline_mode<synchronous>, transform_indices = @transform_2, window_bounds = array<i64: 32, 64>}, {pipeline_mode = #tpu.pipeline_mode<synchronous>, transform_indices = @transform_3, window_bounds = array<i64: 9, 256, 64>}, {pipeline_mode = #tpu.pipeline_mode<synchronous>, transform_indices = @transform_4, window_bounds = array<i64: 9, 64, 32>}, {pipeline_mode = #tpu.pipeline_mode<synchronous>, transform_indices = @transform_5, window_bounds = array<i64: 64, 16>}, {pipeline_mode = #tpu.pipeline_mode<synchronous>, transform_indices = @transform_6, window_bounds = array<i64: 9, 64, 16>}, {transform_indices = @transform_7, window_bounds = array<i64: 1, 64, 16>}]} {
    %c0 = arith.constant 0 : index
    %c0_0 = arith.constant 0 : index
    %c0_1 = arith.constant 0 : index
    %0 = vector.load %arg1[%c0, %c0_0, %c0_1] : memref<1x4x256xf32, #tpu.memory_space<vmem>>, vector<1x4x256xf32>
    %1 = vector.shape_cast %0 : vector<1x4x256xf32> to vector<4x256xf32>
    %c0_2 = arith.constant 0 : index
    %c0_3 = arith.constant 0 : index
    %2 = vector.load %arg3[%c0_2, %c0_3] : memref<32x64xf32, #tpu.memory_space<vmem>>, vector<32x64xf32>
    %c0_4 = arith.constant 0 : index
    %c0_5 = arith.constant 0 : index
    %c0_6 = arith.constant 0 : index
    %3 = vector.load %arg4[%c0_4, %c0_5, %c0_6] : memref<9x256x64xf32, #tpu.memory_space<vmem>>, vector<1x256x64xf32>
    %4 = vector.shape_cast %3 : vector<1x256x64xf32> to vector<256x64xf32>
    %cst = arith.constant dense<0.000000e+00> : vector<4x64xf32>
    %5 = tpu.matmul %1, %4, %cst {dimension_numbers = #tpu.dot_dimension_numbers<[1], [0], [0], [1], [0, 0, 1, 1], [], []>} : vector<4x256xf32>, vector<256x64xf32>, vector<4x64xf32> -> vector<4x64xf32>
    %c0_7 = arith.constant 0 : index
    %c0_8 = arith.constant 0 : index
    %c0_9 = arith.constant 0 : index
    %6 = vector.load %arg2[%c0_7, %c0_8, %c0_9] : memref<9x32x4xf32, #tpu.memory_space<vmem>>, vector<1x32x4xf32>
    %7 = vector.shape_cast %6 : vector<1x32x4xf32> to vector<32x4xf32>
    %cst_10 = arith.constant dense<0.000000e+00> : vector<32x64xf32>
    %8 = tpu.matmul %7, %5, %cst_10 {dimension_numbers = #tpu.dot_dimension_numbers<[1], [0], [0], [1], [0, 0, 1, 1], [], []>} : vector<32x4xf32>, vector<4x64xf32>, vector<32x64xf32> -> vector<32x64xf32>
    %9 = arith.addf %2, %8 : vector<32x64xf32>
    %c1 = arith.constant 1 : index
    %c0_11 = arith.constant 0 : index
    %c0_12 = arith.constant 0 : index
    %10 = vector.load %arg4[%c1, %c0_11, %c0_12] : memref<9x256x64xf32, #tpu.memory_space<vmem>>, vector<1x256x64xf32>
    %11 = vector.shape_cast %10 : vector<1x256x64xf32> to vector<256x64xf32>
    %cst_13 = arith.constant dense<0.000000e+00> : vector<4x64xf32>
    %12 = tpu.matmul %1, %11, %cst_13 {dimension_numbers = #tpu.dot_dimension_numbers<[1], [0], [0], [1], [0, 0, 1, 1], [], []>} : vector<4x256xf32>, vector<256x64xf32>, vector<4x64xf32> -> vector<4x64xf32>
    %c1_14 = arith.constant 1 : index
    %c0_15 = arith.constant 0 : index
    %c0_16 = arith.constant 0 : index
    %13 = vector.load %arg2[%c1_14, %c0_15, %c0_16] : memref<9x32x4xf32, #tpu.memory_space<vmem>>, vector<1x32x4xf32>
    %14 = vector.shape_cast %13 : vector<1x32x4xf32> to vector<32x4xf32>
    %cst_17 = arith.constant dense<0.000000e+00> : vector<32x64xf32>
    %15 = tpu.matmul %14, %12, %cst_17 {dimension_numbers = #tpu.dot_dimension_numbers<[1], [0], [0], [1], [0, 0, 1, 1], [], []>} : vector<32x4xf32>, vector<4x64xf32>, vector<32x64xf32> -> vector<32x64xf32>
    %16 = arith.addf %9, %15 : vector<32x64xf32>
    %c2 = arith.constant 2 : index
    %c0_18 = arith.constant 0 : index
    %c0_19 = arith.constant 0 : index
    %17 = vector.load %arg4[%c2, %c0_18, %c0_19] : memref<9x256x64xf32, #tpu.memory_space<vmem>>, vector<1x256x64xf32>
    %18 = vector.shape_cast %17 : vector<1x256x64xf32> to vector<256x64xf32>
    %cst_20 = arith.constant dense<0.000000e+00> : vector<4x64xf32>
    %19 = tpu.matmul %1, %18, %cst_20 {dimension_numbers = #tpu.dot_dimension_numbers<[1], [0], [0], [1], [0, 0, 1, 1], [], []>} : vector<4x256xf32>, vector<256x64xf32>, vector<4x64xf32> -> vector<4x64xf32>
    %c2_21 = arith.constant 2 : index
    %c0_22 = arith.constant 0 : index
    %c0_23 = arith.constant 0 : index
    %20 = vector.load %arg2[%c2_21, %c0_22, %c0_23] : memref<9x32x4xf32, #tpu.memory_space<vmem>>, vector<1x32x4xf32>
    %21 = vector.shape_cast %20 : vector<1x32x4xf32> to vector<32x4xf32>
    %cst_24 = arith.constant dense<0.000000e+00> : vector<32x64xf32>
    %22 = tpu.matmul %21, %19, %cst_24 {dimension_numbers = #tpu.dot_dimension_numbers<[1], [0], [0], [1], [0, 0, 1, 1], [], []>} : vector<32x4xf32>, vector<4x64xf32>, vector<32x64xf32> -> vector<32x64xf32>
    %23 = arith.addf %16, %22 : vector<32x64xf32>
    %c3 = arith.constant 3 : index
    %c0_25 = arith.constant 0 : index
    %c0_26 = arith.constant 0 : index
    %24 = vector.load %arg4[%c3, %c0_25, %c0_26] : memref<9x256x64xf32, #tpu.memory_space<vmem>>, vector<1x256x64xf32>
    %25 = vector.shape_cast %24 : vector<1x256x64xf32> to vector<256x64xf32>
    %cst_27 = arith.constant dense<0.000000e+00> : vector<4x64xf32>
    %26 = tpu.matmul %1, %25, %cst_27 {dimension_numbers = #tpu.dot_dimension_numbers<[1], [0], [0], [1], [0, 0, 1, 1], [], []>} : vector<4x256xf32>, vector<256x64xf32>, vector<4x64xf32> -> vector<4x64xf32>
    %c3_28 = arith.constant 3 : index
    %c0_29 = arith.constant 0 : index
    %c0_30 = arith.constant 0 : index
    %27 = vector.load %arg2[%c3_28, %c0_29, %c0_30] : memref<9x32x4xf32, #tpu.memory_space<vmem>>, vector<1x32x4xf32>
    %28 = vector.shape_cast %27 : vector<1x32x4xf32> to vector<32x4xf32>
    %cst_31 = arith.constant dense<0.000000e+00> : vector<32x64xf32>
    %29 = tpu.matmul %28, %26, %cst_31 {dimension_numbers = #tpu.dot_dimension_numbers<[1], [0], [0], [1], [0, 0, 1, 1], [], []>} : vector<32x4xf32>, vector<4x64xf32>, vector<32x64xf32> -> vector<32x64xf32>
    %30 = arith.addf %23, %29 : vector<32x64xf32>
    %c4 = arith.constant 4 : index
    %c0_32 = arith.constant 0 : index
    %c0_33 = arith.constant 0 : index
    %31 = vector.load %arg4[%c4, %c0_32, %c0_33] : memref<9x256x64xf32, #tpu.memory_space<vmem>>, vector<1x256x64xf32>
    %32 = vector.shape_cast %31 : vector<1x256x64xf32> to vector<256x64xf32>
    %cst_34 = arith.constant dense<0.000000e+00> : vector<4x64xf32>
    %33 = tpu.matmul %1, %32, %cst_34 {dimension_numbers = #tpu.dot_dimension_numbers<[1], [0], [0], [1], [0, 0, 1, 1], [], []>} : vector<4x256xf32>, vector<256x64xf32>, vector<4x64xf32> -> vector<4x64xf32>
    %c4_35 = arith.constant 4 : index
    %c0_36 = arith.constant 0 : index
    %c0_37 = arith.constant 0 : index
    %34 = vector.load %arg2[%c4_35, %c0_36, %c0_37] : memref<9x32x4xf32, #tpu.memory_space<vmem>>, vector<1x32x4xf32>
    %35 = vector.shape_cast %34 : vector<1x32x4xf32> to vector<32x4xf32>
    %cst_38 = arith.constant dense<0.000000e+00> : vector<32x64xf32>
    %36 = tpu.matmul %35, %33, %cst_38 {dimension_numbers = #tpu.dot_dimension_numbers<[1], [0], [0], [1], [0, 0, 1, 1], [], []>} : vector<32x4xf32>, vector<4x64xf32>, vector<32x64xf32> -> vector<32x64xf32>
    %37 = arith.addf %30, %36 : vector<32x64xf32>
    %c5 = arith.constant 5 : index
    %c0_39 = arith.constant 0 : index
    %c0_40 = arith.constant 0 : index
    %38 = vector.load %arg4[%c5, %c0_39, %c0_40] : memref<9x256x64xf32, #tpu.memory_space<vmem>>, vector<1x256x64xf32>
    %39 = vector.shape_cast %38 : vector<1x256x64xf32> to vector<256x64xf32>
    %cst_41 = arith.constant dense<0.000000e+00> : vector<4x64xf32>
    %40 = tpu.matmul %1, %39, %cst_41 {dimension_numbers = #tpu.dot_dimension_numbers<[1], [0], [0], [1], [0, 0, 1, 1], [], []>} : vector<4x256xf32>, vector<256x64xf32>, vector<4x64xf32> -> vector<4x64xf32>
    %c5_42 = arith.constant 5 : index
    %c0_43 = arith.constant 0 : index
    %c0_44 = arith.constant 0 : index
    %41 = vector.load %arg2[%c5_42, %c0_43, %c0_44] : memref<9x32x4xf32, #tpu.memory_space<vmem>>, vector<1x32x4xf32>
    %42 = vector.shape_cast %41 : vector<1x32x4xf32> to vector<32x4xf32>
    %cst_45 = arith.constant dense<0.000000e+00> : vector<32x64xf32>
    %43 = tpu.matmul %42, %40, %cst_45 {dimension_numbers = #tpu.dot_dimension_numbers<[1], [0], [0], [1], [0, 0, 1, 1], [], []>} : vector<32x4xf32>, vector<4x64xf32>, vector<32x64xf32> -> vector<32x64xf32>
    %44 = arith.addf %37, %43 : vector<32x64xf32>
    %c6 = arith.constant 6 : index
    %c0_46 = arith.constant 0 : index
    %c0_47 = arith.constant 0 : index
    %45 = vector.load %arg4[%c6, %c0_46, %c0_47] : memref<9x256x64xf32, #tpu.memory_space<vmem>>, vector<1x256x64xf32>
    %46 = vector.shape_cast %45 : vector<1x256x64xf32> to vector<256x64xf32>
    %cst_48 = arith.constant dense<0.000000e+00> : vector<4x64xf32>
    %47 = tpu.matmul %1, %46, %cst_48 {dimension_numbers = #tpu.dot_dimension_numbers<[1], [0], [0], [1], [0, 0, 1, 1], [], []>} : vector<4x256xf32>, vector<256x64xf32>, vector<4x64xf32> -> vector<4x64xf32>
    %c6_49 = arith.constant 6 : index
    %c0_50 = arith.constant 0 : index
    %c0_51 = arith.constant 0 : index
    %48 = vector.load %arg2[%c6_49, %c0_50, %c0_51] : memref<9x32x4xf32, #tpu.memory_space<vmem>>, vector<1x32x4xf32>
    %49 = vector.shape_cast %48 : vector<1x32x4xf32> to vector<32x4xf32>
    %cst_52 = arith.constant dense<0.000000e+00> : vector<32x64xf32>
    %50 = tpu.matmul %49, %47, %cst_52 {dimension_numbers = #tpu.dot_dimension_numbers<[1], [0], [0], [1], [0, 0, 1, 1], [], []>} : vector<32x4xf32>, vector<4x64xf32>, vector<32x64xf32> -> vector<32x64xf32>
    %51 = arith.addf %44, %50 : vector<32x64xf32>
    %c7 = arith.constant 7 : index
    %c0_53 = arith.constant 0 : index
    %c0_54 = arith.constant 0 : index
    %52 = vector.load %arg4[%c7, %c0_53, %c0_54] : memref<9x256x64xf32, #tpu.memory_space<vmem>>, vector<1x256x64xf32>
    %53 = vector.shape_cast %52 : vector<1x256x64xf32> to vector<256x64xf32>
    %cst_55 = arith.constant dense<0.000000e+00> : vector<4x64xf32>
    %54 = tpu.matmul %1, %53, %cst_55 {dimension_numbers = #tpu.dot_dimension_numbers<[1], [0], [0], [1], [0, 0, 1, 1], [], []>} : vector<4x256xf32>, vector<256x64xf32>, vector<4x64xf32> -> vector<4x64xf32>
    %c7_56 = arith.constant 7 : index
    %c0_57 = arith.constant 0 : index
    %c0_58 = arith.constant 0 : index
    %55 = vector.load %arg2[%c7_56, %c0_57, %c0_58] : memref<9x32x4xf32, #tpu.memory_space<vmem>>, vector<1x32x4xf32>
    %56 = vector.shape_cast %55 : vector<1x32x4xf32> to vector<32x4xf32>
    %cst_59 = arith.constant dense<0.000000e+00> : vector<32x64xf32>
    %57 = tpu.matmul %56, %54, %cst_59 {dimension_numbers = #tpu.dot_dimension_numbers<[1], [0], [0], [1], [0, 0, 1, 1], [], []>} : vector<32x4xf32>, vector<4x64xf32>, vector<32x64xf32> -> vector<32x64xf32>
    %58 = arith.addf %51, %57 : vector<32x64xf32>
    %c8 = arith.constant 8 : index
    %c0_60 = arith.constant 0 : index
    %c0_61 = arith.constant 0 : index
    %59 = vector.load %arg4[%c8, %c0_60, %c0_61] : memref<9x256x64xf32, #tpu.memory_space<vmem>>, vector<1x256x64xf32>
    %60 = vector.shape_cast %59 : vector<1x256x64xf32> to vector<256x64xf32>
    %cst_62 = arith.constant dense<0.000000e+00> : vector<4x64xf32>
    %61 = tpu.matmul %1, %60, %cst_62 {dimension_numbers = #tpu.dot_dimension_numbers<[1], [0], [0], [1], [0, 0, 1, 1], [], []>} : vector<4x256xf32>, vector<256x64xf32>, vector<4x64xf32> -> vector<4x64xf32>
    %c8_63 = arith.constant 8 : index
    %c0_64 = arith.constant 0 : index
    %c0_65 = arith.constant 0 : index
    %62 = vector.load %arg2[%c8_63, %c0_64, %c0_65] : memref<9x32x4xf32, #tpu.memory_space<vmem>>, vector<1x32x4xf32>
    %63 = vector.shape_cast %62 : vector<1x32x4xf32> to vector<32x4xf32>
    %cst_66 = arith.constant dense<0.000000e+00> : vector<32x64xf32>
    %64 = tpu.matmul %63, %61, %cst_66 {dimension_numbers = #tpu.dot_dimension_numbers<[1], [0], [0], [1], [0, 0, 1, 1], [], []>} : vector<32x4xf32>, vector<4x64xf32>, vector<32x64xf32> -> vector<32x64xf32>
    %65 = arith.addf %58, %64 : vector<32x64xf32>
    %cst_67 = arith.constant 0.000000e+00 : f32
    %66 = vector.broadcast %cst_67 : f32 to vector<32x64xf32>
    %67 = arith.cmpf ogt, %65, %66 : vector<32x64xf32>
    %cst_68 = arith.constant 0.00999999977 : f32
    %68 = vector.broadcast %cst_68 : f32 to vector<32x64xf32>
    %69 = arith.mulf %68, %65 : vector<32x64xf32>
    %70 = arith.select %67, %65, %69 : vector<32x64xi1>, vector<32x64xf32>
    %c0_69 = arith.constant 0 : index
    %c0_70 = arith.constant 0 : index
    %71 = vector.load %arg6[%c0_69, %c0_70] : memref<64x16xf32, #tpu.memory_space<vmem>>, vector<64x16xf32>
    %c0_71 = arith.constant 0 : index
    %c0_72 = arith.constant 0 : index
    %c0_73 = arith.constant 0 : index
    %72 = vector.load %arg7[%c0_71, %c0_72, %c0_73] : memref<9x64x16xf32, #tpu.memory_space<vmem>>, vector<1x64x16xf32>
    %73 = vector.shape_cast %72 : vector<1x64x16xf32> to vector<64x16xf32>
    %cst_74 = arith.constant dense<0.000000e+00> : vector<32x16xf32>
    %74 = tpu.matmul %70, %73, %cst_74 {dimension_numbers = #tpu.dot_dimension_numbers<[1], [0], [0], [1], [0, 0, 1, 1], [], []>} : vector<32x64xf32>, vector<64x16xf32>, vector<32x16xf32> -> vector<32x16xf32>
    %c0_75 = arith.constant 0 : index
    %c0_76 = arith.constant 0 : index
    %c0_77 = arith.constant 0 : index
    %75 = vector.load %arg5[%c0_75, %c0_76, %c0_77] : memref<9x64x32xf32, #tpu.memory_space<vmem>>, vector<1x64x32xf32>
    %76 = vector.shape_cast %75 : vector<1x64x32xf32> to vector<64x32xf32>
    %cst_78 = arith.constant dense<0.000000e+00> : vector<64x16xf32>
    %77 = tpu.matmul %76, %74, %cst_78 {dimension_numbers = #tpu.dot_dimension_numbers<[1], [0], [0], [1], [0, 0, 1, 1], [], []>} : vector<64x32xf32>, vector<32x16xf32>, vector<64x16xf32> -> vector<64x16xf32>
    %78 = arith.addf %71, %77 : vector<64x16xf32>
    %c1_79 = arith.constant 1 : index
    %c0_80 = arith.constant 0 : index
    %c0_81 = arith.constant 0 : index
    %79 = vector.load %arg7[%c1_79, %c0_80, %c0_81] : memref<9x64x16xf32, #tpu.memory_space<vmem>>, vector<1x64x16xf32>
    %80 = vector.shape_cast %79 : vector<1x64x16xf32> to vector<64x16xf32>
    %cst_82 = arith.constant dense<0.000000e+00> : vector<32x16xf32>
    %81 = tpu.matmul %70, %80, %cst_82 {dimension_numbers = #tpu.dot_dimension_numbers<[1], [0], [0], [1], [0, 0, 1, 1], [], []>} : vector<32x64xf32>, vector<64x16xf32>, vector<32x16xf32> -> vector<32x16xf32>
    %c1_83 = arith.constant 1 : index
    %c0_84 = arith.constant 0 : index
    %c0_85 = arith.constant 0 : index
    %82 = vector.load %arg5[%c1_83, %c0_84, %c0_85] : memref<9x64x32xf32, #tpu.memory_space<vmem>>, vector<1x64x32xf32>
    %83 = vector.shape_cast %82 : vector<1x64x32xf32> to vector<64x32xf32>
    %cst_86 = arith.constant dense<0.000000e+00> : vector<64x16xf32>
    %84 = tpu.matmul %83, %81, %cst_86 {dimension_numbers = #tpu.dot_dimension_numbers<[1], [0], [0], [1], [0, 0, 1, 1], [], []>} : vector<64x32xf32>, vector<32x16xf32>, vector<64x16xf32> -> vector<64x16xf32>
    %85 = arith.addf %78, %84 : vector<64x16xf32>
    %c2_87 = arith.constant 2 : index
    %c0_88 = arith.constant 0 : index
    %c0_89 = arith.constant 0 : index
    %86 = vector.load %arg7[%c2_87, %c0_88, %c0_89] : memref<9x64x16xf32, #tpu.memory_space<vmem>>, vector<1x64x16xf32>
    %87 = vector.shape_cast %86 : vector<1x64x16xf32> to vector<64x16xf32>
    %cst_90 = arith.constant dense<0.000000e+00> : vector<32x16xf32>
    %88 = tpu.matmul %70, %87, %cst_90 {dimension_numbers = #tpu.dot_dimension_numbers<[1], [0], [0], [1], [0, 0, 1, 1], [], []>} : vector<32x64xf32>, vector<64x16xf32>, vector<32x16xf32> -> vector<32x16xf32>
    %c2_91 = arith.constant 2 : index
    %c0_92 = arith.constant 0 : index
    %c0_93 = arith.constant 0 : index
    %89 = vector.load %arg5[%c2_91, %c0_92, %c0_93] : memref<9x64x32xf32, #tpu.memory_space<vmem>>, vector<1x64x32xf32>
    %90 = vector.shape_cast %89 : vector<1x64x32xf32> to vector<64x32xf32>
    %cst_94 = arith.constant dense<0.000000e+00> : vector<64x16xf32>
    %91 = tpu.matmul %90, %88, %cst_94 {dimension_numbers = #tpu.dot_dimension_numbers<[1], [0], [0], [1], [0, 0, 1, 1], [], []>} : vector<64x32xf32>, vector<32x16xf32>, vector<64x16xf32> -> vector<64x16xf32>
    %92 = arith.addf %85, %91 : vector<64x16xf32>
    %c3_95 = arith.constant 3 : index
    %c0_96 = arith.constant 0 : index
    %c0_97 = arith.constant 0 : index
    %93 = vector.load %arg7[%c3_95, %c0_96, %c0_97] : memref<9x64x16xf32, #tpu.memory_space<vmem>>, vector<1x64x16xf32>
    %94 = vector.shape_cast %93 : vector<1x64x16xf32> to vector<64x16xf32>
    %cst_98 = arith.constant dense<0.000000e+00> : vector<32x16xf32>
    %95 = tpu.matmul %70, %94, %cst_98 {dimension_numbers = #tpu.dot_dimension_numbers<[1], [0], [0], [1], [0, 0, 1, 1], [], []>} : vector<32x64xf32>, vector<64x16xf32>, vector<32x16xf32> -> vector<32x16xf32>
    %c3_99 = arith.constant 3 : index
    %c0_100 = arith.constant 0 : index
    %c0_101 = arith.constant 0 : index
    %96 = vector.load %arg5[%c3_99, %c0_100, %c0_101] : memref<9x64x32xf32, #tpu.memory_space<vmem>>, vector<1x64x32xf32>
    %97 = vector.shape_cast %96 : vector<1x64x32xf32> to vector<64x32xf32>
    %cst_102 = arith.constant dense<0.000000e+00> : vector<64x16xf32>
    %98 = tpu.matmul %97, %95, %cst_102 {dimension_numbers = #tpu.dot_dimension_numbers<[1], [0], [0], [1], [0, 0, 1, 1], [], []>} : vector<64x32xf32>, vector<32x16xf32>, vector<64x16xf32> -> vector<64x16xf32>
    %99 = arith.addf %92, %98 : vector<64x16xf32>
    %c4_103 = arith.constant 4 : index
    %c0_104 = arith.constant 0 : index
    %c0_105 = arith.constant 0 : index
    %100 = vector.load %arg7[%c4_103, %c0_104, %c0_105] : memref<9x64x16xf32, #tpu.memory_space<vmem>>, vector<1x64x16xf32>
    %101 = vector.shape_cast %100 : vector<1x64x16xf32> to vector<64x16xf32>
    %cst_106 = arith.constant dense<0.000000e+00> : vector<32x16xf32>
    %102 = tpu.matmul %70, %101, %cst_106 {dimension_numbers = #tpu.dot_dimension_numbers<[1], [0], [0], [1], [0, 0, 1, 1], [], []>} : vector<32x64xf32>, vector<64x16xf32>, vector<32x16xf32> -> vector<32x16xf32>
    %c4_107 = arith.constant 4 : index
    %c0_108 = arith.constant 0 : index
    %c0_109 = arith.constant 0 : index
    %103 = vector.load %arg5[%c4_107, %c0_108, %c0_109] : memref<9x64x32xf32, #tpu.memory_space<vmem>>, vector<1x64x32xf32>
    %104 = vector.shape_cast %103 : vector<1x64x32xf32> to vector<64x32xf32>
    %cst_110 = arith.constant dense<0.000000e+00> : vector<64x16xf32>
    %105 = tpu.matmul %104, %102, %cst_110 {dimension_numbers = #tpu.dot_dimension_numbers<[1], [0], [0], [1], [0, 0, 1, 1], [], []>} : vector<64x32xf32>, vector<32x16xf32>, vector<64x16xf32> -> vector<64x16xf32>
    %106 = arith.addf %99, %105 : vector<64x16xf32>
    %c5_111 = arith.constant 5 : index
    %c0_112 = arith.constant 0 : index
    %c0_113 = arith.constant 0 : index
    %107 = vector.load %arg7[%c5_111, %c0_112, %c0_113] : memref<9x64x16xf32, #tpu.memory_space<vmem>>, vector<1x64x16xf32>
    %108 = vector.shape_cast %107 : vector<1x64x16xf32> to vector<64x16xf32>
    %cst_114 = arith.constant dense<0.000000e+00> : vector<32x16xf32>
    %109 = tpu.matmul %70, %108, %cst_114 {dimension_numbers = #tpu.dot_dimension_numbers<[1], [0], [0], [1], [0, 0, 1, 1], [], []>} : vector<32x64xf32>, vector<64x16xf32>, vector<32x16xf32> -> vector<32x16xf32>
    %c5_115 = arith.constant 5 : index
    %c0_116 = arith.constant 0 : index
    %c0_117 = arith.constant 0 : index
    %110 = vector.load %arg5[%c5_115, %c0_116, %c0_117] : memref<9x64x32xf32, #tpu.memory_space<vmem>>, vector<1x64x32xf32>
    %111 = vector.shape_cast %110 : vector<1x64x32xf32> to vector<64x32xf32>
    %cst_118 = arith.constant dense<0.000000e+00> : vector<64x16xf32>
    %112 = tpu.matmul %111, %109, %cst_118 {dimension_numbers = #tpu.dot_dimension_numbers<[1], [0], [0], [1], [0, 0, 1, 1], [], []>} : vector<64x32xf32>, vector<32x16xf32>, vector<64x16xf32> -> vector<64x16xf32>
    %113 = arith.addf %106, %112 : vector<64x16xf32>
    %c6_119 = arith.constant 6 : index
    %c0_120 = arith.constant 0 : index
    %c0_121 = arith.constant 0 : index
    %114 = vector.load %arg7[%c6_119, %c0_120, %c0_121] : memref<9x64x16xf32, #tpu.memory_space<vmem>>, vector<1x64x16xf32>
    %115 = vector.shape_cast %114 : vector<1x64x16xf32> to vector<64x16xf32>
    %cst_122 = arith.constant dense<0.000000e+00> : vector<32x16xf32>
    %116 = tpu.matmul %70, %115, %cst_122 {dimension_numbers = #tpu.dot_dimension_numbers<[1], [0], [0], [1], [0, 0, 1, 1], [], []>} : vector<32x64xf32>, vector<64x16xf32>, vector<32x16xf32> -> vector<32x16xf32>
    %c6_123 = arith.constant 6 : index
    %c0_124 = arith.constant 0 : index
    %c0_125 = arith.constant 0 : index
    %117 = vector.load %arg5[%c6_123, %c0_124, %c0_125] : memref<9x64x32xf32, #tpu.memory_space<vmem>>, vector<1x64x32xf32>
    %118 = vector.shape_cast %117 : vector<1x64x32xf32> to vector<64x32xf32>
    %cst_126 = arith.constant dense<0.000000e+00> : vector<64x16xf32>
    %119 = tpu.matmul %118, %116, %cst_126 {dimension_numbers = #tpu.dot_dimension_numbers<[1], [0], [0], [1], [0, 0, 1, 1], [], []>} : vector<64x32xf32>, vector<32x16xf32>, vector<64x16xf32> -> vector<64x16xf32>
    %120 = arith.addf %113, %119 : vector<64x16xf32>
    %c7_127 = arith.constant 7 : index
    %c0_128 = arith.constant 0 : index
    %c0_129 = arith.constant 0 : index
    %121 = vector.load %arg7[%c7_127, %c0_128, %c0_129] : memref<9x64x16xf32, #tpu.memory_space<vmem>>, vector<1x64x16xf32>
    %122 = vector.shape_cast %121 : vector<1x64x16xf32> to vector<64x16xf32>
    %cst_130 = arith.constant dense<0.000000e+00> : vector<32x16xf32>
    %123 = tpu.matmul %70, %122, %cst_130 {dimension_numbers = #tpu.dot_dimension_numbers<[1], [0], [0], [1], [0, 0, 1, 1], [], []>} : vector<32x64xf32>, vector<64x16xf32>, vector<32x16xf32> -> vector<32x16xf32>
    %c7_131 = arith.constant 7 : index
    %c0_132 = arith.constant 0 : index
    %c0_133 = arith.constant 0 : index
    %124 = vector.load %arg5[%c7_131, %c0_132, %c0_133] : memref<9x64x32xf32, #tpu.memory_space<vmem>>, vector<1x64x32xf32>
    %125 = vector.shape_cast %124 : vector<1x64x32xf32> to vector<64x32xf32>
    %cst_134 = arith.constant dense<0.000000e+00> : vector<64x16xf32>
    %126 = tpu.matmul %125, %123, %cst_134 {dimension_numbers = #tpu.dot_dimension_numbers<[1], [0], [0], [1], [0, 0, 1, 1], [], []>} : vector<64x32xf32>, vector<32x16xf32>, vector<64x16xf32> -> vector<64x16xf32>
    %127 = arith.addf %120, %126 : vector<64x16xf32>
    %c8_135 = arith.constant 8 : index
    %c0_136 = arith.constant 0 : index
    %c0_137 = arith.constant 0 : index
    %128 = vector.load %arg7[%c8_135, %c0_136, %c0_137] : memref<9x64x16xf32, #tpu.memory_space<vmem>>, vector<1x64x16xf32>
    %129 = vector.shape_cast %128 : vector<1x64x16xf32> to vector<64x16xf32>
    %cst_138 = arith.constant dense<0.000000e+00> : vector<32x16xf32>
    %130 = tpu.matmul %70, %129, %cst_138 {dimension_numbers = #tpu.dot_dimension_numbers<[1], [0], [0], [1], [0, 0, 1, 1], [], []>} : vector<32x64xf32>, vector<64x16xf32>, vector<32x16xf32> -> vector<32x16xf32>
    %c8_139 = arith.constant 8 : index
    %c0_140 = arith.constant 0 : index
    %c0_141 = arith.constant 0 : index
    %131 = vector.load %arg5[%c8_139, %c0_140, %c0_141] : memref<9x64x32xf32, #tpu.memory_space<vmem>>, vector<1x64x32xf32>
    %132 = vector.shape_cast %131 : vector<1x64x32xf32> to vector<64x32xf32>
    %cst_142 = arith.constant dense<0.000000e+00> : vector<64x16xf32>
    %133 = tpu.matmul %132, %130, %cst_142 {dimension_numbers = #tpu.dot_dimension_numbers<[1], [0], [0], [1], [0, 0, 1, 1], [], []>} : vector<64x32xf32>, vector<32x16xf32>, vector<64x16xf32> -> vector<64x16xf32>
    %134 = arith.addf %127, %133 : vector<64x16xf32>
    %c0_143 = arith.constant 0 : index
    %c0_144 = arith.constant 0 : index
    %c0_145 = arith.constant 0 : index
    %135 = vector.load %arg8[%c0_143, %c0_144, %c0_145] : memref<1x64x16xf32, #tpu.memory_space<vmem>>, vector<1x64x16xf32>
    %136 = vector.shape_cast %135 : vector<1x64x16xf32> to vector<64x16xf32>
    %137 = vector.shape_cast %134 : vector<64x16xf32> to vector<1x64x16xf32>
    tpu.vector_store %arg8[%c0_143, %c0_144, %c0_145], %137 {strides = array<i32>} : memref<1x64x16xf32, #tpu.memory_space<vmem>>, vector<1x64x16xf32>,
    return
  }
  func.func @transform_0(%arg0: i32) -> (i32, i32, i32) {
    %c0_i32 = arith.constant 0 : i32
    %c0_i32_0 = arith.constant 0 : i32
    %c0_i32_1 = arith.constant 0 : i32
    return %arg0, %c0_i32, %c0_i32_0 : i32, i32, i32
  }
  func.func @transform_1(%arg0: i32) -> (i32, i32, i32) {
    %c0_i32 = arith.constant 0 : i32
    %c0_i32_0 = arith.constant 0 : i32
    %c0_i32_1 = arith.constant 0 : i32
    %c0_i32_2 = arith.constant 0 : i32
    return %c0_i32, %c0_i32_0, %c0_i32_1 : i32, i32, i32
  }
  func.func @transform_2(%arg0: i32) -> (i32, i32) {
    %c0_i32 = arith.constant 0 : i32
    %c0_i32_0 = arith.constant 0 : i32
    %c0_i32_1 = arith.constant 0 : i32
    return %c0_i32, %c0_i32_0 : i32, i32
  }
  func.func @transform_3(%arg0: i32) -> (i32, i32, i32) {
    %c0_i32 = arith.constant 0 : i32
    %c0_i32_0 = arith.constant 0 : i32
    %c0_i32_1 = arith.constant 0 : i32
    %c0_i32_2 = arith.constant 0 : i32
    return %c0_i32, %c0_i32_0, %c0_i32_1 : i32, i32, i32
  }
  func.func @transform_4(%arg0: i32) -> (i32, i32, i32) {
    %c0_i32 = arith.constant 0 : i32
    %c0_i32_0 = arith.constant 0 : i32
    %c0_i32_1 = arith.constant 0 : i32
    %c0_i32_2 = arith.constant 0 : i32
    return %c0_i32, %c0_i32_0, %c0_i32_1 : i32, i32, i32
  }
  func.func @transform_5(%arg0: i32) -> (i32, i32) {
    %c0_i32 = arith.constant 0 : i32
    %c0_i32_0 = arith.constant 0 : i32
    %c0_i32_1 = arith.constant 0 : i32
    return %c0_i32, %c0_i32_0 : i32, i32
  }
  func.func @transform_6(%arg0: i32) -> (i32, i32, i32) {
    %c0_i32 = arith.constant 0 : i32
    %c0_i32_0 = arith.constant 0 : i32
    %c0_i32_1 = arith.constant 0 : i32
    %c0_i32_2 = arith.constant 0 : i32
    return %c0_i32, %c0_i32_0, %c0_i32_1 : i32, i32, i32
  }
  func.func @transform_7(%arg0: i32) -> (i32, i32, i32) {
    %c0_i32 = arith.constant 0 : i32
    %c0_i32_0 = arith.constant 0 : i32
    %c0_i32_1 = arith.constant 0 : i32
    return %arg0, %c0_i32, %c0_i32_0 : i32, i32, i32
  }
}

module attributes {stable_mosaic.version = 11 : i64} {
  func.func @_latent_kernel(%arg0: i32, %arg1: memref<2x1024xf32, #tpu.memory_space<vmem>>, %arg2: memref<2x16xf32, #tpu.memory_space<vmem>>, %arg3: memref<1024x16xf32, #tpu.memory_space<vmem>>, %arg4: memref<1x16xf32, #tpu.memory_space<vmem>>, %arg5: memref<16x1024xf32, #tpu.memory_space<vmem>>, %arg6: memref<1x1024xf32, #tpu.memory_space<vmem>>, %arg7: memref<2x16xf32, #tpu.memory_space<vmem>>, %arg8: memref<2x1024xf32, #tpu.memory_space<vmem>>) attributes {dimension_semantics = [#tpu.dimension_semantics<arbitrary>], iteration_bounds = array<i64: 1>, scalar_prefetch = 0 : i64, scratch_operands = 0 : i64, tpu.core_type = #tpu.core_type<tc>, window_params = [{pipeline_mode = #tpu.pipeline_mode<synchronous>, transform_indices = @transform_0, window_bounds = array<i64: 2, 1024>}, {pipeline_mode = #tpu.pipeline_mode<synchronous>, transform_indices = @transform_1, window_bounds = array<i64: 2, 16>}, {pipeline_mode = #tpu.pipeline_mode<synchronous>, transform_indices = @transform_2, window_bounds = array<i64: 1024, 16>}, {pipeline_mode = #tpu.pipeline_mode<synchronous>, transform_indices = @transform_3, window_bounds = array<i64: 1, 16>}, {pipeline_mode = #tpu.pipeline_mode<synchronous>, transform_indices = @transform_4, window_bounds = array<i64: 16, 1024>}, {pipeline_mode = #tpu.pipeline_mode<synchronous>, transform_indices = @transform_5, window_bounds = array<i64: 1, 1024>}, {pipeline_mode = #tpu.pipeline_mode<synchronous>, transform_indices = @transform_6, window_bounds = array<i64: 2, 16>}, {pipeline_mode = #tpu.pipeline_mode<synchronous>, transform_indices = @transform_7, window_bounds = array<i64: 2, 1024>}]} {
    %c0 = arith.constant 0 : index
    %c0_0 = arith.constant 0 : index
    %0 = vector.load %arg1[%c0, %c0_0] : memref<2x1024xf32, #tpu.memory_space<vmem>>, vector<2x1024xf32>
    %c0_1 = arith.constant 0 : index
    %c0_2 = arith.constant 0 : index
    %1 = vector.load %arg3[%c0_1, %c0_2] : memref<1024x16xf32, #tpu.memory_space<vmem>>, vector<1024x16xf32>
    %cst = arith.constant dense<0.000000e+00> : vector<2x16xf32>
    %2 = tpu.matmul %0, %1, %cst {dimension_numbers = #tpu.dot_dimension_numbers<[1], [0], [0], [1], [0, 0, 1, 1], [], []>} : vector<2x1024xf32>, vector<1024x16xf32>, vector<2x16xf32> -> vector<2x16xf32>
    %c0_3 = arith.constant 0 : index
    %c0_4 = arith.constant 0 : index
    %3 = vector.load %arg4[%c0_3, %c0_4] : memref<1x16xf32, #tpu.memory_space<vmem>>, vector<1x16xf32>
    %4 = vector.broadcast %3 : vector<1x16xf32> to vector<2x16xf32>
    %5 = arith.addf %2, %4 : vector<2x16xf32>
    %6 = tpu.iota {dimensions = array<i32: 1>} : vector<2x16xi32>
    %c8_i32 = arith.constant 8 : i32
    %7 = vector.broadcast %c8_i32 : i32 to vector<2x16xi32>
    %8 = arith.cmpi sge, %6, %7 : vector<2x16xi32>
    %c0_5 = arith.constant 0 : index
    %c0_6 = arith.constant 0 : index
    %9 = vector.load %arg2[%c0_5, %c0_6] : memref<2x16xf32, #tpu.memory_space<vmem>>, vector<2x16xf32>
    %10 = arith.select %8, %9, %5 : vector<2x16xi1>, vector<2x16xf32>
    %c0_7 = arith.constant 0 : index
    %c0_8 = arith.constant 0 : index
    %11 = vector.load %arg7[%c0_7, %c0_8] : memref<2x16xf32, #tpu.memory_space<vmem>>, vector<2x16xf32>
    tpu.vector_store %arg7[%c0_7, %c0_8], %10 {strides = array<i32>} : memref<2x16xf32, #tpu.memory_space<vmem>>, vector<2x16xf32>,
    %c0_9 = arith.constant 0 : index
    %c0_10 = arith.constant 0 : index
    %12 = vector.load %arg5[%c0_9, %c0_10] : memref<16x1024xf32, #tpu.memory_space<vmem>>, vector<16x1024xf32>
    %cst_11 = arith.constant dense<0.000000e+00> : vector<2x1024xf32>
    %13 = tpu.matmul %10, %12, %cst_11 {dimension_numbers = #tpu.dot_dimension_numbers<[1], [0], [0], [1], [0, 0, 1, 1], [], []>} : vector<2x16xf32>, vector<16x1024xf32>, vector<2x1024xf32> -> vector<2x1024xf32>
    %c0_12 = arith.constant 0 : index
    %c0_13 = arith.constant 0 : index
    %14 = vector.load %arg6[%c0_12, %c0_13] : memref<1x1024xf32, #tpu.memory_space<vmem>>, vector<1x1024xf32>
    %15 = vector.broadcast %14 : vector<1x1024xf32> to vector<2x1024xf32>
    %16 = arith.addf %13, %15 : vector<2x1024xf32>
    %c0_14 = arith.constant 0 : index
    %c0_15 = arith.constant 0 : index
    %17 = vector.load %arg8[%c0_14, %c0_15] : memref<2x1024xf32, #tpu.memory_space<vmem>>, vector<2x1024xf32>
    tpu.vector_store %arg8[%c0_14, %c0_15], %16 {strides = array<i32>} : memref<2x1024xf32, #tpu.memory_space<vmem>>, vector<2x1024xf32>,
    return
  }
  func.func @transform_0(%arg0: i32) -> (i32, i32) {
    %c0_i32 = arith.constant 0 : i32
    %c0_i32_0 = arith.constant 0 : i32
    %c0_i32_1 = arith.constant 0 : i32
    return %c0_i32, %c0_i32_0 : i32, i32
  }
  func.func @transform_1(%arg0: i32) -> (i32, i32) {
    %c0_i32 = arith.constant 0 : i32
    %c0_i32_0 = arith.constant 0 : i32
    %c0_i32_1 = arith.constant 0 : i32
    return %c0_i32, %c0_i32_0 : i32, i32
  }
  func.func @transform_2(%arg0: i32) -> (i32, i32) {
    %c0_i32 = arith.constant 0 : i32
    %c0_i32_0 = arith.constant 0 : i32
    %c0_i32_1 = arith.constant 0 : i32
    return %c0_i32, %c0_i32_0 : i32, i32
  }
  func.func @transform_3(%arg0: i32) -> (i32, i32) {
    %c0_i32 = arith.constant 0 : i32
    %c0_i32_0 = arith.constant 0 : i32
    %c0_i32_1 = arith.constant 0 : i32
    return %c0_i32, %c0_i32_0 : i32, i32
  }
  func.func @transform_4(%arg0: i32) -> (i32, i32) {
    %c0_i32 = arith.constant 0 : i32
    %c0_i32_0 = arith.constant 0 : i32
    %c0_i32_1 = arith.constant 0 : i32
    return %c0_i32, %c0_i32_0 : i32, i32
  }
  func.func @transform_5(%arg0: i32) -> (i32, i32) {
    %c0_i32 = arith.constant 0 : i32
    %c0_i32_0 = arith.constant 0 : i32
    %c0_i32_1 = arith.constant 0 : i32
    return %c0_i32, %c0_i32_0 : i32, i32
  }
  func.func @transform_6(%arg0: i32) -> (i32, i32) {
    %c0_i32 = arith.constant 0 : i32
    %c0_i32_0 = arith.constant 0 : i32
    %c0_i32_1 = arith.constant 0 : i32
    return %c0_i32, %c0_i32_0 : i32, i32
  }
  func.func @transform_7(%arg0: i32) -> (i32, i32) {
    %c0_i32 = arith.constant 0 : i32
    %c0_i32_0 = arith.constant 0 : i32
    %c0_i32_1 = arith.constant 0 : i32
    return %c0_i32, %c0_i32_0 : i32, i32
  }
}

module attributes {stable_mosaic.version = 11 : i64} {
  func.func @_decoder_kernel(%arg0: i32, %arg1: memref<1x64x16xf32, #tpu.memory_space<vmem>>, %arg2: memref<9x32x64xf32, #tpu.memory_space<vmem>>, %arg3: memref<32x64xf32, #tpu.memory_space<vmem>>, %arg4: memref<9x16x64xf32, #tpu.memory_space<vmem>>, %arg5: memref<9x4x32xf32, #tpu.memory_space<vmem>>, %arg6: memref<4x256xf32, #tpu.memory_space<vmem>>, %arg7: memref<9x64x256xf32, #tpu.memory_space<vmem>>, %arg8: memref<1x4x256xf32, #tpu.memory_space<vmem>>) attributes {dimension_semantics = [#tpu.dimension_semantics<parallel>], iteration_bounds = array<i64: 2>, scalar_prefetch = 0 : i64, scratch_operands = 0 : i64, tpu.core_type = #tpu.core_type<tc>, window_params = [{transform_indices = @transform_0, window_bounds = array<i64: 1, 64, 16>}, {pipeline_mode = #tpu.pipeline_mode<synchronous>, transform_indices = @transform_1, window_bounds = array<i64: 9, 32, 64>}, {pipeline_mode = #tpu.pipeline_mode<synchronous>, transform_indices = @transform_2, window_bounds = array<i64: 32, 64>}, {pipeline_mode = #tpu.pipeline_mode<synchronous>, transform_indices = @transform_3, window_bounds = array<i64: 9, 16, 64>}, {pipeline_mode = #tpu.pipeline_mode<synchronous>, transform_indices = @transform_4, window_bounds = array<i64: 9, 4, 32>}, {pipeline_mode = #tpu.pipeline_mode<synchronous>, transform_indices = @transform_5, window_bounds = array<i64: 4, 256>}, {pipeline_mode = #tpu.pipeline_mode<synchronous>, transform_indices = @transform_6, window_bounds = array<i64: 9, 64, 256>}, {transform_indices = @transform_7, window_bounds = array<i64: 1, 4, 256>}]} {
    %c0 = arith.constant 0 : index
    %c0_0 = arith.constant 0 : index
    %c0_1 = arith.constant 0 : index
    %0 = vector.load %arg1[%c0, %c0_0, %c0_1] : memref<1x64x16xf32, #tpu.memory_space<vmem>>, vector<1x64x16xf32>
    %1 = vector.shape_cast %0 : vector<1x64x16xf32> to vector<64x16xf32>
    %c0_2 = arith.constant 0 : index
    %c0_3 = arith.constant 0 : index
    %2 = vector.load %arg3[%c0_2, %c0_3] : memref<32x64xf32, #tpu.memory_space<vmem>>, vector<32x64xf32>
    %c0_4 = arith.constant 0 : index
    %c0_5 = arith.constant 0 : index
    %c0_6 = arith.constant 0 : index
    %3 = vector.load %arg2[%c0_4, %c0_5, %c0_6] : memref<9x32x64xf32, #tpu.memory_space<vmem>>, vector<1x32x64xf32>
    %4 = vector.shape_cast %3 : vector<1x32x64xf32> to vector<32x64xf32>
    %cst = arith.constant dense<0.000000e+00> : vector<32x16xf32>
    %5 = tpu.matmul %4, %1, %cst {dimension_numbers = #tpu.dot_dimension_numbers<[1], [0], [0], [1], [0, 0, 1, 1], [], []>} : vector<32x64xf32>, vector<64x16xf32>, vector<32x16xf32> -> vector<32x16xf32>
    %c0_7 = arith.constant 0 : index
    %c0_8 = arith.constant 0 : index
    %c0_9 = arith.constant 0 : index
    %6 = vector.load %arg4[%c0_7, %c0_8, %c0_9] : memref<9x16x64xf32, #tpu.memory_space<vmem>>, vector<1x16x64xf32>
    %7 = vector.shape_cast %6 : vector<1x16x64xf32> to vector<16x64xf32>
    %cst_10 = arith.constant dense<0.000000e+00> : vector<32x64xf32>
    %8 = tpu.matmul %5, %7, %cst_10 {dimension_numbers = #tpu.dot_dimension_numbers<[1], [0], [0], [1], [0, 0, 1, 1], [], []>} : vector<32x16xf32>, vector<16x64xf32>, vector<32x64xf32> -> vector<32x64xf32>
    %9 = arith.addf %2, %8 : vector<32x64xf32>
    %c1 = arith.constant 1 : index
    %c0_11 = arith.constant 0 : index
    %c0_12 = arith.constant 0 : index
    %10 = vector.load %arg2[%c1, %c0_11, %c0_12] : memref<9x32x64xf32, #tpu.memory_space<vmem>>, vector<1x32x64xf32>
    %11 = vector.shape_cast %10 : vector<1x32x64xf32> to vector<32x64xf32>
    %cst_13 = arith.constant dense<0.000000e+00> : vector<32x16xf32>
    %12 = tpu.matmul %11, %1, %cst_13 {dimension_numbers = #tpu.dot_dimension_numbers<[1], [0], [0], [1], [0, 0, 1, 1], [], []>} : vector<32x64xf32>, vector<64x16xf32>, vector<32x16xf32> -> vector<32x16xf32>
    %c1_14 = arith.constant 1 : index
    %c0_15 = arith.constant 0 : index
    %c0_16 = arith.constant 0 : index
    %13 = vector.load %arg4[%c1_14, %c0_15, %c0_16] : memref<9x16x64xf32, #tpu.memory_space<vmem>>, vector<1x16x64xf32>
    %14 = vector.shape_cast %13 : vector<1x16x64xf32> to vector<16x64xf32>
    %cst_17 = arith.constant dense<0.000000e+00> : vector<32x64xf32>
    %15 = tpu.matmul %12, %14, %cst_17 {dimension_numbers = #tpu.dot_dimension_numbers<[1], [0], [0], [1], [0, 0, 1, 1], [], []>} : vector<32x16xf32>, vector<16x64xf32>, vector<32x64xf32> -> vector<32x64xf32>
    %16 = arith.addf %9, %15 : vector<32x64xf32>
    %c2 = arith.constant 2 : index
    %c0_18 = arith.constant 0 : index
    %c0_19 = arith.constant 0 : index
    %17 = vector.load %arg2[%c2, %c0_18, %c0_19] : memref<9x32x64xf32, #tpu.memory_space<vmem>>, vector<1x32x64xf32>
    %18 = vector.shape_cast %17 : vector<1x32x64xf32> to vector<32x64xf32>
    %cst_20 = arith.constant dense<0.000000e+00> : vector<32x16xf32>
    %19 = tpu.matmul %18, %1, %cst_20 {dimension_numbers = #tpu.dot_dimension_numbers<[1], [0], [0], [1], [0, 0, 1, 1], [], []>} : vector<32x64xf32>, vector<64x16xf32>, vector<32x16xf32> -> vector<32x16xf32>
    %c2_21 = arith.constant 2 : index
    %c0_22 = arith.constant 0 : index
    %c0_23 = arith.constant 0 : index
    %20 = vector.load %arg4[%c2_21, %c0_22, %c0_23] : memref<9x16x64xf32, #tpu.memory_space<vmem>>, vector<1x16x64xf32>
    %21 = vector.shape_cast %20 : vector<1x16x64xf32> to vector<16x64xf32>
    %cst_24 = arith.constant dense<0.000000e+00> : vector<32x64xf32>
    %22 = tpu.matmul %19, %21, %cst_24 {dimension_numbers = #tpu.dot_dimension_numbers<[1], [0], [0], [1], [0, 0, 1, 1], [], []>} : vector<32x16xf32>, vector<16x64xf32>, vector<32x64xf32> -> vector<32x64xf32>
    %23 = arith.addf %16, %22 : vector<32x64xf32>
    %c3 = arith.constant 3 : index
    %c0_25 = arith.constant 0 : index
    %c0_26 = arith.constant 0 : index
    %24 = vector.load %arg2[%c3, %c0_25, %c0_26] : memref<9x32x64xf32, #tpu.memory_space<vmem>>, vector<1x32x64xf32>
    %25 = vector.shape_cast %24 : vector<1x32x64xf32> to vector<32x64xf32>
    %cst_27 = arith.constant dense<0.000000e+00> : vector<32x16xf32>
    %26 = tpu.matmul %25, %1, %cst_27 {dimension_numbers = #tpu.dot_dimension_numbers<[1], [0], [0], [1], [0, 0, 1, 1], [], []>} : vector<32x64xf32>, vector<64x16xf32>, vector<32x16xf32> -> vector<32x16xf32>
    %c3_28 = arith.constant 3 : index
    %c0_29 = arith.constant 0 : index
    %c0_30 = arith.constant 0 : index
    %27 = vector.load %arg4[%c3_28, %c0_29, %c0_30] : memref<9x16x64xf32, #tpu.memory_space<vmem>>, vector<1x16x64xf32>
    %28 = vector.shape_cast %27 : vector<1x16x64xf32> to vector<16x64xf32>
    %cst_31 = arith.constant dense<0.000000e+00> : vector<32x64xf32>
    %29 = tpu.matmul %26, %28, %cst_31 {dimension_numbers = #tpu.dot_dimension_numbers<[1], [0], [0], [1], [0, 0, 1, 1], [], []>} : vector<32x16xf32>, vector<16x64xf32>, vector<32x64xf32> -> vector<32x64xf32>
    %30 = arith.addf %23, %29 : vector<32x64xf32>
    %c4 = arith.constant 4 : index
    %c0_32 = arith.constant 0 : index
    %c0_33 = arith.constant 0 : index
    %31 = vector.load %arg2[%c4, %c0_32, %c0_33] : memref<9x32x64xf32, #tpu.memory_space<vmem>>, vector<1x32x64xf32>
    %32 = vector.shape_cast %31 : vector<1x32x64xf32> to vector<32x64xf32>
    %cst_34 = arith.constant dense<0.000000e+00> : vector<32x16xf32>
    %33 = tpu.matmul %32, %1, %cst_34 {dimension_numbers = #tpu.dot_dimension_numbers<[1], [0], [0], [1], [0, 0, 1, 1], [], []>} : vector<32x64xf32>, vector<64x16xf32>, vector<32x16xf32> -> vector<32x16xf32>
    %c4_35 = arith.constant 4 : index
    %c0_36 = arith.constant 0 : index
    %c0_37 = arith.constant 0 : index
    %34 = vector.load %arg4[%c4_35, %c0_36, %c0_37] : memref<9x16x64xf32, #tpu.memory_space<vmem>>, vector<1x16x64xf32>
    %35 = vector.shape_cast %34 : vector<1x16x64xf32> to vector<16x64xf32>
    %cst_38 = arith.constant dense<0.000000e+00> : vector<32x64xf32>
    %36 = tpu.matmul %33, %35, %cst_38 {dimension_numbers = #tpu.dot_dimension_numbers<[1], [0], [0], [1], [0, 0, 1, 1], [], []>} : vector<32x16xf32>, vector<16x64xf32>, vector<32x64xf32> -> vector<32x64xf32>
    %37 = arith.addf %30, %36 : vector<32x64xf32>
    %c5 = arith.constant 5 : index
    %c0_39 = arith.constant 0 : index
    %c0_40 = arith.constant 0 : index
    %38 = vector.load %arg2[%c5, %c0_39, %c0_40] : memref<9x32x64xf32, #tpu.memory_space<vmem>>, vector<1x32x64xf32>
    %39 = vector.shape_cast %38 : vector<1x32x64xf32> to vector<32x64xf32>
    %cst_41 = arith.constant dense<0.000000e+00> : vector<32x16xf32>
    %40 = tpu.matmul %39, %1, %cst_41 {dimension_numbers = #tpu.dot_dimension_numbers<[1], [0], [0], [1], [0, 0, 1, 1], [], []>} : vector<32x64xf32>, vector<64x16xf32>, vector<32x16xf32> -> vector<32x16xf32>
    %c5_42 = arith.constant 5 : index
    %c0_43 = arith.constant 0 : index
    %c0_44 = arith.constant 0 : index
    %41 = vector.load %arg4[%c5_42, %c0_43, %c0_44] : memref<9x16x64xf32, #tpu.memory_space<vmem>>, vector<1x16x64xf32>
    %42 = vector.shape_cast %41 : vector<1x16x64xf32> to vector<16x64xf32>
    %cst_45 = arith.constant dense<0.000000e+00> : vector<32x64xf32>
    %43 = tpu.matmul %40, %42, %cst_45 {dimension_numbers = #tpu.dot_dimension_numbers<[1], [0], [0], [1], [0, 0, 1, 1], [], []>} : vector<32x16xf32>, vector<16x64xf32>, vector<32x64xf32> -> vector<32x64xf32>
    %44 = arith.addf %37, %43 : vector<32x64xf32>
    %c6 = arith.constant 6 : index
    %c0_46 = arith.constant 0 : index
    %c0_47 = arith.constant 0 : index
    %45 = vector.load %arg2[%c6, %c0_46, %c0_47] : memref<9x32x64xf32, #tpu.memory_space<vmem>>, vector<1x32x64xf32>
    %46 = vector.shape_cast %45 : vector<1x32x64xf32> to vector<32x64xf32>
    %cst_48 = arith.constant dense<0.000000e+00> : vector<32x16xf32>
    %47 = tpu.matmul %46, %1, %cst_48 {dimension_numbers = #tpu.dot_dimension_numbers<[1], [0], [0], [1], [0, 0, 1, 1], [], []>} : vector<32x64xf32>, vector<64x16xf32>, vector<32x16xf32> -> vector<32x16xf32>
    %c6_49 = arith.constant 6 : index
    %c0_50 = arith.constant 0 : index
    %c0_51 = arith.constant 0 : index
    %48 = vector.load %arg4[%c6_49, %c0_50, %c0_51] : memref<9x16x64xf32, #tpu.memory_space<vmem>>, vector<1x16x64xf32>
    %49 = vector.shape_cast %48 : vector<1x16x64xf32> to vector<16x64xf32>
    %cst_52 = arith.constant dense<0.000000e+00> : vector<32x64xf32>
    %50 = tpu.matmul %47, %49, %cst_52 {dimension_numbers = #tpu.dot_dimension_numbers<[1], [0], [0], [1], [0, 0, 1, 1], [], []>} : vector<32x16xf32>, vector<16x64xf32>, vector<32x64xf32> -> vector<32x64xf32>
    %51 = arith.addf %44, %50 : vector<32x64xf32>
    %c7 = arith.constant 7 : index
    %c0_53 = arith.constant 0 : index
    %c0_54 = arith.constant 0 : index
    %52 = vector.load %arg2[%c7, %c0_53, %c0_54] : memref<9x32x64xf32, #tpu.memory_space<vmem>>, vector<1x32x64xf32>
    %53 = vector.shape_cast %52 : vector<1x32x64xf32> to vector<32x64xf32>
    %cst_55 = arith.constant dense<0.000000e+00> : vector<32x16xf32>
    %54 = tpu.matmul %53, %1, %cst_55 {dimension_numbers = #tpu.dot_dimension_numbers<[1], [0], [0], [1], [0, 0, 1, 1], [], []>} : vector<32x64xf32>, vector<64x16xf32>, vector<32x16xf32> -> vector<32x16xf32>
    %c7_56 = arith.constant 7 : index
    %c0_57 = arith.constant 0 : index
    %c0_58 = arith.constant 0 : index
    %55 = vector.load %arg4[%c7_56, %c0_57, %c0_58] : memref<9x16x64xf32, #tpu.memory_space<vmem>>, vector<1x16x64xf32>
    %56 = vector.shape_cast %55 : vector<1x16x64xf32> to vector<16x64xf32>
    %cst_59 = arith.constant dense<0.000000e+00> : vector<32x64xf32>
    %57 = tpu.matmul %54, %56, %cst_59 {dimension_numbers = #tpu.dot_dimension_numbers<[1], [0], [0], [1], [0, 0, 1, 1], [], []>} : vector<32x16xf32>, vector<16x64xf32>, vector<32x64xf32> -> vector<32x64xf32>
    %58 = arith.addf %51, %57 : vector<32x64xf32>
    %c8 = arith.constant 8 : index
    %c0_60 = arith.constant 0 : index
    %c0_61 = arith.constant 0 : index
    %59 = vector.load %arg2[%c8, %c0_60, %c0_61] : memref<9x32x64xf32, #tpu.memory_space<vmem>>, vector<1x32x64xf32>
    %60 = vector.shape_cast %59 : vector<1x32x64xf32> to vector<32x64xf32>
    %cst_62 = arith.constant dense<0.000000e+00> : vector<32x16xf32>
    %61 = tpu.matmul %60, %1, %cst_62 {dimension_numbers = #tpu.dot_dimension_numbers<[1], [0], [0], [1], [0, 0, 1, 1], [], []>} : vector<32x64xf32>, vector<64x16xf32>, vector<32x16xf32> -> vector<32x16xf32>
    %c8_63 = arith.constant 8 : index
    %c0_64 = arith.constant 0 : index
    %c0_65 = arith.constant 0 : index
    %62 = vector.load %arg4[%c8_63, %c0_64, %c0_65] : memref<9x16x64xf32, #tpu.memory_space<vmem>>, vector<1x16x64xf32>
    %63 = vector.shape_cast %62 : vector<1x16x64xf32> to vector<16x64xf32>
    %cst_66 = arith.constant dense<0.000000e+00> : vector<32x64xf32>
    %64 = tpu.matmul %61, %63, %cst_66 {dimension_numbers = #tpu.dot_dimension_numbers<[1], [0], [0], [1], [0, 0, 1, 1], [], []>} : vector<32x16xf32>, vector<16x64xf32>, vector<32x64xf32> -> vector<32x64xf32>
    %65 = arith.addf %58, %64 : vector<32x64xf32>
    %cst_67 = arith.constant 0.000000e+00 : f32
    %66 = vector.broadcast %cst_67 : f32 to vector<32x64xf32>
    %67 = arith.cmpf ogt, %65, %66 : vector<32x64xf32>
    %cst_68 = arith.constant 0.00999999977 : f32
    %68 = vector.broadcast %cst_68 : f32 to vector<32x64xf32>
    %69 = arith.mulf %68, %65 : vector<32x64xf32>
    %70 = arith.select %67, %65, %69 : vector<32x64xi1>, vector<32x64xf32>
    %c0_69 = arith.constant 0 : index
    %c0_70 = arith.constant 0 : index
    %71 = vector.load %arg6[%c0_69, %c0_70] : memref<4x256xf32, #tpu.memory_space<vmem>>, vector<4x256xf32>
    %c0_71 = arith.constant 0 : index
    %c0_72 = arith.constant 0 : index
    %c0_73 = arith.constant 0 : index
    %72 = vector.load %arg5[%c0_71, %c0_72, %c0_73] : memref<9x4x32xf32, #tpu.memory_space<vmem>>, vector<1x4x32xf32>
    %73 = vector.shape_cast %72 : vector<1x4x32xf32> to vector<4x32xf32>
    %cst_74 = arith.constant dense<0.000000e+00> : vector<4x64xf32>
    %74 = tpu.matmul %73, %70, %cst_74 {dimension_numbers = #tpu.dot_dimension_numbers<[1], [0], [0], [1], [0, 0, 1, 1], [], []>} : vector<4x32xf32>, vector<32x64xf32>, vector<4x64xf32> -> vector<4x64xf32>
    %c0_75 = arith.constant 0 : index
    %c0_76 = arith.constant 0 : index
    %c0_77 = arith.constant 0 : index
    %75 = vector.load %arg7[%c0_75, %c0_76, %c0_77] : memref<9x64x256xf32, #tpu.memory_space<vmem>>, vector<1x64x256xf32>
    %76 = vector.shape_cast %75 : vector<1x64x256xf32> to vector<64x256xf32>
    %cst_78 = arith.constant dense<0.000000e+00> : vector<4x256xf32>
    %77 = tpu.matmul %74, %76, %cst_78 {dimension_numbers = #tpu.dot_dimension_numbers<[1], [0], [0], [1], [0, 0, 1, 1], [], []>} : vector<4x64xf32>, vector<64x256xf32>, vector<4x256xf32> -> vector<4x256xf32>
    %78 = arith.addf %71, %77 : vector<4x256xf32>
    %c1_79 = arith.constant 1 : index
    %c0_80 = arith.constant 0 : index
    %c0_81 = arith.constant 0 : index
    %79 = vector.load %arg5[%c1_79, %c0_80, %c0_81] : memref<9x4x32xf32, #tpu.memory_space<vmem>>, vector<1x4x32xf32>
    %80 = vector.shape_cast %79 : vector<1x4x32xf32> to vector<4x32xf32>
    %cst_82 = arith.constant dense<0.000000e+00> : vector<4x64xf32>
    %81 = tpu.matmul %80, %70, %cst_82 {dimension_numbers = #tpu.dot_dimension_numbers<[1], [0], [0], [1], [0, 0, 1, 1], [], []>} : vector<4x32xf32>, vector<32x64xf32>, vector<4x64xf32> -> vector<4x64xf32>
    %c1_83 = arith.constant 1 : index
    %c0_84 = arith.constant 0 : index
    %c0_85 = arith.constant 0 : index
    %82 = vector.load %arg7[%c1_83, %c0_84, %c0_85] : memref<9x64x256xf32, #tpu.memory_space<vmem>>, vector<1x64x256xf32>
    %83 = vector.shape_cast %82 : vector<1x64x256xf32> to vector<64x256xf32>
    %cst_86 = arith.constant dense<0.000000e+00> : vector<4x256xf32>
    %84 = tpu.matmul %81, %83, %cst_86 {dimension_numbers = #tpu.dot_dimension_numbers<[1], [0], [0], [1], [0, 0, 1, 1], [], []>} : vector<4x64xf32>, vector<64x256xf32>, vector<4x256xf32> -> vector<4x256xf32>
    %85 = arith.addf %78, %84 : vector<4x256xf32>
    %c2_87 = arith.constant 2 : index
    %c0_88 = arith.constant 0 : index
    %c0_89 = arith.constant 0 : index
    %86 = vector.load %arg5[%c2_87, %c0_88, %c0_89] : memref<9x4x32xf32, #tpu.memory_space<vmem>>, vector<1x4x32xf32>
    %87 = vector.shape_cast %86 : vector<1x4x32xf32> to vector<4x32xf32>
    %cst_90 = arith.constant dense<0.000000e+00> : vector<4x64xf32>
    %88 = tpu.matmul %87, %70, %cst_90 {dimension_numbers = #tpu.dot_dimension_numbers<[1], [0], [0], [1], [0, 0, 1, 1], [], []>} : vector<4x32xf32>, vector<32x64xf32>, vector<4x64xf32> -> vector<4x64xf32>
    %c2_91 = arith.constant 2 : index
    %c0_92 = arith.constant 0 : index
    %c0_93 = arith.constant 0 : index
    %89 = vector.load %arg7[%c2_91, %c0_92, %c0_93] : memref<9x64x256xf32, #tpu.memory_space<vmem>>, vector<1x64x256xf32>
    %90 = vector.shape_cast %89 : vector<1x64x256xf32> to vector<64x256xf32>
    %cst_94 = arith.constant dense<0.000000e+00> : vector<4x256xf32>
    %91 = tpu.matmul %88, %90, %cst_94 {dimension_numbers = #tpu.dot_dimension_numbers<[1], [0], [0], [1], [0, 0, 1, 1], [], []>} : vector<4x64xf32>, vector<64x256xf32>, vector<4x256xf32> -> vector<4x256xf32>
    %92 = arith.addf %85, %91 : vector<4x256xf32>
    %c3_95 = arith.constant 3 : index
    %c0_96 = arith.constant 0 : index
    %c0_97 = arith.constant 0 : index
    %93 = vector.load %arg5[%c3_95, %c0_96, %c0_97] : memref<9x4x32xf32, #tpu.memory_space<vmem>>, vector<1x4x32xf32>
    %94 = vector.shape_cast %93 : vector<1x4x32xf32> to vector<4x32xf32>
    %cst_98 = arith.constant dense<0.000000e+00> : vector<4x64xf32>
    %95 = tpu.matmul %94, %70, %cst_98 {dimension_numbers = #tpu.dot_dimension_numbers<[1], [0], [0], [1], [0, 0, 1, 1], [], []>} : vector<4x32xf32>, vector<32x64xf32>, vector<4x64xf32> -> vector<4x64xf32>
    %c3_99 = arith.constant 3 : index
    %c0_100 = arith.constant 0 : index
    %c0_101 = arith.constant 0 : index
    %96 = vector.load %arg7[%c3_99, %c0_100, %c0_101] : memref<9x64x256xf32, #tpu.memory_space<vmem>>, vector<1x64x256xf32>
    %97 = vector.shape_cast %96 : vector<1x64x256xf32> to vector<64x256xf32>
    %cst_102 = arith.constant dense<0.000000e+00> : vector<4x256xf32>
    %98 = tpu.matmul %95, %97, %cst_102 {dimension_numbers = #tpu.dot_dimension_numbers<[1], [0], [0], [1], [0, 0, 1, 1], [], []>} : vector<4x64xf32>, vector<64x256xf32>, vector<4x256xf32> -> vector<4x256xf32>
    %99 = arith.addf %92, %98 : vector<4x256xf32>
    %c4_103 = arith.constant 4 : index
    %c0_104 = arith.constant 0 : index
    %c0_105 = arith.constant 0 : index
    %100 = vector.load %arg5[%c4_103, %c0_104, %c0_105] : memref<9x4x32xf32, #tpu.memory_space<vmem>>, vector<1x4x32xf32>
    %101 = vector.shape_cast %100 : vector<1x4x32xf32> to vector<4x32xf32>
    %cst_106 = arith.constant dense<0.000000e+00> : vector<4x64xf32>
    %102 = tpu.matmul %101, %70, %cst_106 {dimension_numbers = #tpu.dot_dimension_numbers<[1], [0], [0], [1], [0, 0, 1, 1], [], []>} : vector<4x32xf32>, vector<32x64xf32>, vector<4x64xf32> -> vector<4x64xf32>
    %c4_107 = arith.constant 4 : index
    %c0_108 = arith.constant 0 : index
    %c0_109 = arith.constant 0 : index
    %103 = vector.load %arg7[%c4_107, %c0_108, %c0_109] : memref<9x64x256xf32, #tpu.memory_space<vmem>>, vector<1x64x256xf32>
    %104 = vector.shape_cast %103 : vector<1x64x256xf32> to vector<64x256xf32>
    %cst_110 = arith.constant dense<0.000000e+00> : vector<4x256xf32>
    %105 = tpu.matmul %102, %104, %cst_110 {dimension_numbers = #tpu.dot_dimension_numbers<[1], [0], [0], [1], [0, 0, 1, 1], [], []>} : vector<4x64xf32>, vector<64x256xf32>, vector<4x256xf32> -> vector<4x256xf32>
    %106 = arith.addf %99, %105 : vector<4x256xf32>
    %c5_111 = arith.constant 5 : index
    %c0_112 = arith.constant 0 : index
    %c0_113 = arith.constant 0 : index
    %107 = vector.load %arg5[%c5_111, %c0_112, %c0_113] : memref<9x4x32xf32, #tpu.memory_space<vmem>>, vector<1x4x32xf32>
    %108 = vector.shape_cast %107 : vector<1x4x32xf32> to vector<4x32xf32>
    %cst_114 = arith.constant dense<0.000000e+00> : vector<4x64xf32>
    %109 = tpu.matmul %108, %70, %cst_114 {dimension_numbers = #tpu.dot_dimension_numbers<[1], [0], [0], [1], [0, 0, 1, 1], [], []>} : vector<4x32xf32>, vector<32x64xf32>, vector<4x64xf32> -> vector<4x64xf32>
    %c5_115 = arith.constant 5 : index
    %c0_116 = arith.constant 0 : index
    %c0_117 = arith.constant 0 : index
    %110 = vector.load %arg7[%c5_115, %c0_116, %c0_117] : memref<9x64x256xf32, #tpu.memory_space<vmem>>, vector<1x64x256xf32>
    %111 = vector.shape_cast %110 : vector<1x64x256xf32> to vector<64x256xf32>
    %cst_118 = arith.constant dense<0.000000e+00> : vector<4x256xf32>
    %112 = tpu.matmul %109, %111, %cst_118 {dimension_numbers = #tpu.dot_dimension_numbers<[1], [0], [0], [1], [0, 0, 1, 1], [], []>} : vector<4x64xf32>, vector<64x256xf32>, vector<4x256xf32> -> vector<4x256xf32>
    %113 = arith.addf %106, %112 : vector<4x256xf32>
    %c6_119 = arith.constant 6 : index
    %c0_120 = arith.constant 0 : index
    %c0_121 = arith.constant 0 : index
    %114 = vector.load %arg5[%c6_119, %c0_120, %c0_121] : memref<9x4x32xf32, #tpu.memory_space<vmem>>, vector<1x4x32xf32>
    %115 = vector.shape_cast %114 : vector<1x4x32xf32> to vector<4x32xf32>
    %cst_122 = arith.constant dense<0.000000e+00> : vector<4x64xf32>
    %116 = tpu.matmul %115, %70, %cst_122 {dimension_numbers = #tpu.dot_dimension_numbers<[1], [0], [0], [1], [0, 0, 1, 1], [], []>} : vector<4x32xf32>, vector<32x64xf32>, vector<4x64xf32> -> vector<4x64xf32>
    %c6_123 = arith.constant 6 : index
    %c0_124 = arith.constant 0 : index
    %c0_125 = arith.constant 0 : index
    %117 = vector.load %arg7[%c6_123, %c0_124, %c0_125] : memref<9x64x256xf32, #tpu.memory_space<vmem>>, vector<1x64x256xf32>
    %118 = vector.shape_cast %117 : vector<1x64x256xf32> to vector<64x256xf32>
    %cst_126 = arith.constant dense<0.000000e+00> : vector<4x256xf32>
    %119 = tpu.matmul %116, %118, %cst_126 {dimension_numbers = #tpu.dot_dimension_numbers<[1], [0], [0], [1], [0, 0, 1, 1], [], []>} : vector<4x64xf32>, vector<64x256xf32>, vector<4x256xf32> -> vector<4x256xf32>
    %120 = arith.addf %113, %119 : vector<4x256xf32>
    %c7_127 = arith.constant 7 : index
    %c0_128 = arith.constant 0 : index
    %c0_129 = arith.constant 0 : index
    %121 = vector.load %arg5[%c7_127, %c0_128, %c0_129] : memref<9x4x32xf32, #tpu.memory_space<vmem>>, vector<1x4x32xf32>
    %122 = vector.shape_cast %121 : vector<1x4x32xf32> to vector<4x32xf32>
    %cst_130 = arith.constant dense<0.000000e+00> : vector<4x64xf32>
    %123 = tpu.matmul %122, %70, %cst_130 {dimension_numbers = #tpu.dot_dimension_numbers<[1], [0], [0], [1], [0, 0, 1, 1], [], []>} : vector<4x32xf32>, vector<32x64xf32>, vector<4x64xf32> -> vector<4x64xf32>
    %c7_131 = arith.constant 7 : index
    %c0_132 = arith.constant 0 : index
    %c0_133 = arith.constant 0 : index
    %124 = vector.load %arg7[%c7_131, %c0_132, %c0_133] : memref<9x64x256xf32, #tpu.memory_space<vmem>>, vector<1x64x256xf32>
    %125 = vector.shape_cast %124 : vector<1x64x256xf32> to vector<64x256xf32>
    %cst_134 = arith.constant dense<0.000000e+00> : vector<4x256xf32>
    %126 = tpu.matmul %123, %125, %cst_134 {dimension_numbers = #tpu.dot_dimension_numbers<[1], [0], [0], [1], [0, 0, 1, 1], [], []>} : vector<4x64xf32>, vector<64x256xf32>, vector<4x256xf32> -> vector<4x256xf32>
    %127 = arith.addf %120, %126 : vector<4x256xf32>
    %c8_135 = arith.constant 8 : index
    %c0_136 = arith.constant 0 : index
    %c0_137 = arith.constant 0 : index
    %128 = vector.load %arg5[%c8_135, %c0_136, %c0_137] : memref<9x4x32xf32, #tpu.memory_space<vmem>>, vector<1x4x32xf32>
    %129 = vector.shape_cast %128 : vector<1x4x32xf32> to vector<4x32xf32>
    %cst_138 = arith.constant dense<0.000000e+00> : vector<4x64xf32>
    %130 = tpu.matmul %129, %70, %cst_138 {dimension_numbers = #tpu.dot_dimension_numbers<[1], [0], [0], [1], [0, 0, 1, 1], [], []>} : vector<4x32xf32>, vector<32x64xf32>, vector<4x64xf32> -> vector<4x64xf32>
    %c8_139 = arith.constant 8 : index
    %c0_140 = arith.constant 0 : index
    %c0_141 = arith.constant 0 : index
    %131 = vector.load %arg7[%c8_139, %c0_140, %c0_141] : memref<9x64x256xf32, #tpu.memory_space<vmem>>, vector<1x64x256xf32>
    %132 = vector.shape_cast %131 : vector<1x64x256xf32> to vector<64x256xf32>
    %cst_142 = arith.constant dense<0.000000e+00> : vector<4x256xf32>
    %133 = tpu.matmul %130, %132, %cst_142 {dimension_numbers = #tpu.dot_dimension_numbers<[1], [0], [0], [1], [0, 0, 1, 1], [], []>} : vector<4x64xf32>, vector<64x256xf32>, vector<4x256xf32> -> vector<4x256xf32>
    %134 = arith.addf %127, %133 : vector<4x256xf32>
    %c0_143 = arith.constant 0 : index
    %c0_144 = arith.constant 0 : index
    %c0_145 = arith.constant 0 : index
    %135 = vector.load %arg8[%c0_143, %c0_144, %c0_145] : memref<1x4x256xf32, #tpu.memory_space<vmem>>, vector<1x4x256xf32>
    %136 = vector.shape_cast %135 : vector<1x4x256xf32> to vector<4x256xf32>
    %137 = vector.shape_cast %134 : vector<4x256xf32> to vector<1x4x256xf32>
    tpu.vector_store %arg8[%c0_143, %c0_144, %c0_145], %137 {strides = array<i32>} : memref<1x4x256xf32, #tpu.memory_space<vmem>>, vector<1x4x256xf32>,
    return
  }
  func.func @transform_0(%arg0: i32) -> (i32, i32, i32) {
    %c0_i32 = arith.constant 0 : i32
    %c0_i32_0 = arith.constant 0 : i32
    %c0_i32_1 = arith.constant 0 : i32
    return %arg0, %c0_i32, %c0_i32_0 : i32, i32, i32
  }
  func.func @transform_1(%arg0: i32) -> (i32, i32, i32) {
    %c0_i32 = arith.constant 0 : i32
    %c0_i32_0 = arith.constant 0 : i32
    %c0_i32_1 = arith.constant 0 : i32
    %c0_i32_2 = arith.constant 0 : i32
    return %c0_i32, %c0_i32_0, %c0_i32_1 : i32, i32, i32
  }
  func.func @transform_2(%arg0: i32) -> (i32, i32) {
    %c0_i32 = arith.constant 0 : i32
    %c0_i32_0 = arith.constant 0 : i32
    %c0_i32_1 = arith.constant 0 : i32
    return %c0_i32, %c0_i32_0 : i32, i32
  }
  func.func @transform_3(%arg0: i32) -> (i32, i32, i32) {
    %c0_i32 = arith.constant 0 : i32
    %c0_i32_0 = arith.constant 0 : i32
    %c0_i32_1 = arith.constant 0 : i32
    %c0_i32_2 = arith.constant 0 : i32
    return %c0_i32, %c0_i32_0, %c0_i32_1 : i32, i32, i32
  }
  func.func @transform_4(%arg0: i32) -> (i32, i32, i32) {
    %c0_i32 = arith.constant 0 : i32
    %c0_i32_0 = arith.constant 0 : i32
    %c0_i32_1 = arith.constant 0 : i32
    %c0_i32_2 = arith.constant 0 : i32
    return %c0_i32, %c0_i32_0, %c0_i32_1 : i32, i32, i32
  }
  func.func @transform_5(%arg0: i32) -> (i32, i32) {
    %c0_i32 = arith.constant 0 : i32
    %c0_i32_0 = arith.constant 0 : i32
    %c0_i32_1 = arith.constant 0 : i32
    return %c0_i32, %c0_i32_0 : i32, i32
  }
  func.func @transform_6(%arg0: i32) -> (i32, i32, i32) {
    %c0_i32 = arith.constant 0 : i32
    %c0_i32_0 = arith.constant 0 : i32
    %c0_i32_1 = arith.constant 0 : i32
    %c0_i32_2 = arith.constant 0 : i32
    return %c0_i32, %c0_i32_0, %c0_i32_1 : i32, i32, i32
  }
  func.func @transform_7(%arg0: i32) -> (i32, i32, i32) {
    %c0_i32 = arith.constant 0 : i32
    %c0_i32_0 = arith.constant 0 : i32
    %c0_i32_1 = arith.constant 0 : i32
    return %arg0, %c0_i32, %c0_i32_0 : i32, i32, i32
  }
}

</mosaic_0001>

<llo_original>
// kernel: conv_deconv_forward.4
$region0: #{conv_deconv_forward.4}
  #allocation0 [shape = 'u32[]', space=smem, size = 0x4, offset = 0x4, fixed_abs, tag = 'smem constant byte address 0x4 - core index']
  #allocation1 [shape = 'u32[72,128]{1,0:T(1,128)}', space=vmem, size = 0x9000, scoped, tag = 'internal scratch']
  %s0 = inlined_call_operand.vmem [shape: f32[2,1024], index: 0, kind: input, shape index: {}]
  %s1 = inlined_call_operand.vmem [shape: f32[2,16], index: 1, kind: input, shape index: {}]
  %s2 = inlined_call_operand.vmem [shape: f32[1024,16], index: 2, kind: input, shape index: {}]
  %s3 = inlined_call_operand.vmem [shape: f32[1,16], index: 3, kind: input, shape index: {}]
  %s4 = inlined_call_operand.vmem [shape: f32[16,1024], index: 4, kind: input, shape index: {}]
  %s5 = inlined_call_operand.vmem [shape: f32[1,1024], index: 5, kind: input, shape index: {}]
  %s6 = inlined_call_operand.hbm [shape: f32[2,16], index: 6, kind: output, shape index: {0}]
  %s7 = inlined_call_operand.vmem [shape: f32[2,1024], index: 7, kind: output, shape index: {1}]
  %8 = xla_tuple %s6, %s7
  %s9 = sld [smem:[#allocation0]]
  $region42: #{conv_deconv_forward.4} parent=0
    _
  %s11 = ssub.s32 1, %s9
  %s12 = scalar_select 0, %s11, %s9
  $region1: #{conv_deconv_forward.4} parent=0
    #allocation2 [shape = 'u8[1024]{0}', space=vmem, size = 0x400, scoped, tag = 'output window, operand 0, single buffered']
    #allocation3 [shape = 's32[1]{0}', space=sflag, size = 0x4, scoped, tag = 'scoped memory for conv_deconv_forward.4']
    %13 = vsyncpa [#allocation3], 0
    // Predicated region
    $region2: #{conv_deconv_forward.4} parent=1 // pred_check
      _
    $region3: #{conv_deconv_forward.4} parent=1 // pred_check_branch
      %15 = sbr.rel (0) target = $region5
    $region4: #{conv_deconv_forward.4} parent=1 // pred_region
      _
    $region5: #{conv_deconv_forward.4} parent=1 // pred_fallthru
      _
    // Predicated region
    $region6: #{conv_deconv_forward.4} parent=1 // pred_check
      _
    $region7: #{conv_deconv_forward.4} parent=1 // pred_check_branch
      %17 = sbr.rel (0) target = $region9
    $region8: #{conv_deconv_forward.4} parent=1 // pred_region
      _
    $region9: #{conv_deconv_forward.4} parent=1 // pred_fallthru
      _
    // Predicated region
    $region10: #{conv_deconv_forward.4} parent=1 // pred_check
      _
    $region11: #{conv_deconv_forward.4} parent=1 // pred_check_branch
      %19 = sbr.rel (0) target = $region13
    $region12: #{conv_deconv_forward.4} parent=1 // pred_region
      _
    $region13: #{conv_deconv_forward.4} parent=1 // pred_fallthru
      _
    // Predicated region
    $region14: #{conv_deconv_forward.4} parent=1 // pred_check
      _
    $region15: #{conv_deconv_forward.4} parent=1 // pred_check_branch
      %21 = sbr.rel (0) target = $region17
    $region16: #{conv_deconv_forward.4} parent=1 // pred_region
      _
    $region17: #{conv_deconv_forward.4} parent=1 // pred_fallthru
      _
    // Predicated region
    $region18: #{conv_deconv_forward.4} parent=1 // pred_check
      _
    $region19: #{conv_deconv_forward.4} parent=1 // pred_check_branch
      %23 = sbr.rel (0) target = $region21
    $region20: #{conv_deconv_forward.4} parent=1 // pred_region
      _
    $region21: #{conv_deconv_forward.4} parent=1 // pred_fallthru
      _
    // Predicated region
    $region22: #{conv_deconv_forward.4} parent=1 // pred_check
      _
    $region23: #{conv_deconv_forward.4} parent=1 // pred_check_branch
      %25 = sbr.rel (0) target = $region25
    $region24: #{conv_deconv_forward.4} parent=1 // pred_region
      _
    $region25: #{conv_deconv_forward.4} parent=1 // pred_fallthru
      _
    %v26 = vld [vmem:[%s0] sm:$0xff]
    %v27 = vld [vmem:[%s0 + $0x8] sm:$0xff]
    %v28 = vld [vmem:[%s2] sm:$0xff]
    %v29 = vld [vmem:[%s2 + $0x8] sm:$0xff]
    %v30 = vld [vmem:[%s2 + $0x10] sm:$0xff]
    %v31 = vld [vmem:[%s2 + $0x18] sm:$0xff]
    %v32 = vld [vmem:[%s2 + $0x20] sm:$0xff]
    %v33 = vld [vmem:[%s2 + $0x28] sm:$0xff]
    %v34 = vld [vmem:[%s2 + $0x30] sm:$0xff]
    %v35 = vld [vmem:[%s2 + $0x38] sm:$0xff]
    %v36 = vld [vmem:[%s2 + $0x40] sm:$0xff]
    %v37 = vld [vmem:[%s2 + $0x48] sm:$0xff]
    %v38 = vld [vmem:[%s2 + $0x50] sm:$0xff]
    %v39 = vld [vmem:[%s2 + $0x58] sm:$0xff]
    %v40 = vld [vmem:[%s2 + $0x60] sm:$0xff]
    %v41 = vld [vmem:[%s2 + $0x68] sm:$0xff]
    %v42 = vld [vmem:[%s2 + $0x70] sm:$0xff]
    %v43 = vld [vmem:[%s2 + $0x78] sm:$0xff]
    %v44 = vld [vmem:[%s2 + $0x80] sm:$0xff]
    %v45 = vld [vmem:[%s2 + $0x88] sm:$0xff]
    %v46 = vld [vmem:[%s2 + $0x90] sm:$0xff]
    %v47 = vld [vmem:[%s2 + $0x98] sm:$0xff]
    %v48 = vld [vmem:[%s2 + $0xa0] sm:$0xff]
    %v49 = vld [vmem:[%s2 + $0xa8] sm:$0xff]
    %v50 = vld [vmem:[%s2 + $0xb0] sm:$0xff]
    %v51 = vld [vmem:[%s2 + $0xb8] sm:$0xff]
    %v52 = vld [vmem:[%s2 + $0xc0] sm:$0xff]
    %v53 = vld [vmem:[%s2 + $0xc8] sm:$0xff]
    %v54 = vld [vmem:[%s2 + $0xd0] sm:$0xff]
    %v55 = vld [vmem:[%s2 + $0xd8] sm:$0xff]
    %v56 = vld [vmem:[%s2 + $0xe0] sm:$0xff]
    %v57 = vld [vmem:[%s2 + $0xe8] sm:$0xff]
    %v58 = vld [vmem:[%s2 + $0xf0] sm:$0xff]
    %v59 = vld [vmem:[%s2 + $0xf8] sm:$0xff]
    %v60 = vld [vmem:[%s2 + $0x100] sm:$0xff]
    %v61 = vld [vmem:[%s2 + $0x108] sm:$0xff]
    %v62 = vld [vmem:[%s2 + $0x110] sm:$0xff]
    %v63 = vld [vmem:[%s2 + $0x118] sm:$0xff]
    %v64 = vld [vmem:[%s2 + $0x120] sm:$0xff]
    %v65 = vld [vmem:[%s2 + $0x128] sm:$0xff]
    %v66 = vld [vmem:[%s2 + $0x130] sm:$0xff]
    %v67 = vld [vmem:[%s2 + $0x138] sm:$0xff]
    %v68 = vld [vmem:[%s2 + $0x140] sm:$0xff]
    %v69 = vld [vmem:[%s2 + $0x148] sm:$0xff]
    %v70 = vld [vmem:[%s2 + $0x150] sm:$0xff]
    %v71 = vld [vmem:[%s2 + $0x158] sm:$0xff]
    %v72 = vld [vmem:[%s2 + $0x160] sm:$0xff]
    %v73 = vld [vmem:[%s2 + $0x168] sm:$0xff]
    %v74 = vld [vmem:[%s2 + $0x170] sm:$0xff]
    %v75 = vld [vmem:[%s2 + $0x178] sm:$0xff]
    %v76 = vld [vmem:[%s2 + $0x180] sm:$0xff]
    %v77 = vld [vmem:[%s2 + $0x188] sm:$0xff]
    %v78 = vld [vmem:[%s2 + $0x190] sm:$0xff]
    %v79 = vld [vmem:[%s2 + $0x198] sm:$0xff]
    %v80 = vld [vmem:[%s2 + $0x1a0] sm:$0xff]
    %v81 = vld [vmem:[%s2 + $0x1a8] sm:$0xff]
    %v82 = vld [vmem:[%s2 + $0x1b0] sm:$0xff]
    %v83 = vld [vmem:[%s2 + $0x1b8] sm:$0xff]
    %v84 = vld [vmem:[%s2 + $0x1c0] sm:$0xff]
    %v85 = vld [vmem:[%s2 + $0x1c8] sm:$0xff]
    %v86 = vld [vmem:[%s2 + $0x1d0] sm:$0xff]
    %v87 = vld [vmem:[%s2 + $0x1d8] sm:$0xff]
    %v88 = vld [vmem:[%s2 + $0x1e0] sm:$0xff]
    %v89 = vld [vmem:[%s2 + $0x1e8] sm:$0xff]
    %v90 = vld [vmem:[%s2 + $0x1f0] sm:$0xff]
    %v91 = vld [vmem:[%s2 + $0x1f8] sm:$0xff]
    %v92 = vld [vmem:[%s2 + $0x200] sm:$0xff]
    %v93 = vld [vmem:[%s2 + $0x208] sm:$0xff]
    %v94 = vld [vmem:[%s2 + $0x210] sm:$0xff]
    %v95 = vld [vmem:[%s2 + $0x218] sm:$0xff]
    %v96 = vld [vmem:[%s2 + $0x220] sm:$0xff]
    %v97 = vld [vmem:[%s2 + $0x228] sm:$0xff]
    %v98 = vld [vmem:[%s2 + $0x230] sm:$0xff]
    %v99 = vld [vmem:[%s2 + $0x238] sm:$0xff]
    %v100 = vld [vmem:[%s2 + $0x240] sm:$0xff]
    %v101 = vld [vmem:[%s2 + $0x248] sm:$0xff]
    %v102 = vld [vmem:[%s2 + $0x250] sm:$0xff]
    %v103 = vld [vmem:[%s2 + $0x258] sm:$0xff]
    %v104 = vld [vmem:[%s2 + $0x260] sm:$0xff]
    %v105 = vld [vmem:[%s2 + $0x268] sm:$0xff]
    %v106 = vld [vmem:[%s2 + $0x270] sm:$0xff]
    %v107 = vld [vmem:[%s2 + $0x278] sm:$0xff]
    %v108 = vld [vmem:[%s2 + $0x280] sm:$0xff]
    %v109 = vld [vmem:[%s2 + $0x288] sm:$0xff]
    %v110 = vld [vmem:[%s2 + $0x290] sm:$0xff]
    %v111 = vld [vmem:[%s2 + $0x298] sm:$0xff]
    %v112 = vld [vmem:[%s2 + $0x2a0] sm:$0xff]
    %v113 = vld [vmem:[%s2 + $0x2a8] sm:$0xff]
    %v114 = vld [vmem:[%s2 + $0x2b0] sm:$0xff]
    %v115 = vld [vmem:[%s2 + $0x2b8] sm:$0xff]
    %v116 = vld [vmem:[%s2 + $0x2c0] sm:$0xff]
    %v117 = vld [vmem:[%s2 + $0x2c8] sm:$0xff]
    %v118 = vld [vmem:[%s2 + $0x2d0] sm:$0xff]
    %v119 = vld [vmem:[%s2 + $0x2d8] sm:$0xff]
    %v120 = vld [vmem:[%s2 + $0x2e0] sm:$0xff]
    %v121 = vld [vmem:[%s2 + $0x2e8] sm:$0xff]
    %v122 = vld [vmem:[%s2 + $0x2f0] sm:$0xff]
    %v123 = vld [vmem:[%s2 + $0x2f8] sm:$0xff]
    %v124 = vld [vmem:[%s2 + $0x300] sm:$0xff]
    %v125 = vld [vmem:[%s2 + $0x308] sm:$0xff]
    %v126 = vld [vmem:[%s2 + $0x310] sm:$0xff]
    %v127 = vld [vmem:[%s2 + $0x318] sm:$0xff]
    %v128 = vld [vmem:[%s2 + $0x320] sm:$0xff]
    %v129 = vld [vmem:[%s2 + $0x328] sm:$0xff]
    %v130 = vld [vmem:[%s2 + $0x330] sm:$0xff]
    %v131 = vld [vmem:[%s2 + $0x338] sm:$0xff]
    %v132 = vld [vmem:[%s2 + $0x340] sm:$0xff]
    %v133 = vld [vmem:[%s2 + $0x348] sm:$0xff]
    %v134 = vld [vmem:[%s2 + $0x350] sm:$0xff]
    %v135 = vld [vmem:[%s2 + $0x358] sm:$0xff]
    %v136 = vld [vmem:[%s2 + $0x360] sm:$0xff]
    %v137 = vld [vmem:[%s2 + $0x368] sm:$0xff]
    %v138 = vld [vmem:[%s2 + $0x370] sm:$0xff]
    %v139 = vld [vmem:[%s2 + $0x378] sm:$0xff]
    %v140 = vld [vmem:[%s2 + $0x380] sm:$0xff]
    %v141 = vld [vmem:[%s2 + $0x388] sm:$0xff]
    %v142 = vld [vmem:[%s2 + $0x390] sm:$0xff]
    %v143 = vld [vmem:[%s2 + $0x398] sm:$0xff]
    %v144 = vld [vmem:[%s2 + $0x3a0] sm:$0xff]
    %v145 = vld [vmem:[%s2 + $0x3a8] sm:$0xff]
    %v146 = vld [vmem:[%s2 + $0x3b0] sm:$0xff]
    %v147 = vld [vmem:[%s2 + $0x3b8] sm:$0xff]
    %v148 = vld [vmem:[%s2 + $0x3c0] sm:$0xff]
    %v149 = vld [vmem:[%s2 + $0x3c8] sm:$0xff]
    %v150 = vld [vmem:[%s2 + $0x3d0] sm:$0xff]
    %v151 = vld [vmem:[%s2 + $0x3d8] sm:$0xff]
    %v152 = vld [vmem:[%s2 + $0x3e0] sm:$0xff]
    %v153 = vld [vmem:[%s2 + $0x3e8] sm:$0xff]
    %v154 = vld [vmem:[%s2 + $0x3f0] sm:$0xff]
    %v155 = vld [vmem:[%s2 + $0x3f8] sm:$0xff]
    %v156 = vld [vmem:[%s3] sm:$0x1]
    %v158 = vperm.slane %v156, 0
    %162 = vst [vmem:[#allocation1] ss:$4 sm:$0xff] %v26
    %s163 = scalar_lea.vmem [#allocation1], 32
    %164 = vst [vmem:[%s163] ss:$4 sm:$0xff] %v27
    %v165 = vld.sshfl [vmem:[#allocation1] sm:$0xff pattern:$0x73625140]
    %v166 = vld.sshfl [vmem:[#allocation1 + $0x8] sm:$0xff pattern:$0x73625140]
    %v167 = vld.sshfl [vmem:[#allocation1 + $0x10] sm:$0xff pattern:$0x73625140]
    %v168 = vld.sshfl [vmem:[#allocation1 + $0x18] sm:$0xff pattern:$0x73625140]
    %v169 = vld.sshfl [vmem:[#allocation1 + $0x20] sm:$0xff pattern:$0x73625140]
    %v170 = vld.sshfl [vmem:[#allocation1 + $0x28] sm:$0xff pattern:$0x73625140]
    %v171 = vld.sshfl [vmem:[#allocation1 + $0x30] sm:$0xff pattern:$0x73625140]
    %v172 = vld.sshfl [vmem:[#allocation1 + $0x38] sm:$0xff pattern:$0x73625140]
    %181 = vmatpush.msra.mxu0 %v43
    %182 = vmatpush.msra.mxu0 %v42
    %183 = vmatpush.msra.mxu0 %v41
    %184 = vmatpush.msra.mxu0 %v40
    %185 = vmatpush.msra.mxu0 %v39
    %186 = vmatpush.msra.mxu0 %v38
    %187 = vmatpush.msra.mxu0 %v37
    %188 = vmatpush.msra.mxu0 %v36
    %189 = vmatpush.msra.mxu0 %v35
    %190 = vmatpush.msra.mxu0 %v34
    %191 = vmatpush.msra.mxu0 %v33
    %192 = vmatpush.msra.mxu0 %v32
    %193 = vmatpush.msra.mxu0 %v31
    %194 = vmatpush.msra.mxu0 %v30
    %195 = vmatpush.msra.mxu0 %v29
    %196 = vmatpush.msra.mxu0 %v28
    %197 = vmatmul.f32.gmra.mxu0 %v165
    %v198 = vpop.f32.mrf.mxu0
    %v199 = vadd.f32 %v158, %v198
    %200 = vdwg.mxu0
    %201 = vmatpush.msra.mxu0 %v59
    %202 = vmatpush.msra.mxu0 %v58
    %203 = vmatpush.msra.mxu0 %v57
    %204 = vmatpush.msra.mxu0 %v56
    %205 = vmatpush.msra.mxu0 %v55
    %206 = vmatpush.msra.mxu0 %v54
    %207 = vmatpush.msra.mxu0 %v53
    %208 = vmatpush.msra.mxu0 %v52
    %209 = vmatpush.msra.mxu0 %v51
    %210 = vmatpush.msra.mxu0 %v50
    %211 = vmatpush.msra.mxu0 %v49
    %212 = vmatpush.msra.mxu0 %v48
    %213 = vmatpush.msra.mxu0 %v47
    %214 = vmatpush.msra.mxu0 %v46
    %215 = vmatpush.msra.mxu0 %v45
    %216 = vmatpush.msra.mxu0 %v44
    %217 = vmatmul.f32.gmra.mxu0 %v166
    %v218 = vpop.f32.mrf.mxu0
    %v219 = vadd.f32 %v199, %v218
    %220 = vdwg.mxu0
    %221 = vmatpush.msra.mxu0 %v75
    %222 = vmatpush.msra.mxu0 %v74
    %223 = vmatpush.msra.mxu0 %v73
    %224 = vmatpush.msra.mxu0 %v72
    %225 = vmatpush.msra.mxu0 %v71
    %226 = vmatpush.msra.mxu0 %v70
    %227 = vmatpush.msra.mxu0 %v69
    %228 = vmatpush.msra.mxu0 %v68
    %229 = vmatpush.msra.mxu0 %v67
    %230 = vmatpush.msra.mxu0 %v66
    %231 = vmatpush.msra.mxu0 %v65
    %232 = vmatpush.msra.mxu0 %v64
    %233 = vmatpush.msra.mxu0 %v63
    %234 = vmatpush.msra.mxu0 %v62
    %235 = vmatpush.msra.mxu0 %v61
    %236 = vmatpush.msra.mxu0 %v60
    %237 = vmatmul.f32.gmra.mxu0 %v167
    %v238 = vpop.f32.mrf.mxu0
    %v239 = vadd.f32 %v219, %v238
    %240 = vdwg.mxu0
    %241 = vmatpush.msra.mxu0 %v91
    %242 = vmatpush.msra.mxu0 %v90
    %243 = vmatpush.msra.mxu0 %v89
    %244 = vmatpush.msra.mxu0 %v88
    %245 = vmatpush.msra.mxu0 %v87
    %246 = vmatpush.msra.mxu0 %v86
    %247 = vmatpush.msra.mxu0 %v85
    %248 = vmatpush.msra.mxu0 %v84
    %249 = vmatpush.msra.mxu0 %v83
    %250 = vmatpush.msra.mxu0 %v82
    %251 = vmatpush.msra.mxu0 %v81
    %252 = vmatpush.msra.mxu0 %v80
    %253 = vmatpush.msra.mxu0 %v79
    %254 = vmatpush.msra.mxu0 %v78
    %255 = vmatpush.msra.mxu0 %v77
    %256 = vmatpush.msra.mxu0 %v76
    %257 = vmatmul.f32.gmra.mxu0 %v168
    %v258 = vpop.f32.mrf.mxu0
    %v259 = vadd.f32 %v239, %v258
    %260 = vdwg.mxu0
    %261 = vmatpush.msra.mxu0 %v107
    %262 = vmatpush.msra.mxu0 %v106
    %263 = vmatpush.msra.mxu0 %v105
    %264 = vmatpush.msra.mxu0 %v104
    %265 = vmatpush.msra.mxu0 %v103
    %266 = vmatpush.msra.mxu0 %v102
    %267 = vmatpush.msra.mxu0 %v101
    %268 = vmatpush.msra.mxu0 %v100
    %269 = vmatpush.msra.mxu0 %v99
    %270 = vmatpush.msra.mxu0 %v98
    %271 = vmatpush.msra.mxu0 %v97
    %272 = vmatpush.msra.mxu0 %v96
    %273 = vmatpush.msra.mxu0 %v95
    %274 = vmatpush.msra.mxu0 %v94
    %275 = vmatpush.msra.mxu0 %v93
    %276 = vmatpush.msra.mxu0 %v92
    %277 = vmatmul.f32.gmra.mxu0 %v169
    %v278 = vpop.f32.mrf.mxu0
    %v279 = vadd.f32 %v259, %v278
    %280 = vdwg.mxu0
    %281 = vmatpush.msra.mxu0 %v123
    %282 = vmatpush.msra.mxu0 %v122
    %283 = vmatpush.msra.mxu0 %v121
    %284 = vmatpush.msra.mxu0 %v120
    %285 = vmatpush.msra.mxu0 %v119
    %286 = vmatpush.msra.mxu0 %v118
    %287 = vmatpush.msra.mxu0 %v117
    %288 = vmatpush.msra.mxu0 %v116
    %289 = vmatpush.msra.mxu0 %v115
    %290 = vmatpush.msra.mxu0 %v114
    %291 = vmatpush.msra.mxu0 %v113
    %292 = vmatpush.msra.mxu0 %v112
    %293 = vmatpush.msra.mxu0 %v111
    %294 = vmatpush.msra.mxu0 %v110
    %295 = vmatpush.msra.mxu0 %v109
    %296 = vmatpush.msra.mxu0 %v108
    %297 = vmatmul.f32.gmra.mxu0 %v170
    %v298 = vpop.f32.mrf.mxu0
    %v299 = vadd.f32 %v279, %v298
    %300 = vdwg.mxu0
    %301 = vmatpush.msra.mxu0 %v139
    %302 = vmatpush.msra.mxu0 %v138
    %303 = vmatpush.msra.mxu0 %v137
    %304 = vmatpush.msra.mxu0 %v136
    %305 = vmatpush.msra.mxu0 %v135
    %306 = vmatpush.msra.mxu0 %v134
    %307 = vmatpush.msra.mxu0 %v133
    %308 = vmatpush.msra.mxu0 %v132
    %309 = vmatpush.msra.mxu0 %v131
    %310 = vmatpush.msra.mxu0 %v130
    %311 = vmatpush.msra.mxu0 %v129
    %312 = vmatpush.msra.mxu0 %v128
    %313 = vmatpush.msra.mxu0 %v127
    %314 = vmatpush.msra.mxu0 %v126
    %315 = vmatpush.msra.mxu0 %v125
    %316 = vmatpush.msra.mxu0 %v124
    %317 = vmatmul.f32.gmra.mxu0 %v171
    %v318 = vpop.f32.mrf.mxu0
    %v319 = vadd.f32 %v299, %v318
    %320 = vdwg.mxu0
    %321 = vmatpush.msra.mxu0 %v155
    %322 = vmatpush.msra.mxu0 %v154
    %323 = vmatpush.msra.mxu0 %v153
    %324 = vmatpush.msra.mxu0 %v152
    %325 = vmatpush.msra.mxu0 %v151
    %326 = vmatpush.msra.mxu0 %v150
    %327 = vmatpush.msra.mxu0 %v149
    %328 = vmatpush.msra.mxu0 %v148
    %329 = vmatpush.msra.mxu0 %v147
    %330 = vmatpush.msra.mxu0 %v146
    %331 = vmatpush.msra.mxu0 %v145
    %332 = vmatpush.msra.mxu0 %v144
    %333 = vmatpush.msra.mxu0 %v143
    %334 = vmatpush.msra.mxu0 %v142
    %335 = vmatpush.msra.mxu0 %v141
    %336 = vmatpush.msra.mxu0 %v140
    %337 = vmatmul.f32.gmra.mxu0 %v172
    %v338 = vpop.f32.mrf.mxu0
    %v339 = vadd.f32 %v319, %v338
    %340 = vdwg.mxu0
    %v341 = vlaneseq
    %v342 = vand.u32 %v341, 127
    %vm343 = vcmp.ge.s32.totalorder %v342, 8
    %v344 = vld [vmem:[%s1] sm:$0x3]
    %v345 = vsel %vm343, %v344, %v339
    %vm346 = vcmask 123904
    %347 = vst.msk [vmem:[#allocation2] sm:$0x3] %vm346, %v345
    %v348 = vld [vmem:[%s4] sm:$0xff]
    %v349 = vld [vmem:[%s4 + $0x8] sm:$0xff]
    %v350 = vld [vmem:[%s4 + $0x10] sm:$0xff]
    %v351 = vld [vmem:[%s4 + $0x18] sm:$0xff]
    %v352 = vld [vmem:[%s4 + $0x20] sm:$0xff]
    %v353 = vld [vmem:[%s4 + $0x28] sm:$0xff]
    %v354 = vld [vmem:[%s4 + $0x30] sm:$0xff]
    %v355 = vld [vmem:[%s4 + $0x38] sm:$0xff]
    %v356 = vld [vmem:[%s4 + $0x40] sm:$0xff]
    %v357 = vld [vmem:[%s4 + $0x48] sm:$0xff]
    %v358 = vld [vmem:[%s4 + $0x50] sm:$0xff]
    %v359 = vld [vmem:[%s4 + $0x58] sm:$0xff]
    %v360 = vld [vmem:[%s4 + $0x60] sm:$0xff]
    %v361 = vld [vmem:[%s4 + $0x68] sm:$0xff]
    %v362 = vld [vmem:[%s4 + $0x70] sm:$0xff]
    %v363 = vld [vmem:[%s4 + $0x78] sm:$0xff]
    %v364 = vld [vmem:[%s5] sm:$0xff]
    %v366 = vperm.slane %v364, 0
    %v367 = vperm.slane %v364, 1
    %v368 = vperm.slane %v364, 2
    %v369 = vperm.slane %v364, 3
    %v370 = vperm.slane %v364, 4
    %v371 = vperm.slane %v364, 5
    %v372 = vperm.slane %v364, 6
    %v373 = vperm.slane %v364, 7
    %vm382 = vcmask 130048
    %v384 = vsel %vm382, %v345, 0
    %386 = vmatpush.msra.mxu0 0.0
    %387 = vmatpush.msra.mxu0 0.0
    %388 = vmatpush.msra.mxu0 0.0
    %389 = vmatpush.msra.mxu0 0.0
    %390 = vmatpush.msra.mxu0 0.0
    %391 = vmatpush.msra.mxu0 0.0
    %392 = vmatpush.msra.mxu0 0.0
    %393 = vmatpush.msra.mxu0 0.0
    %394 = vmatpush.msra.mxu0 0.0
    %395 = vmatpush.msra.mxu0 0.0
    %396 = vmatpush.msra.mxu0 0.0
    %397 = vmatpush.msra.mxu0 0.0
    %398 = vmatpush.msra.mxu0 0.0
    %399 = vmatpush.msra.mxu0 0.0
    %400 = vmatpush.msra.mxu0 %v356
    %401 = vmatpush.msra.mxu0 %v348
    %402 = vmatmul.f32.gmra.mxu0 %v384
    %v403 = vpop.f32.mrf.mxu0
    %v404 = vadd.f32 %v366, %v403
    %405 = vdwg.mxu0
    %406 = vmatpush.msra.mxu0 0.0
    %407 = vmatpush.msra.mxu0 0.0
    %408 = vmatpush.msra.mxu0 0.0
    %409 = vmatpush.msra.mxu0 0.0
    %410 = vmatpush.msra.mxu0 0.0
    %411 = vmatpush.msra.mxu0 0.0
    %412 = vmatpush.msra.mxu0 0.0
    %413 = vmatpush.msra.mxu0 0.0
    %414 = vmatpush.msra.mxu0 0.0
    %415 = vmatpush.msra.mxu0 0.0
    %416 = vmatpush.msra.mxu0 0.0
    %417 = vmatpush.msra.mxu0 0.0
    %418 = vmatpush.msra.mxu0 0.0
    %419 = vmatpush.msra.mxu0 0.0
    %420 = vmatpush.msra.mxu0 %v357
    %421 = vmatpush.msra.mxu0 %v349
    %422 = vmatmul.f32.gmra.mxu0 %v384
    %v423 = vpop.f32.mrf.mxu0
    %v424 = vadd.f32 %v367, %v423
    %425 = vdwg.mxu0
    %426 = vmatpush.msra.mxu0 0.0
    %427 = vmatpush.msra.mxu0 0.0
    %428 = vmatpush.msra.mxu0 0.0
    %429 = vmatpush.msra.mxu0 0.0
    %430 = vmatpush.msra.mxu0 0.0
    %431 = vmatpush.msra.mxu0 0.0
    %432 = vmatpush.msra.mxu0 0.0
    %433 = vmatpush.msra.mxu0 0.0
    %434 = vmatpush.msra.mxu0 0.0
    %435 = vmatpush.msra.mxu0 0.0
    %436 = vmatpush.msra.mxu0 0.0
    %437 = vmatpush.msra.mxu0 0.0
    %438 = vmatpush.msra.mxu0 0.0
    %439 = vmatpush.msra.mxu0 0.0
    %440 = vmatpush.msra.mxu0 %v358
    %441 = vmatpush.msra.mxu0 %v350
    %442 = vmatmul.f32.gmra.mxu0 %v384
    %v443 = vpop.f32.mrf.mxu0
    %v444 = vadd.f32 %v368, %v443
    %445 = vdwg.mxu0
    %446 = vmatpush.msra.mxu0 0.0
    %447 = vmatpush.msra.mxu0 0.0
    %448 = vmatpush.msra.mxu0 0.0
    %449 = vmatpush.msra.mxu0 0.0
    %450 = vmatpush.msra.mxu0 0.0
    %451 = vmatpush.msra.mxu0 0.0
    %452 = vmatpush.msra.mxu0 0.0
    %453 = vmatpush.msra.mxu0 0.0
    %454 = vmatpush.msra.mxu0 0.0
    %455 = vmatpush.msra.mxu0 0.0
    %456 = vmatpush.msra.mxu0 0.0
    %457 = vmatpush.msra.mxu0 0.0
    %458 = vmatpush.msra.mxu0 0.0
    %459 = vmatpush.msra.mxu0 0.0
    %460 = vmatpush.msra.mxu0 %v359
    %461 = vmatpush.msra.mxu0 %v351
    %462 = vmatmul.f32.gmra.mxu0 %v384
    %v463 = vpop.f32.mrf.mxu0
    %v464 = vadd.f32 %v369, %v463
    %465 = vdwg.mxu0
    %466 = vmatpush.msra.mxu0 0.0
    %467 = vmatpush.msra.mxu0 0.0
    %468 = vmatpush.msra.mxu0 0.0
    %469 = vmatpush.msra.mxu0 0.0
    %470 = vmatpush.msra.mxu0 0.0
    %471 = vmatpush.msra.mxu0 0.0
    %472 = vmatpush.msra.mxu0 0.0
    %473 = vmatpush.msra.mxu0 0.0
    %474 = vmatpush.msra.mxu0 0.0
    %475 = vmatpush.msra.mxu0 0.0
    %476 = vmatpush.msra.mxu0 0.0
    %477 = vmatpush.msra.mxu0 0.0
    %478 = vmatpush.msra.mxu0 0.0
    %479 = vmatpush.msra.mxu0 0.0
    %480 = vmatpush.msra.mxu0 %v360
    %481 = vmatpush.msra.mxu0 %v352
    %482 = vmatmul.f32.gmra.mxu0 %v384
    %v483 = vpop.f32.mrf.mxu0
    %v484 = vadd.f32 %v370, %v483
    %485 = vdwg.mxu0
    %486 = vmatpush.msra.mxu0 0.0
    %487 = vmatpush.msra.mxu0 0.0
    %488 = vmatpush.msra.mxu0 0.0
    %489 = vmatpush.msra.mxu0 0.0
    %490 = vmatpush.msra.mxu0 0.0
    %491 = vmatpush.msra.mxu0 0.0
    %492 = vmatpush.msra.mxu0 0.0
    %493 = vmatpush.msra.mxu0 0.0
    %494 = vmatpush.msra.mxu0 0.0
    %495 = vmatpush.msra.mxu0 0.0
    %496 = vmatpush.msra.mxu0 0.0
    %497 = vmatpush.msra.mxu0 0.0
    %498 = vmatpush.msra.mxu0 0.0
    %499 = vmatpush.msra.mxu0 0.0
    %500 = vmatpush.msra.mxu0 %v361
    %501 = vmatpush.msra.mxu0 %v353
    %502 = vmatmul.f32.gmra.mxu0 %v384
    %v503 = vpop.f32.mrf.mxu0
    %v504 = vadd.f32 %v371, %v503
    %505 = vdwg.mxu0
    %506 = vmatpush.msra.mxu0 0.0
    %507 = vmatpush.msra.mxu0 0.0
    %508 = vmatpush.msra.mxu0 0.0
    %509 = vmatpush.msra.mxu0 0.0
    %510 = vmatpush.msra.mxu0 0.0
    %511 = vmatpush.msra.mxu0 0.0
    %512 = vmatpush.msra.mxu0 0.0
    %513 = vmatpush.msra.mxu0 0.0
    %514 = vmatpush.msra.mxu0 0.0
    %515 = vmatpush.msra.mxu0 0.0
    %516 = vmatpush.msra.mxu0 0.0
    %517 = vmatpush.msra.mxu0 0.0
    %518 = vmatpush.msra.mxu0 0.0
    %519 = vmatpush.msra.mxu0 0.0
    %520 = vmatpush.msra.mxu0 %v362
    %521 = vmatpush.msra.mxu0 %v354
    %522 = vmatmul.f32.gmra.mxu0 %v384
    %v523 = vpop.f32.mrf.mxu0
    %v524 = vadd.f32 %v372, %v523
    %525 = vdwg.mxu0
    %526 = vmatpush.msra.mxu0 0.0
    %527 = vmatpush.msra.mxu0 0.0
    %528 = vmatpush.msra.mxu0 0.0
    %529 = vmatpush.msra.mxu0 0.0
    %530 = vmatpush.msra.mxu0 0.0
    %531 = vmatpush.msra.mxu0 0.0
    %532 = vmatpush.msra.mxu0 0.0
    %533 = vmatpush.msra.mxu0 0.0
    %534 = vmatpush.msra.mxu0 0.0
    %535 = vmatpush.msra.mxu0 0.0
    %536 = vmatpush.msra.mxu0 0.0
    %537 = vmatpush.msra.mxu0 0.0
    %538 = vmatpush.msra.mxu0 0.0
    %539 = vmatpush.msra.mxu0 0.0
    %540 = vmatpush.msra.mxu0 %v363
    %541 = vmatpush.msra.mxu0 %v355
    %542 = vmatmul.f32.gmra.mxu0 %v384
    %v543 = vpop.f32.mrf.mxu0
    %v544 = vadd.f32 %v373, %v543
    %545 = vdwg.mxu0
    %v554 = vrot.slane %v424, 6
    %v555 = vrot.slane %v444, 4
    %v556 = vrot.slane %v464, 2
    %v557 = vrot.slane %v504, 6
    %v558 = vrot.slane %v524, 4
    %v559 = vrot.slane %v544, 2
    %vm560 = vcmask 1041408
    %v561 = vsel %vm560, %v404, %v554
    %vm562 = vcmask 1045508
    %v563 = vsel %vm562, %v555, %v556
    %vm564 = vcmask 1043456
    %v565 = vsel %vm564, %v561, %v563
    %v566 = vsel %vm560, %v484, %v557
    %v567 = vsel %vm562, %v558, %v559
    %v568 = vsel %vm564, %v566, %v567
    %571 = vst [vmem:[%s7] sm:$0xff] %v565
    %572 = vst [vmem:[%s7 + $0x8] sm:$0xff] %v568
    // Predicated region
    $region26: #{conv_deconv_forward.4} parent=1 // pred_check
      _
    $region27: #{conv_deconv_forward.4} parent=1 // pred_check_branch
      %574 = sbr.rel (0) target = $region29
    $region28: #{conv_deconv_forward.4} parent=1 // pred_region
      %576 = vsyncadd [#allocation3], 0
      %s578 = sshll.u32 [#allocation2], 4
      %s579 = int_to_ptr.vmem [resolvable:$true] %s578
      %s580 = sshll.u32 %s6, 4
      %s581 = int_to_ptr.hbm [resolvable:$true] %s580
      %583 = dma.vmem_to_hbm [thread:$0]  %s579, 32, %s581, [#allocation3]
    $region29: #{conv_deconv_forward.4} parent=1 // pred_fallthru
      _
    // Predicated region
    $region30: #{conv_deconv_forward.4} parent=1 // pred_check
      _
    $region31: #{conv_deconv_forward.4} parent=1 // pred_check_branch
      %585 = sbr.rel (0) target = $region33
    $region32: #{conv_deconv_forward.4} parent=1 // pred_region
      _
    $region33: #{conv_deconv_forward.4} parent=1 // pred_fallthru
      _
    // Predicated region
    $region34: #{conv_deconv_forward.4} parent=1 // pred_check
      _
    $region35: #{conv_deconv_forward.4} parent=1 // pred_check_branch
      %587 = sbr.rel (0) target = $region37
    $region36: #{conv_deconv_forward.4} parent=1 // pred_region
      %589 = dma.done [#allocation3], 32
    $region37: #{conv_deconv_forward.4} parent=1 // pred_fallthru
      _
    // Predicated region
    $region38: #{conv_deconv_forward.4} parent=1 // pred_check
      _
    $region39: #{conv_deconv_forward.4} parent=1 // pred_check_branch
      %591 = sbr.rel (0) target = $region41
    $region40: #{conv_deconv_forward.4} parent=1 // pred_region
      _
    $region41: #{conv_deconv_forward.4} parent=1 // pred_fallthru
      _
    %592 = vsyncpa [#allocation3], 1

// kernel: conv_deconv_forward.5
$region0: #{conv_deconv_forward.5}
  #allocation0 [shape = 'u32[]', space=smem, size = 0x4, offset = 0x4, fixed_abs, tag = 'smem constant byte address 0x4 - core index']
  #allocation1 [shape = 'u32[72,128]{1,0:T(1,128)}', space=vmem, size = 0x9000, scoped, tag = 'internal scratch']
  %s0 = inlined_call_operand.vmem [shape: f32[2,64,16], index: 0, kind: input, shape index: {}]
  %s1 = inlined_call_operand.vmem [shape: f32[9,32,64], index: 1, kind: input, shape index: {}]
  %s2 = inlined_call_operand.vmem [shape: f32[32,64], index: 2, kind: input, shape index: {}]
  %s3 = inlined_call_operand.vmem [shape: f32[9,16,64], index: 3, kind: input, shape index: {}]
  %s4 = inlined_call_operand.vmem [shape: f32[9,4,32], index: 4, kind: input, shape index: {}]
  %s5 = inlined_call_operand.vmem [shape: f32[4,256], index: 5, kind: input, shape index: {}]
  %s6 = inlined_call_operand.vmem [shape: f32[9,64,256], index: 6, kind: input, shape index: {}]
  %s7 = inlined_call_operand.vmem [shape: f32[2,4,256], index: 7, kind: output, shape index: {}]
  %s8 = sld [smem:[#allocation0]]
  $region61: #{conv_deconv_forward.5} parent=0
    _
  %s10 = ssub.s32 1, %s8
  %s11 = scalar_select 0, %s10, %s8
  loop: start=0, step=1, limit=4
  $region2: #{conv_deconv_forward.5} parent=0 // loop_pre_header
    _
  $region3: #{conv_deconv_forward.5} parent=0 // loop_header
    %s13 = sphi 0, %s17
    %p14 = scmp.ge.s32.totalorder %s13, 4
    %s23 = sphi 0, %s25
    %s26 = sphi 0, %s23
    %s27 = sphi 0, %s26
    %s43 = sphi 0, %s27
    %s47 = sphi 0, %s47
    %s49 = sphi 0, %s47
    %s50 = sphi 0, %s49
    %s64 = sphi 0, %s50
    %s68 = sphi 0, %s68
    %s70 = sphi 0, %s68
    %s71 = sphi 0, %s70
    %s85 = sphi 0, %s71
    %s89 = sphi 0, %s89
    %s91 = sphi 0, %s89
    %s92 = sphi 0, %s91
    %s106 = sphi 0, %s92
    %s110 = sphi 0, %s110
    %s112 = sphi 0, %s110
    %s113 = sphi 0, %s112
    %s127 = sphi 0, %s113
    %s131 = sphi 0, %s131
    %s133 = sphi 0, %s131
    %s134 = sphi 0, %s133
    %s148 = sphi 0, %s134
    %s152 = sphi 0, %s152
    %s154 = sphi 0, %s152
    %s155 = sphi 0, %s154
    %s169 = sphi 0, %s155
    %s175 = sphi 0, %s177
    %s178 = sphi 0, %s175
    %s179 = sphi 0, %s178
    %s195 = sphi 0, %s179
  $region4: #{conv_deconv_forward.5} parent=0 // loop_header_branch
    %16 = sbr.rel (%p14) target = $region8
  $region5: #{conv_deconv_forward.5} parent=0 // loop_body
    %s18 = ssub.s32 %s13, 1
    %s19 = ssub.s32 %s13, 2
    %s20 = sadd.s32 %s13, 1
    %s21 = ssub.s32 %s13, %s20
    %p22 = scmp.eq.s32.totalorder %s21, 0
    %s24 = sadd.s32 %s23, 1
    %s25 = scalar_select %p22, %s23, %s24
    %p28 = pneg %p22
    %p29 = scmp.eq.s32.totalorder %s13, 1
    %p30 = por %p28, %p29
    %p31 = scmp.ne.s32.totalorder %s23, %s26
    %p32 = scmp.eq.s32.totalorder %s13, 0
    %p33 = por %p31, %p32
    %p34 = scmp.ne.s32.totalorder %s23, %s26
    %p35 = scmp.eq.s32.totalorder %s18, 1
    %p36 = por %p34, %p35
    %p37 = scmp.ne.s32.totalorder %s26, %s27
    %p38 = scmp.eq.s32.totalorder %s18, 0
    %p39 = por %p37, %p38
    %p40 = scmp.ne.s32.totalorder %s26, %s27
    %p41 = scmp.eq.s32.totalorder %s19, 1
    %p42 = por %p40, %p41
    %p44 = scmp.ne.s32.totalorder %s27, %s43
    %p45 = scmp.eq.s32.totalorder %s19, 0
    %p46 = por %p44, %p45
    %s48 = sadd.s32 %s47, 1
    %p51 = scmp.eq.s32.totalorder %s13, 1
    %p52 = scmp.ne.s32.totalorder %s47, %s49
    %p53 = scmp.eq.s32.totalorder %s13, 0
    %p54 = por %p52, %p53
    %p55 = scmp.ne.s32.totalorder %s47, %s49
    %p56 = scmp.eq.s32.totalorder %s18, 1
    %p57 = por %p55, %p56
    %p58 = scmp.ne.s32.totalorder %s49, %s50
    %p59 = scmp.eq.s32.totalorder %s18, 0
    %p60 = por %p58, %p59
    %p61 = scmp.ne.s32.totalorder %s49, %s50
    %p62 = scmp.eq.s32.totalorder %s19, 1
    %p63 = por %p61, %p62
    %p65 = scmp.ne.s32.totalorder %s50, %s64
    %p66 = scmp.eq.s32.totalorder %s19, 0
    %p67 = por %p65, %p66
    %s69 = sadd.s32 %s68, 1
    %p72 = scmp.eq.s32.totalorder %s13, 1
    %p73 = scmp.ne.s32.totalorder %s68, %s70
    %p74 = scmp.eq.s32.totalorder %s13, 0
    %p75 = por %p73, %p74
    %p76 = scmp.ne.s32.totalorder %s68, %s70
    %p77 = scmp.eq.s32.totalorder %s18, 1
    %p78 = por %p76, %p77
    %p79 = scmp.ne.s32.totalorder %s70, %s71
    %p80 = scmp.eq.s32.totalorder %s18, 0
    %p81 = por %p79, %p80
    %p82 = scmp.ne.s32.totalorder %s70, %s71
    %p83 = scmp.eq.s32.totalorder %s19, 1
    %p84 = por %p82, %p83
    %p86 = scmp.ne.s32.totalorder %s71, %s85
    %p87 = scmp.eq.s32.totalorder %s19, 0
    %p88 = por %p86, %p87
    %s90 = sadd.s32 %s89, 1
    %p93 = scmp.eq.s32.totalorder %s13, 1
    %p94 = scmp.ne.s32.totalorder %s89, %s91
    %p95 = scmp.eq.s32.totalorder %s13, 0
    %p96 = por %p94, %p95
    %p97 = scmp.ne.s32.totalorder %s89, %s91
    %p98 = scmp.eq.s32.totalorder %s18, 1
    %p99 = por %p97, %p98
    %p100 = scmp.ne.s32.totalorder %s91, %s92
    %p101 = scmp.eq.s32.totalorder %s18, 0
    %p102 = por %p100, %p101
    %p103 = scmp.ne.s32.totalorder %s91, %s92
    %p104 = scmp.eq.s32.totalorder %s19, 1
    %p105 = por %p103, %p104
    %p107 = scmp.ne.s32.totalorder %s92, %s106
    %p108 = scmp.eq.s32.totalorder %s19, 0
    %p109 = por %p107, %p108
    %s111 = sadd.s32 %s110, 1
    %p114 = scmp.eq.s32.totalorder %s13, 1
    %p115 = scmp.ne.s32.totalorder %s110, %s112
    %p116 = scmp.eq.s32.totalorder %s13, 0
    %p117 = por %p115, %p116
    %p118 = scmp.ne.s32.totalorder %s110, %s112
    %p119 = scmp.eq.s32.totalorder %s18, 1
    %p120 = por %p118, %p119
    %p121 = scmp.ne.s32.totalorder %s112, %s113
    %p122 = scmp.eq.s32.totalorder %s18, 0
    %p123 = por %p121, %p122
    %p124 = scmp.ne.s32.totalorder %s112, %s113
    %p125 = scmp.eq.s32.totalorder %s19, 1
    %p126 = por %p124, %p125
    %p128 = scmp.ne.s32.totalorder %s113, %s127
    %p129 = scmp.eq.s32.totalorder %s19, 0
    %p130 = por %p128, %p129
    %s132 = sadd.s32 %s131, 1
    %p135 = scmp.eq.s32.totalorder %s13, 1
    %p136 = scmp.ne.s32.totalorder %s131, %s133
    %p137 = scmp.eq.s32.totalorder %s13, 0
    %p138 = por %p136, %p137
    %p139 = scmp.ne.s32.totalorder %s131, %s133
    %p140 = scmp.eq.s32.totalorder %s18, 1
    %p141 = por %p139, %p140
    %p142 = scmp.ne.s32.totalorder %s133, %s134
    %p143 = scmp.eq.s32.totalorder %s18, 0
    %p144 = por %p142, %p143
    %p145 = scmp.ne.s32.totalorder %s133, %s134
    %p146 = scmp.eq.s32.totalorder %s19, 1
    %p147 = por %p145, %p146
    %p149 = scmp.ne.s32.totalorder %s134, %s148
    %p150 = scmp.eq.s32.totalorder %s19, 0
    %p151 = por %p149, %p150
    %s153 = sadd.s32 %s152, 1
    %p156 = scmp.eq.s32.totalorder %s13, 1
    %p157 = scmp.ne.s32.totalorder %s152, %s154
    %p158 = scmp.eq.s32.totalorder %s13, 0
    %p159 = por %p157, %p158
    %p160 = scmp.ne.s32.totalorder %s152, %s154
    %p161 = scmp.eq.s32.totalorder %s18, 1
    %p162 = por %p160, %p161
    %p163 = scmp.ne.s32.totalorder %s154, %s155
    %p164 = scmp.eq.s32.totalorder %s18, 0
    %p165 = por %p163, %p164
    %p166 = scmp.ne.s32.totalorder %s154, %s155
    %p167 = scmp.eq.s32.totalorder %s19, 1
    %p168 = por %p166, %p167
    %p170 = scmp.ne.s32.totalorder %s155, %s169
    %p171 = scmp.eq.s32.totalorder %s19, 0
    %p172 = por %p170, %p171
    %s173 = ssub.s32 %s13, %s20
    %p174 = scmp.eq.s32.totalorder %s173, 0
    %s176 = sadd.s32 %s175, 1
    %s177 = scalar_select %p174, %s175, %s176
    %p180 = pneg %p174
    %p181 = scmp.eq.s32.totalorder %s13, 1
    %p182 = por %p180, %p181
    %p183 = scmp.ne.s32.totalorder %s175, %s178
    %p184 = scmp.eq.s32.totalorder %s13, 0
    %p185 = por %p183, %p184
    %p186 = scmp.ne.s32.totalorder %s175, %s178
    %p187 = scmp.eq.s32.totalorder %s18, 1
    %p188 = por %p186, %p187
    %p189 = scmp.ne.s32.totalorder %s178, %s179
    %p190 = scmp.eq.s32.totalorder %s18, 0
    %p191 = por %p189, %p190
    %p192 = scmp.ne.s32.totalorder %s178, %s179
    %p193 = scmp.eq.s32.totalorder %s19, 1
    %p194 = por %p192, %p193
    %p196 = scmp.ne.s32.totalorder %s179, %s195
    %p197 = scmp.eq.s32.totalorder %s19, 0
    %p198 = por %p196, %p197
    %p199 = scmp.le.s32.totalorder 1, %s13
    %p200 = scmp.lt.s32.totalorder %s13, 3
    %p201 = pnand %p199, %p200
    %p202 = pneg %p201
    // Predicated region
    $region9: #{conv_deconv_forward.5} parent=5 // pred_check
      _
    $region10: #{conv_deconv_forward.5} parent=5 // pred_check_branch
      %204 = sbr.rel (%p201) target = $region12
    $region11: #{conv_deconv_forward.5} parent=5 // pred_region
      %s205 = ssub.s32 %s13, 1
      // Predicated region
      $region13: #{conv_deconv_forward.5} parent=11 // pred_check
        %p206 = pneg %p60
      $region14: #{conv_deconv_forward.5} parent=11 // pred_check_branch
        %208 = sbr.rel (%p206) target = $region16
      $region15: #{conv_deconv_forward.5} parent=11 // pred_region
        _
      $region16: #{conv_deconv_forward.5} parent=11 // pred_fallthru
        _
      // Predicated region
      $region17: #{conv_deconv_forward.5} parent=11 // pred_check
        %p209 = pneg %p81
      $region18: #{conv_deconv_forward.5} parent=11 // pred_check_branch
        %211 = sbr.rel (%p209) target = $region20
      $region19: #{conv_deconv_forward.5} parent=11 // pred_region
        _
      $region20: #{conv_deconv_forward.5} parent=11 // pred_fallthru
        _
      // Predicated region
      $region21: #{conv_deconv_forward.5} parent=11 // pred_check
        %p212 = pneg %p102
      $region22: #{conv_deconv_forward.5} parent=11 // pred_check_branch
        %214 = sbr.rel (%p212) target = $region24
      $region23: #{conv_deconv_forward.5} parent=11 // pred_region
        _
      $region24: #{conv_deconv_forward.5} parent=11 // pred_fallthru
        _
      // Predicated region
      $region25: #{conv_deconv_forward.5} parent=11 // pred_check
        %p215 = pneg %p123
      $region26: #{conv_deconv_forward.5} parent=11 // pred_check_branch
        %217 = sbr.rel (%p215) target = $region28
      $region27: #{conv_deconv_forward.5} parent=11 // pred_region
        _
      $region28: #{conv_deconv_forward.5} parent=11 // pred_fallthru
        _
      // Predicated region
      $region29: #{conv_deconv_forward.5} parent=11 // pred_check
        %p218 = pneg %p144
      $region30: #{conv_deconv_forward.5} parent=11 // pred_check_branch
        %220 = sbr.rel (%p218) target = $region32
      $region31: #{conv_deconv_forward.5} parent=11 // pred_region
        _
      $region32: #{conv_deconv_forward.5} parent=11 // pred_fallthru
        _
      // Predicated region
      $region33: #{conv_deconv_forward.5} parent=11 // pred_check
        %p221 = pneg %p165
      $region34: #{conv_deconv_forward.5} parent=11 // pred_check_branch
        %223 = sbr.rel (%p221) target = $region36
      $region35: #{conv_deconv_forward.5} parent=11 // pred_region
        _
      $region36: #{conv_deconv_forward.5} parent=11 // pred_fallthru
        _
    $region12: #{conv_deconv_forward.5} parent=5 // pred_fallthru
      _
    %p224 = scmp.lt.s32.totalorder %s13, 2
    // Predicated region
    $region37: #{conv_deconv_forward.5} parent=5 // pred_check
      %p225 = pneg %p224
    $region38: #{conv_deconv_forward.5} parent=5 // pred_check_branch
      %227 = sbr.rel (%p225) target = $region40
    $region39: #{conv_deconv_forward.5} parent=5 // pred_region
      // Predicated region
      $region41: #{conv_deconv_forward.5} parent=39 // pred_check
        %p228 = pneg %p33
      $region42: #{conv_deconv_forward.5} parent=39 // pred_check_branch
        %230 = sbr.rel (%p228) target = $region44
      $region43: #{conv_deconv_forward.5} parent=39 // pred_region
        %p231 = scmp.lt.s32.totalorder %s13, 1
        %s232 = scalar_select %p231, %s13, 1
        %s233 = smul.addr %s232, 8
        %s234 = smul.addr %s233, 8
        %s235 = scalar_lea.vmem %s0, %s234
      $region44: #{conv_deconv_forward.5} parent=39 // pred_fallthru
        _
    $region40: #{conv_deconv_forward.5} parent=5 // pred_fallthru
      _
    %p236 = scmp.le.s32.totalorder 1, %s13
    %p237 = scmp.lt.s32.totalorder %s13, 3
    %p238 = pnand %p236, %p237
    %p239 = pneg %p238
    // Predicated region
    $region45: #{conv_deconv_forward.5} parent=5 // pred_check
      _
    $region46: #{conv_deconv_forward.5} parent=5 // pred_check_branch
      %241 = sbr.rel (%p238) target = $region48
    $region47: #{conv_deconv_forward.5} parent=5 // pred_region
      %s242 = ssub.s32 %s13, 1
      %p243 = scmp.lt.s32.totalorder %s18, 1
      %s244 = scalar_select %p243, %s18, 1
      %s245 = smul.addr %s244, 8
      %s246 = smul.addr %s245, 8
      %s247 = scalar_lea.vmem %s0, %s246
      %p248 = pneg %p39
      %p249 = pneg %p36
      %p250 = pneg %p60
      %p251 = pneg %p57
      %p252 = pneg %p81
      %p253 = pneg %p78
      %p254 = pneg %p102
      %p255 = pneg %p99
      %p256 = pneg %p123
      %p257 = pneg %p120
      %p258 = pneg %p144
      %p259 = pneg %p141
      %p260 = pneg %p165
      %p261 = pneg %p162
      %p262 = pneg %p191
      %p263 = pneg %p188
      %p264 = scmp.lt.s32.totalorder %s18, 1
      %s265 = scalar_select %p264, %s18, 1
      %s266 = smul.addr %s265, 2
      %s267 = smul.addr %s266, 4
      %s268 = scalar_lea.vmem %s7, %s267
      %p269 = scmp.lt.s32.totalorder %s18, 1
      %s270 = scalar_select %p269, %s18, 1
      %s271 = smul.addr %s270, 8
      %s272 = smul.addr %s271, 8
      %s273 = scalar_lea.vmem %s0, %s272
      %p274 = scmp.lt.s32.totalorder %s18, 1
      %s275 = scalar_select %p274, %s18, 1
      %s276 = smul.addr %s275, 2
      %s277 = smul.addr %s276, 4
      %s278 = scalar_lea.vmem %s7, %s277
      %v279 = vld [vmem:[%s273] sm:$0xff]
      %v280 = vld [vmem:[%s273 + $0x8] sm:$0xff]
      %v281 = vld [vmem:[%s273 + $0x10] sm:$0xff]
      %v282 = vld [vmem:[%s273 + $0x18] sm:$0xff]
      %v283 = vld [vmem:[%s273 + $0x20] sm:$0xff]
      %v284 = vld [vmem:[%s273 + $0x28] sm:$0xff]
      %v285 = vld [vmem:[%s273 + $0x30] sm:$0xff]
      %v286 = vld [vmem:[%s273 + $0x38] sm:$0xff]
      %v287 = vld [vmem:[%s2] sm:$0xff]
      %v288 = vld [vmem:[%s2 + $0x8] sm:$0xff]
      %v289 = vld [vmem:[%s2 + $0x10] sm:$0xff]
      %v290 = vld [vmem:[%s2 + $0x18] sm:$0xff]
      %v291 = vld [vmem:[%s1] sm:$0xff]
      %v292 = vld [vmem:[%s1 + $0x8] sm:$0xff]
      %v293 = vld [vmem:[%s1 + $0x10] sm:$0xff]
      %v294 = vld [vmem:[%s1 + $0x18] sm:$0xff]
      %vm295 = vcmask 523264
      %v297 = vsel %vm295, %v291, 0
      %v300 = vsel %vm295, %v292, 0
      %v303 = vsel %vm295, %v293, 0
      %v306 = vsel %vm295, %v294, 0
      %308 = vmatpush.msra.mxu0 0.0
      %309 = vmatpush.msra.mxu0 0.0
      %310 = vmatpush.msra.mxu0 0.0
      %311 = vmatpush.msra.mxu0 0.0
      %312 = vmatpush.msra.mxu0 0.0
      %313 = vmatpush.msra.mxu0 0.0
      %314 = vmatpush.msra.mxu0 0.0
      %315 = vmatpush.msra.mxu0 0.0
      %316 = vmatpush.msra.mxu0 %v286
      %317 = vmatpush.msra.mxu0 %v285
      %318 = vmatpush.msra.mxu0 %v284
      %319 = vmatpush.msra.mxu0 %v283
      %320 = vmatpush.msra.mxu0 %v282
      %321 = vmatpush.msra.mxu0 %v281
      %322 = vmatpush.msra.mxu0 %v280
      %323 = vmatpush.msra.mxu0 %v279
      %324 = vmatmul.f32.gmra.mxu0 %v297
      %v325 = vpop.f32.mrf.mxu0
      %v326 = vadd.f32 0.0, %v325
      %327 = vmatmul.f32.gmra.mxu0 %v300
      %v328 = vpop.f32.mrf.mxu0
      %v329 = vadd.f32 0.0, %v328
      %330 = vmatmul.f32.gmra.mxu0 %v303
      %v331 = vpop.f32.mrf.mxu0
      %v332 = vadd.f32 0.0, %v331
      %333 = vmatmul.f32.gmra.mxu0 %v306
      %v334 = vpop.f32.mrf.mxu0
      %v335 = vadd.f32 0.0, %v334
      %336 = vdwg.mxu0
      %v337 = vld [vmem:[%s3] sm:$0xff]
      %v338 = vld [vmem:[%s3 + $0x8] sm:$0xff]
      %vm339 = vcmask 130048
      %v341 = vsel %vm339, %v326, 0
      %v344 = vsel %vm339, %v329, 0
      %v347 = vsel %vm339, %v332, 0
      %v350 = vsel %vm339, %v335, 0
      %352 = vmatpush.msra.mxu0 0.0
      %353 = vmatpush.msra.mxu0 0.0
      %354 = vmatpush.msra.mxu0 0.0
      %355 = vmatpush.msra.mxu0 0.0
      %356 = vmatpush.msra.mxu0 0.0
      %357 = vmatpush.msra.mxu0 0.0
      %358 = vmatpush.msra.mxu0 0.0
      %359 = vmatpush.msra.mxu0 0.0
      %360 = vmatpush.msra.mxu0 0.0
      %361 = vmatpush.msra.mxu0 0.0
      %362 = vmatpush.msra.mxu0 0.0
      %363 = vmatpush.msra.mxu0 0.0
      %364 = vmatpush.msra.mxu0 0.0
      %365 = vmatpush.msra.mxu0 0.0
      %366 = vmatpush.msra.mxu0 %v338
      %367 = vmatpush.msra.mxu0 %v337
      %368 = vmatmul.f32.gmra.mxu0 %v341
      %v369 = vpop.f32.mrf.mxu0
      %v370 = vadd.f32 0.0, %v369
      %371 = vmatmul.f32.gmra.mxu0 %v344
      %v372 = vpop.f32.mrf.mxu0
      %v373 = vadd.f32 0.0, %v372
      %374 = vmatmul.f32.gmra.mxu0 %v347
      %v375 = vpop.f32.mrf.mxu0
      %v376 = vadd.f32 0.0, %v375
      %377 = vmatmul.f32.gmra.mxu0 %v350
      %v378 = vpop.f32.mrf.mxu0
      %v379 = vadd.f32 0.0, %v378
      %380 = vdwg.mxu0
      %v381 = vadd.f32 %v287, %v370
      %v382 = vadd.f32 %v288, %v373
      %v383 = vadd.f32 %v289, %v376
      %v384 = vadd.f32 %v290, %v379
      %s385 = scalar_lea.vmem %s1, 32
      %v386 = vld [vmem:[%s385] sm:$0xff]
      %v387 = vld [vmem:[%s385 + $0x8] sm:$0xff]
      %v388 = vld [vmem:[%s385 + $0x10] sm:$0xff]
      %v389 = vld [vmem:[%s385 + $0x18] sm:$0xff]
      %v391 = vsel %vm295, %v386, 0
      %v394 = vsel %vm295, %v387, 0
      %v397 = vsel %vm295, %v388, 0
      %v400 = vsel %vm295, %v389, 0
      %402 = vmatpush.msra.mxu0 0.0
      %403 = vmatpush.msra.mxu0 0.0
      %404 = vmatpush.msra.mxu0 0.0
      %405 = vmatpush.msra.mxu0 0.0
      %406 = vmatpush.msra.mxu0 0.0
      %407 = vmatpush.msra.mxu0 0.0
      %408 = vmatpush.msra.mxu0 0.0
      %409 = vmatpush.msra.mxu0 0.0
      %410 = vmatpush.msra.mxu0 %v286
      %411 = vmatpush.msra.mxu0 %v285
      %412 = vmatpush.msra.mxu0 %v284
      %413 = vmatpush.msra.mxu0 %v283
      %414 = vmatpush.msra.mxu0 %v282
      %415 = vmatpush.msra.mxu0 %v281
      %416 = vmatpush.msra.mxu0 %v280
      %417 = vmatpush.msra.mxu0 %v279
      %418 = vmatmul.f32.gmra.mxu0 %v391
      %v419 = vpop.f32.mrf.mxu0
      %v420 = vadd.f32 0.0, %v419
      %421 = vmatmul.f32.gmra.mxu0 %v394
      %v422 = vpop.f32.mrf.mxu0
      %v423 = vadd.f32 0.0, %v422
      %424 = vmatmul.f32.gmra.mxu0 %v397
      %v425 = vpop.f32.mrf.mxu0
      %v426 = vadd.f32 0.0, %v425
      %427 = vmatmul.f32.gmra.mxu0 %v400
      %v428 = vpop.f32.mrf.mxu0
      %v429 = vadd.f32 0.0, %v428
      %430 = vdwg.mxu0
      %s431 = scalar_lea.vmem %s3, 16
      %v432 = vld [vmem:[%s431] sm:$0xff]
      %v433 = vld [vmem:[%s431 + $0x8] sm:$0xff]
      %v435 = vsel %vm339, %v420, 0
      %v438 = vsel %vm339, %v423, 0
      %v441 = vsel %vm339, %v426, 0
      %v444 = vsel %vm339, %v429, 0
      %446 = vmatpush.msra.mxu0 0.0
      %447 = vmatpush.msra.mxu0 0.0
      %448 = vmatpush.msra.mxu0 0.0
      %449 = vmatpush.msra.mxu0 0.0
      %450 = vmatpush.msra.mxu0 0.0
      %451 = vmatpush.msra.mxu0 0.0
      %452 = vmatpush.msra.mxu0 0.0
      %453 = vmatpush.msra.mxu0 0.0
      %454 = vmatpush.msra.mxu0 0.0
      %455 = vmatpush.msra.mxu0 0.0
      %456 = vmatpush.msra.mxu0 0.0
      %457 = vmatpush.msra.mxu0 0.0
      %458 = vmatpush.msra.mxu0 0.0
      %459 = vmatpush.msra.mxu0 0.0
      %460 = vmatpush.msra.mxu0 %v433
      %461 = vmatpush.msra.mxu0 %v432
      %462 = vmatmul.f32.gmra.mxu0 %v435
      %v463 = vpop.f32.mrf.mxu0
      %v464 = vadd.f32 0.0, %v463
      %465 = vmatmul.f32.gmra.mxu0 %v438
      %v466 = vpop.f32.mrf.mxu0
      %v467 = vadd.f32 0.0, %v466
      %468 = vmatmul.f32.gmra.mxu0 %v441
      %v469 = vpop.f32.mrf.mxu0
      %v470 = vadd.f32 0.0, %v469
      %471 = vmatmul.f32.gmra.mxu0 %v444
      %v472 = vpop.f32.mrf.mxu0
      %v473 = vadd.f32 0.0, %v472
      %474 = vdwg.mxu0
      %v475 = vadd.f32 %v381, %v464
      %v476 = vadd.f32 %v382, %v467
      %v477 = vadd.f32 %v383, %v470
      %v478 = vadd.f32 %v384, %v473
      %s479 = scalar_lea.vmem %s1, 64
      %v480 = vld [vmem:[%s479] sm:$0xff]
      %v481 = vld [vmem:[%s479 + $0x8] sm:$0xff]
      %v482 = vld [vmem:[%s479 + $0x10] sm:$0xff]
      %v483 = vld [vmem:[%s479 + $0x18] sm:$0xff]
      %v485 = vsel %vm295, %v480, 0
      %v488 = vsel %vm295, %v481, 0
      %v491 = vsel %vm295, %v482, 0
      %v494 = vsel %vm295, %v483, 0
      %496 = vmatpush.msra.mxu0 0.0
      %497 = vmatpush.msra.mxu0 0.0
      %498 = vmatpush.msra.mxu0 0.0
      %499 = vmatpush.msra.mxu0 0.0
      %500 = vmatpush.msra.mxu0 0.0
      %501 = vmatpush.msra.mxu0 0.0
      %502 = vmatpush.msra.mxu0 0.0
      %503 = vmatpush.msra.mxu0 0.0
      %504 = vmatpush.msra.mxu0 %v286
      %505 = vmatpush.msra.mxu0 %v285
      %506 = vmatpush.msra.mxu0 %v284
      %507 = vmatpush.msra.mxu0 %v283
      %508 = vmatpush.msra.mxu0 %v282
      %509 = vmatpush.msra.mxu0 %v281
      %510 = vmatpush.msra.mxu0 %v280
      %511 = vmatpush.msra.mxu0 %v279
      %512 = vmatmul.f32.gmra.mxu0 %v485
      %v513 = vpop.f32.mrf.mxu0
      %v514 = vadd.f32 0.0, %v513
      %515 = vmatmul.f32.gmra.mxu0 %v488
      %v516 = vpop.f32.mrf.mxu0
      %v517 = vadd.f32 0.0, %v516
      %518 = vmatmul.f32.gmra.mxu0 %v491
      %v519 = vpop.f32.mrf.mxu0
      %v520 = vadd.f32 0.0, %v519
      %521 = vmatmul.f32.gmra.mxu0 %v494
      %v522 = vpop.f32.mrf.mxu0
      %v523 = vadd.f32 0.0, %v522
      %524 = vdwg.mxu0
      %s525 = scalar_lea.vmem %s3, 32
      %v526 = vld [vmem:[%s525] sm:$0xff]
      %v527 = vld [vmem:[%s525 + $0x8] sm:$0xff]
      %v529 = vsel %vm339, %v514, 0
      %v532 = vsel %vm339, %v517, 0
      %v535 = vsel %vm339, %v520, 0
      %v538 = vsel %vm339, %v523, 0
      %540 = vmatpush.msra.mxu0 0.0
      %541 = vmatpush.msra.mxu0 0.0
      %542 = vmatpush.msra.mxu0 0.0
      %543 = vmatpush.msra.mxu0 0.0
      %544 = vmatpush.msra.mxu0 0.0
      %545 = vmatpush.msra.mxu0 0.0
      %546 = vmatpush.msra.mxu0 0.0
      %547 = vmatpush.msra.mxu0 0.0
      %548 = vmatpush.msra.mxu0 0.0
      %549 = vmatpush.msra.mxu0 0.0
      %550 = vmatpush.msra.mxu0 0.0
      %551 = vmatpush.msra.mxu0 0.0
      %552 = vmatpush.msra.mxu0 0.0
      %553 = vmatpush.msra.mxu0 0.0
      %554 = vmatpush.msra.mxu0 %v527
      %555 = vmatpush.msra.mxu0 %v526
      %556 = vmatmul.f32.gmra.mxu0 %v529
      %v557 = vpop.f32.mrf.mxu0
      %v558 = vadd.f32 0.0, %v557
      %559 = vmatmul.f32.gmra.mxu0 %v532
      %v560 = vpop.f32.mrf.mxu0
      %v561 = vadd.f32 0.0, %v560
      %562 = vmatmul.f32.gmra.mxu0 %v535
      %v563 = vpop.f32.mrf.mxu0
      %v564 = vadd.f32 0.0, %v563
      %565 = vmatmul.f32.gmra.mxu0 %v538
      %v566 = vpop.f32.mrf.mxu0
      %v567 = vadd.f32 0.0, %v566
      %568 = vdwg.mxu0
      %v569 = vadd.f32 %v475, %v558
      %v570 = vadd.f32 %v476, %v561
      %v571 = vadd.f32 %v477, %v564
      %v572 = vadd.f32 %v478, %v567
      %s573 = scalar_lea.vmem %s1, 96
      %v574 = vld [vmem:[%s573] sm:$0xff]
      %v575 = vld [vmem:[%s573 + $0x8] sm:$0xff]
      %v576 = vld [vmem:[%s573 + $0x10] sm:$0xff]
      %v577 = vld [vmem:[%s573 + $0x18] sm:$0xff]
      %v579 = vsel %vm295, %v574, 0
      %v582 = vsel %vm295, %v575, 0
      %v585 = vsel %vm295, %v576, 0
      %v588 = vsel %vm295, %v577, 0
      %590 = vmatpush.msra.mxu0 0.0
      %591 = vmatpush.msra.mxu0 0.0
      %592 = vmatpush.msra.mxu0 0.0
      %593 = vmatpush.msra.mxu0 0.0
      %594 = vmatpush.msra.mxu0 0.0
      %595 = vmatpush.msra.mxu0 0.0
      %596 = vmatpush.msra.mxu0 0.0
      %597 = vmatpush.msra.mxu0 0.0
      %598 = vmatpush.msra.mxu0 %v286
      %599 = vmatpush.msra.mxu0 %v285
      %600 = vmatpush.msra.mxu0 %v284
      %601 = vmatpush.msra.mxu0 %v283
      %602 = vmatpush.msra.mxu0 %v282
      %603 = vmatpush.msra.mxu0 %v281
      %604 = vmatpush.msra.mxu0 %v280
      %605 = vmatpush.msra.mxu0 %v279
      %606 = vmatmul.f32.gmra.mxu0 %v579
      %v607 = vpop.f32.mrf.mxu0
      %v608 = vadd.f32 0.0, %v607
      %609 = vmatmul.f32.gmra.mxu0 %v582
      %v610 = vpop.f32.mrf.mxu0
      %v611 = vadd.f32 0.0, %v610
      %612 = vmatmul.f32.gmra.mxu0 %v585
      %v613 = vpop.f32.mrf.mxu0
      %v614 = vadd.f32 0.0, %v613
      %615 = vmatmul.f32.gmra.mxu0 %v588
      %v616 = vpop.f32.mrf.mxu0
      %v617 = vadd.f32 0.0, %v616
      %618 = vdwg.mxu0
      %s619 = scalar_lea.vmem %s3, 48
      %v620 = vld [vmem:[%s619] sm:$0xff]
      %v621 = vld [vmem:[%s619 + $0x8] sm:$0xff]
      %v623 = vsel %vm339, %v608, 0
      %v626 = vsel %vm339, %v611, 0
      %v629 = vsel %vm339, %v614, 0
      %v632 = vsel %vm339, %v617, 0
      %634 = vmatpush.msra.mxu0 0.0
      %635 = vmatpush.msra.mxu0 0.0
      %636 = vmatpush.msra.mxu0 0.0
      %637 = vmatpush.msra.mxu0 0.0
      %638 = vmatpush.msra.mxu0 0.0
      %639 = vmatpush.msra.mxu0 0.0
      %640 = vmatpush.msra.mxu0 0.0
      %641 = vmatpush.msra.mxu0 0.0
      %642 = vmatpush.msra.mxu0 0.0
      %643 = vmatpush.msra.mxu0 0.0
      %644 = vmatpush.msra.mxu0 0.0
      %645 = vmatpush.msra.mxu0 0.0
      %646 = vmatpush.msra.mxu0 0.0
      %647 = vmatpush.msra.mxu0 0.0
      %648 = vmatpush.msra.mxu0 %v621
      %649 = vmatpush.msra.mxu0 %v620
      %650 = vmatmul.f32.gmra.mxu0 %v623
      %v651 = vpop.f32.mrf.mxu0
      %v652 = vadd.f32 0.0, %v651
      %653 = vmatmul.f32.gmra.mxu0 %v626
      %v654 = vpop.f32.mrf.mxu0
      %v655 = vadd.f32 0.0, %v654
      %656 = vmatmul.f32.gmra.mxu0 %v629
      %v657 = vpop.f32.mrf.mxu0
      %v658 = vadd.f32 0.0, %v657
      %659 = vmatmul.f32.gmra.mxu0 %v632
      %v660 = vpop.f32.mrf.mxu0
      %v661 = vadd.f32 0.0, %v660
      %662 = vdwg.mxu0
      %v663 = vadd.f32 %v569, %v652
      %v664 = vadd.f32 %v570, %v655
      %v665 = vadd.f32 %v571, %v658
      %v666 = vadd.f32 %v572, %v661
      %s667 = scalar_lea.vmem %s1, 128
      %v668 = vld [vmem:[%s667] sm:$0xff]
      %v669 = vld [vmem:[%s667 + $0x8] sm:$0xff]
      %v670 = vld [vmem:[%s667 + $0x10] sm:$0xff]
      %v671 = vld [vmem:[%s667 + $0x18] sm:$0xff]
      %v673 = vsel %vm295, %v668, 0
      %v676 = vsel %vm295, %v669, 0
      %v679 = vsel %vm295, %v670, 0
      %v682 = vsel %vm295, %v671, 0
      %684 = vmatpush.msra.mxu0 0.0
      %685 = vmatpush.msra.mxu0 0.0
      %686 = vmatpush.msra.mxu0 0.0
      %687 = vmatpush.msra.mxu0 0.0
      %688 = vmatpush.msra.mxu0 0.0
      %689 = vmatpush.msra.mxu0 0.0
      %690 = vmatpush.msra.mxu0 0.0
      %691 = vmatpush.msra.mxu0 0.0
      %692 = vmatpush.msra.mxu0 %v286
      %693 = vmatpush.msra.mxu0 %v285
      %694 = vmatpush.msra.mxu0 %v284
      %695 = vmatpush.msra.mxu0 %v283
      %696 = vmatpush.msra.mxu0 %v282
      %697 = vmatpush.msra.mxu0 %v281
      %698 = vmatpush.msra.mxu0 %v280
      %699 = vmatpush.msra.mxu0 %v279
      %700 = vmatmul.f32.gmra.mxu0 %v673
      %v701 = vpop.f32.mrf.mxu0
      %v702 = vadd.f32 0.0, %v701
      %703 = vmatmul.f32.gmra.mxu0 %v676
      %v704 = vpop.f32.mrf.mxu0
      %v705 = vadd.f32 0.0, %v704
      %706 = vmatmul.f32.gmra.mxu0 %v679
      %v707 = vpop.f32.mrf.mxu0
      %v708 = vadd.f32 0.0, %v707
      %709 = vmatmul.f32.gmra.mxu0 %v682
      %v710 = vpop.f32.mrf.mxu0
      %v711 = vadd.f32 0.0, %v710
      %712 = vdwg.mxu0
      %s713 = scalar_lea.vmem %s3, 64
      %v714 = vld [vmem:[%s713] sm:$0xff]
      %v715 = vld [vmem:[%s713 + $0x8] sm:$0xff]
      %v717 = vsel %vm339, %v702, 0
      %v720 = vsel %vm339, %v705, 0
      %v723 = vsel %vm339, %v708, 0
      %v726 = vsel %vm339, %v711, 0
      %728 = vmatpush.msra.mxu0 0.0
      %729 = vmatpush.msra.mxu0 0.0
      %730 = vmatpush.msra.mxu0 0.0
      %731 = vmatpush.msra.mxu0 0.0
      %732 = vmatpush.msra.mxu0 0.0
      %733 = vmatpush.msra.mxu0 0.0
      %734 = vmatpush.msra.mxu0 0.0
      %735 = vmatpush.msra.mxu0 0.0
      %736 = vmatpush.msra.mxu0 0.0
      %737 = vmatpush.msra.mxu0 0.0
      %738 = vmatpush.msra.mxu0 0.0
      %739 = vmatpush.msra.mxu0 0.0
      %740 = vmatpush.msra.mxu0 0.0
      %741 = vmatpush.msra.mxu0 0.0
      %742 = vmatpush.msra.mxu0 %v715
      %743 = vmatpush.msra.mxu0 %v714
      %744 = vmatmul.f32.gmra.mxu0 %v717
      %v745 = vpop.f32.mrf.mxu0
      %v746 = vadd.f32 0.0, %v745
      %747 = vmatmul.f32.gmra.mxu0 %v720
      %v748 = vpop.f32.mrf.mxu0
      %v749 = vadd.f32 0.0, %v748
      %750 = vmatmul.f32.gmra.mxu0 %v723
      %v751 = vpop.f32.mrf.mxu0
      %v752 = vadd.f32 0.0, %v751
      %753 = vmatmul.f32.gmra.mxu0 %v726
      %v754 = vpop.f32.mrf.mxu0
      %v755 = vadd.f32 0.0, %v754
      %756 = vdwg.mxu0
      %v757 = vadd.f32 %v663, %v746
      %v758 = vadd.f32 %v664, %v749
      %v759 = vadd.f32 %v665, %v752
      %v760 = vadd.f32 %v666, %v755
      %s761 = scalar_lea.vmem %s1, 160
      %v762 = vld [vmem:[%s761] sm:$0xff]
      %v763 = vld [vmem:[%s761 + $0x8] sm:$0xff]
      %v764 = vld [vmem:[%s761 + $0x10] sm:$0xff]
      %v765 = vld [vmem:[%s761 + $0x18] sm:$0xff]
      %v767 = vsel %vm295, %v762, 0
      %v770 = vsel %vm295, %v763, 0
      %v773 = vsel %vm295, %v764, 0
      %v776 = vsel %vm295, %v765, 0
      %778 = vmatpush.msra.mxu0 0.0
      %779 = vmatpush.msra.mxu0 0.0
      %780 = vmatpush.msra.mxu0 0.0
      %781 = vmatpush.msra.mxu0 0.0
      %782 = vmatpush.msra.mxu0 0.0
      %783 = vmatpush.msra.mxu0 0.0
      %784 = vmatpush.msra.mxu0 0.0
      %785 = vmatpush.msra.mxu0 0.0
      %786 = vmatpush.msra.mxu0 %v286
      %787 = vmatpush.msra.mxu0 %v285
      %788 = vmatpush.msra.mxu0 %v284
      %789 = vmatpush.msra.mxu0 %v283
      %790 = vmatpush.msra.mxu0 %v282
      %791 = vmatpush.msra.mxu0 %v281
      %792 = vmatpush.msra.mxu0 %v280
      %793 = vmatpush.msra.mxu0 %v279
      %794 = vmatmul.f32.gmra.mxu0 %v767
      %v795 = vpop.f32.mrf.mxu0
      %v796 = vadd.f32 0.0, %v795
      %797 = vmatmul.f32.gmra.mxu0 %v770
      %v798 = vpop.f32.mrf.mxu0
      %v799 = vadd.f32 0.0, %v798
      %800 = vmatmul.f32.gmra.mxu0 %v773
      %v801 = vpop.f32.mrf.mxu0
      %v802 = vadd.f32 0.0, %v801
      %803 = vmatmul.f32.gmra.mxu0 %v776
      %v804 = vpop.f32.mrf.mxu0
      %v805 = vadd.f32 0.0, %v804
      %806 = vdwg.mxu0
      %s807 = scalar_lea.vmem %s3, 80
      %v808 = vld [vmem:[%s807] sm:$0xff]
      %v809 = vld [vmem:[%s807 + $0x8] sm:$0xff]
      %v811 = vsel %vm339, %v796, 0
      %v814 = vsel %vm339, %v799, 0
      %v817 = vsel %vm339, %v802, 0
      %v820 = vsel %vm339, %v805, 0
      %822 = vmatpush.msra.mxu0 0.0
      %823 = vmatpush.msra.mxu0 0.0
      %824 = vmatpush.msra.mxu0 0.0
      %825 = vmatpush.msra.mxu0 0.0
      %826 = vmatpush.msra.mxu0 0.0
      %827 = vmatpush.msra.mxu0 0.0
      %828 = vmatpush.msra.mxu0 0.0
      %829 = vmatpush.msra.mxu0 0.0
      %830 = vmatpush.msra.mxu0 0.0
      %831 = vmatpush.msra.mxu0 0.0
      %832 = vmatpush.msra.mxu0 0.0
      %833 = vmatpush.msra.mxu0 0.0
      %834 = vmatpush.msra.mxu0 0.0
      %835 = vmatpush.msra.mxu0 0.0
      %836 = vmatpush.msra.mxu0 %v809
      %837 = vmatpush.msra.mxu0 %v808
      %838 = vmatmul.f32.gmra.mxu0 %v811
      %v839 = vpop.f32.mrf.mxu0
      %v840 = vadd.f32 0.0, %v839
      %841 = vmatmul.f32.gmra.mxu0 %v814
      %v842 = vpop.f32.mrf.mxu0
      %v843 = vadd.f32 0.0, %v842
      %844 = vmatmul.f32.gmra.mxu0 %v817
      %v845 = vpop.f32.mrf.mxu0
      %v846 = vadd.f32 0.0, %v845
      %847 = vmatmul.f32.gmra.mxu0 %v820
      %v848 = vpop.f32.mrf.mxu0
      %v849 = vadd.f32 0.0, %v848
      %850 = vdwg.mxu0
      %v851 = vadd.f32 %v757, %v840
      %v852 = vadd.f32 %v758, %v843
      %v853 = vadd.f32 %v759, %v846
      %v854 = vadd.f32 %v760, %v849
      %s855 = scalar_lea.vmem %s1, 192
      %v856 = vld [vmem:[%s855] sm:$0xff]
      %v857 = vld [vmem:[%s855 + $0x8] sm:$0xff]
      %v858 = vld [vmem:[%s855 + $0x10] sm:$0xff]
      %v859 = vld [vmem:[%s855 + $0x18] sm:$0xff]
      %v861 = vsel %vm295, %v856, 0
      %v864 = vsel %vm295, %v857, 0
      %v867 = vsel %vm295, %v858, 0
      %v870 = vsel %vm295, %v859, 0
      %872 = vmatpush.msra.mxu0 0.0
      %873 = vmatpush.msra.mxu0 0.0
      %874 = vmatpush.msra.mxu0 0.0
      %875 = vmatpush.msra.mxu0 0.0
      %876 = vmatpush.msra.mxu0 0.0
      %877 = vmatpush.msra.mxu0 0.0
      %878 = vmatpush.msra.mxu0 0.0
      %879 = vmatpush.msra.mxu0 0.0
      %880 = vmatpush.msra.mxu0 %v286
      %881 = vmatpush.msra.mxu0 %v285
      %882 = vmatpush.msra.mxu0 %v284
      %883 = vmatpush.msra.mxu0 %v283
      %884 = vmatpush.msra.mxu0 %v282
      %885 = vmatpush.msra.mxu0 %v281
      %886 = vmatpush.msra.mxu0 %v280
      %887 = vmatpush.msra.mxu0 %v279
      %888 = vmatmul.f32.gmra.mxu0 %v861
      %v889 = vpop.f32.mrf.mxu0
      %v890 = vadd.f32 0.0, %v889
      %891 = vmatmul.f32.gmra.mxu0 %v864
      %v892 = vpop.f32.mrf.mxu0
      %v893 = vadd.f32 0.0, %v892
      %894 = vmatmul.f32.gmra.mxu0 %v867
      %v895 = vpop.f32.mrf.mxu0
      %v896 = vadd.f32 0.0, %v895
      %897 = vmatmul.f32.gmra.mxu0 %v870
      %v898 = vpop.f32.mrf.mxu0
      %v899 = vadd.f32 0.0, %v898
      %900 = vdwg.mxu0
      %s901 = scalar_lea.vmem %s3, 96
      %v902 = vld [vmem:[%s901] sm:$0xff]
      %v903 = vld [vmem:[%s901 + $0x8] sm:$0xff]
      %v905 = vsel %vm339, %v890, 0
      %v908 = vsel %vm339, %v893, 0
      %v911 = vsel %vm339, %v896, 0
      %v914 = vsel %vm339, %v899, 0
      %916 = vmatpush.msra.mxu0 0.0
      %917 = vmatpush.msra.mxu0 0.0
      %918 = vmatpush.msra.mxu0 0.0
      %919 = vmatpush.msra.mxu0 0.0
      %920 = vmatpush.msra.mxu0 0.0
      %921 = vmatpush.msra.mxu0 0.0
      %922 = vmatpush.msra.mxu0 0.0
      %923 = vmatpush.msra.mxu0 0.0
      %924 = vmatpush.msra.mxu0 0.0
      %925 = vmatpush.msra.mxu0 0.0
      %926 = vmatpush.msra.mxu0 0.0
      %927 = vmatpush.msra.mxu0 0.0
      %928 = vmatpush.msra.mxu0 0.0
      %929 = vmatpush.msra.mxu0 0.0
      %930 = vmatpush.msra.mxu0 %v903
      %931 = vmatpush.msra.mxu0 %v902
      %932 = vmatmul.f32.gmra.mxu0 %v905
      %v933 = vpop.f32.mrf.mxu0
      %v934 = vadd.f32 0.0, %v933
      %935 = vmatmul.f32.gmra.mxu0 %v908
      %v936 = vpop.f32.mrf.mxu0
      %v937 = vadd.f32 0.0, %v936
      %938 = vmatmul.f32.gmra.mxu0 %v911
      %v939 = vpop.f32.mrf.mxu0
      %v940 = vadd.f32 0.0, %v939
      %941 = vmatmul.f32.gmra.mxu0 %v914
      %v942 = vpop.f32.mrf.mxu0
      %v943 = vadd.f32 0.0, %v942
      %944 = vdwg.mxu0
      %v945 = vadd.f32 %v851, %v934
      %v946 = vadd.f32 %v852, %v937
      %v947 = vadd.f32 %v853, %v940
      %v948 = vadd.f32 %v854, %v943
      %s949 = scalar_lea.vmem %s1, 224
      %v950 = vld [vmem:[%s949] sm:$0xff]
      %v951 = vld [vmem:[%s949 + $0x8] sm:$0xff]
      %v952 = vld [vmem:[%s949 + $0x10] sm:$0xff]
      %v953 = vld [vmem:[%s949 + $0x18] sm:$0xff]
      %v955 = vsel %vm295, %v950, 0
      %v958 = vsel %vm295, %v951, 0
      %v961 = vsel %vm295, %v952, 0
      %v964 = vsel %vm295, %v953, 0
      %966 = vmatpush.msra.mxu0 0.0
      %967 = vmatpush.msra.mxu0 0.0
      %968 = vmatpush.msra.mxu0 0.0
      %969 = vmatpush.msra.mxu0 0.0
      %970 = vmatpush.msra.mxu0 0.0
      %971 = vmatpush.msra.mxu0 0.0
      %972 = vmatpush.msra.mxu0 0.0
      %973 = vmatpush.msra.mxu0 0.0
      %974 = vmatpush.msra.mxu0 %v286
      %975 = vmatpush.msra.mxu0 %v285
      %976 = vmatpush.msra.mxu0 %v284
      %977 = vmatpush.msra.mxu0 %v283
      %978 = vmatpush.msra.mxu0 %v282
      %979 = vmatpush.msra.mxu0 %v281
      %980 = vmatpush.msra.mxu0 %v280
      %981 = vmatpush.msra.mxu0 %v279
      %982 = vmatmul.f32.gmra.mxu0 %v955
      %v983 = vpop.f32.mrf.mxu0
      %v984 = vadd.f32 0.0, %v983
      %985 = vmatmul.f32.gmra.mxu0 %v958
      %v986 = vpop.f32.mrf.mxu0
      %v987 = vadd.f32 0.0, %v986
      %988 = vmatmul.f32.gmra.mxu0 %v961
      %v989 = vpop.f32.mrf.mxu0
      %v990 = vadd.f32 0.0, %v989
      %991 = vmatmul.f32.gmra.mxu0 %v964
      %v992 = vpop.f32.mrf.mxu0
      %v993 = vadd.f32 0.0, %v992
      %994 = vdwg.mxu0
      %s995 = scalar_lea.vmem %s3, 112
      %v996 = vld [vmem:[%s995] sm:$0xff]
      %v997 = vld [vmem:[%s995 + $0x8] sm:$0xff]
      %v999 = vsel %vm339, %v984, 0
      %v1002 = vsel %vm339, %v987, 0
      %v1005 = vsel %vm339, %v990, 0
      %v1008 = vsel %vm339, %v993, 0
      %1010 = vmatpush.msra.mxu0 0.0
      %1011 = vmatpush.msra.mxu0 0.0
      %1012 = vmatpush.msra.mxu0 0.0
      %1013 = vmatpush.msra.mxu0 0.0
      %1014 = vmatpush.msra.mxu0 0.0
      %1015 = vmatpush.msra.mxu0 0.0
      %1016 = vmatpush.msra.mxu0 0.0
      %1017 = vmatpush.msra.mxu0 0.0
      %1018 = vmatpush.msra.mxu0 0.0
      %1019 = vmatpush.msra.mxu0 0.0
      %1020 = vmatpush.msra.mxu0 0.0
      %1021 = vmatpush.msra.mxu0 0.0
      %1022 = vmatpush.msra.mxu0 0.0
      %1023 = vmatpush.msra.mxu0 0.0
      %1024 = vmatpush.msra.mxu0 %v997
      %1025 = vmatpush.msra.mxu0 %v996
      %1026 = vmatmul.f32.gmra.mxu0 %v999
      %v1027 = vpop.f32.mrf.mxu0
      %v1028 = vadd.f32 0.0, %v1027
      %1029 = vmatmul.f32.gmra.mxu0 %v1002
      %v1030 = vpop.f32.mrf.mxu0
      %v1031 = vadd.f32 0.0, %v1030
      %1032 = vmatmul.f32.gmra.mxu0 %v1005
      %v1033 = vpop.f32.mrf.mxu0
      %v1034 = vadd.f32 0.0, %v1033
      %1035 = vmatmul.f32.gmra.mxu0 %v1008
      %v1036 = vpop.f32.mrf.mxu0
      %v1037 = vadd.f32 0.0, %v1036
      %1038 = vdwg.mxu0
      %v1039 = vadd.f32 %v945, %v1028
      %v1040 = vadd.f32 %v946, %v1031
      %v1041 = vadd.f32 %v947, %v1034
      %v1042 = vadd.f32 %v948, %v1037
      %s1043 = scalar_lea.vmem %s1, 256
      %v1044 = vld [vmem:[%s1043] sm:$0xff]
      %v1045 = vld [vmem:[%s1043 + $0x8] sm:$0xff]
      %v1046 = vld [vmem:[%s1043 + $0x10] sm:$0xff]
      %v1047 = vld [vmem:[%s1043 + $0x18] sm:$0xff]
      %v1049 = vsel %vm295, %v1044, 0
      %v1052 = vsel %vm295, %v1045, 0
      %v1055 = vsel %vm295, %v1046, 0
      %v1058 = vsel %vm295, %v1047, 0
      %1060 = vmatpush.msra.mxu0 0.0
      %1061 = vmatpush.msra.mxu0 0.0
      %1062 = vmatpush.msra.mxu0 0.0
      %1063 = vmatpush.msra.mxu0 0.0
      %1064 = vmatpush.msra.mxu0 0.0
      %1065 = vmatpush.msra.mxu0 0.0
      %1066 = vmatpush.msra.mxu0 0.0
      %1067 = vmatpush.msra.mxu0 0.0
      %1068 = vmatpush.msra.mxu0 %v286
      %1069 = vmatpush.msra.mxu0 %v285
      %1070 = vmatpush.msra.mxu0 %v284
      %1071 = vmatpush.msra.mxu0 %v283
      %1072 = vmatpush.msra.mxu0 %v282
      %1073 = vmatpush.msra.mxu0 %v281
      %1074 = vmatpush.msra.mxu0 %v280
      %1075 = vmatpush.msra.mxu0 %v279
      %1076 = vmatmul.f32.gmra.mxu0 %v1049
      %v1077 = vpop.f32.mrf.mxu0
      %v1078 = vadd.f32 0.0, %v1077
      %1079 = vmatmul.f32.gmra.mxu0 %v1052
      %v1080 = vpop.f32.mrf.mxu0
      %v1081 = vadd.f32 0.0, %v1080
      %1082 = vmatmul.f32.gmra.mxu0 %v1055
      %v1083 = vpop.f32.mrf.mxu0
      %v1084 = vadd.f32 0.0, %v1083
      %1085 = vmatmul.f32.gmra.mxu0 %v1058
      %v1086 = vpop.f32.mrf.mxu0
      %v1087 = vadd.f32 0.0, %v1086
      %1088 = vdwg.mxu0
      %s1089 = scalar_lea.vmem %s3, 128
      %v1090 = vld [vmem:[%s1089] sm:$0xff]
      %v1091 = vld [vmem:[%s1089 + $0x8] sm:$0xff]
      %v1093 = vsel %vm339, %v1078, 0
      %v1096 = vsel %vm339, %v1081, 0
      %v1099 = vsel %vm339, %v1084, 0
      %v1102 = vsel %vm339, %v1087, 0
      %1104 = vmatpush.msra.mxu0 0.0
      %1105 = vmatpush.msra.mxu0 0.0
      %1106 = vmatpush.msra.mxu0 0.0
      %1107 = vmatpush.msra.mxu0 0.0
      %1108 = vmatpush.msra.mxu0 0.0
      %1109 = vmatpush.msra.mxu0 0.0
      %1110 = vmatpush.msra.mxu0 0.0
      %1111 = vmatpush.msra.mxu0 0.0
      %1112 = vmatpush.msra.mxu0 0.0
      %1113 = vmatpush.msra.mxu0 0.0
      %1114 = vmatpush.msra.mxu0 0.0
      %1115 = vmatpush.msra.mxu0 0.0
      %1116 = vmatpush.msra.mxu0 0.0
      %1117 = vmatpush.msra.mxu0 0.0
      %1118 = vmatpush.msra.mxu0 %v1091
      %1119 = vmatpush.msra.mxu0 %v1090
      %1120 = vmatmul.f32.gmra.mxu0 %v1093
      %v1121 = vpop.f32.mrf.mxu0
      %v1122 = vadd.f32 0.0, %v1121
      %1123 = vmatmul.f32.gmra.mxu0 %v1096
      %v1124 = vpop.f32.mrf.mxu0
      %v1125 = vadd.f32 0.0, %v1124
      %1126 = vmatmul.f32.gmra.mxu0 %v1099
      %v1127 = vpop.f32.mrf.mxu0
      %v1128 = vadd.f32 0.0, %v1127
      %1129 = vmatmul.f32.gmra.mxu0 %v1102
      %v1130 = vpop.f32.mrf.mxu0
      %v1131 = vadd.f32 0.0, %v1130
      %1132 = vdwg.mxu0
      %v1133 = vadd.f32 %v1039, %v1122
      %v1134 = vadd.f32 %v1040, %v1125
      %v1135 = vadd.f32 %v1041, %v1128
      %v1136 = vadd.f32 %v1042, %v1131
      %vm1137 = vcmp.gt.f32.partialorder %v1133, 0.0
      %vm1138 = vcmp.gt.f32.partialorder %v1134, 0.0
      %vm1139 = vcmp.gt.f32.partialorder %v1135, 0.0
      %vm1140 = vcmp.gt.f32.partialorder %v1136, 0.0
      %v1141 = vmul.f32 %v1133, 0.01
      %v1142 = vmul.f32 %v1134, 0.01
      %v1143 = vmul.f32 %v1135, 0.01
      %v1144 = vmul.f32 %v1136, 0.01
      %v1145 = vsel %vm1137, %v1133, %v1141
      %v1146 = vsel %vm1138, %v1134, %v1142
      %v1147 = vsel %vm1139, %v1135, %v1143
      %v1148 = vsel %vm1140, %v1136, %v1144
      %v1149 = vld [vmem:[%s5] sm:$0xff]
      %v1150 = vld [vmem:[%s4] sm:$0xf]
      %vm1151 = vcmask 261120
      %v1153 = vsel %vm1151, %v1150, 0
      %1155 = vmatpush.msra.mxu0 0.0
      %1156 = vmatpush.msra.mxu0 0.0
      %1157 = vmatpush.msra.mxu0 0.0
      %1158 = vmatpush.msra.mxu0 0.0
      %1159 = vmatpush.msra.mxu0 0.0
      %1160 = vmatpush.msra.mxu0 0.0
      %1161 = vmatpush.msra.mxu0 0.0
      %1162 = vmatpush.msra.mxu0 0.0
      %1163 = vmatpush.msra.mxu0 0.0
      %1164 = vmatpush.msra.mxu0 0.0
      %1165 = vmatpush.msra.mxu0 0.0
      %1166 = vmatpush.msra.mxu0 0.0
      %1167 = vmatpush.msra.mxu0 %v1148
      %1168 = vmatpush.msra.mxu0 %v1147
      %1169 = vmatpush.msra.mxu0 %v1146
      %1170 = vmatpush.msra.mxu0 %v1145
      %1171 = vmatmul.f32.gmra.mxu0 %v1153
      %v1172 = vpop.f32.mrf.mxu0
      %v1173 = vadd.f32 0.0, %v1172
      %1174 = vdwg.mxu0
      %v1175 = vld [vmem:[%s6] sm:$0xff]
      %v1176 = vld [vmem:[%s6 + $0x8] sm:$0xff]
      %v1177 = vld [vmem:[%s6 + $0x10] sm:$0xff]
      %v1178 = vld [vmem:[%s6 + $0x18] sm:$0xff]
      %v1179 = vld [vmem:[%s6 + $0x20] sm:$0xff]
      %v1180 = vld [vmem:[%s6 + $0x28] sm:$0xff]
      %v1181 = vld [vmem:[%s6 + $0x30] sm:$0xff]
      %v1182 = vld [vmem:[%s6 + $0x38] sm:$0xff]
      %v1183 = vld [vmem:[%s6 + $0x40] sm:$0xff]
      %v1184 = vld [vmem:[%s6 + $0x48] sm:$0xff]
      %v1185 = vld [vmem:[%s6 + $0x50] sm:$0xff]
      %v1186 = vld [vmem:[%s6 + $0x58] sm:$0xff]
      %v1187 = vld [vmem:[%s6 + $0x60] sm:$0xff]
      %v1188 = vld [vmem:[%s6 + $0x68] sm:$0xff]
      %v1189 = vld [vmem:[%s6 + $0x70] sm:$0xff]
      %v1190 = vld [vmem:[%s6 + $0x78] sm:$0xff]
      %v1192 = vsel %vm295, %v1173, 0
      %1194 = vmatpush.msra.mxu0 0.0
      %1195 = vmatpush.msra.mxu0 0.0
      %1196 = vmatpush.msra.mxu0 0.0
      %1197 = vmatpush.msra.mxu0 0.0
      %1198 = vmatpush.msra.mxu0 0.0
      %1199 = vmatpush.msra.mxu0 0.0
      %1200 = vmatpush.msra.mxu0 0.0
      %1201 = vmatpush.msra.mxu0 0.0
      %1202 = vmatpush.msra.mxu0 %v1189
      %1203 = vmatpush.msra.mxu0 %v1187
      %1204 = vmatpush.msra.mxu0 %v1185
      %1205 = vmatpush.msra.mxu0 %v1183
      %1206 = vmatpush.msra.mxu0 %v1181
      %1207 = vmatpush.msra.mxu0 %v1179
      %1208 = vmatpush.msra.mxu0 %v1177
      %1209 = vmatpush.msra.mxu0 %v1175
      %1210 = vmatmul.f32.gmra.mxu0 %v1192
      %v1211 = vpop.f32.mrf.mxu0
      %v1212 = vadd.f32 0.0, %v1211
      %1213 = vdwg.mxu0
      %1214 = vmatpush.msra.mxu0 0.0
      %1215 = vmatpush.msra.mxu0 0.0
      %1216 = vmatpush.msra.mxu0 0.0
      %1217 = vmatpush.msra.mxu0 0.0
      %1218 = vmatpush.msra.mxu0 0.0
      %1219 = vmatpush.msra.mxu0 0.0
      %1220 = vmatpush.msra.mxu0 0.0
      %1221 = vmatpush.msra.mxu0 0.0
      %1222 = vmatpush.msra.mxu0 %v1190
      %1223 = vmatpush.msra.mxu0 %v1188
      %1224 = vmatpush.msra.mxu0 %v1186
      %1225 = vmatpush.msra.mxu0 %v1184
      %1226 = vmatpush.msra.mxu0 %v1182
      %1227 = vmatpush.msra.mxu0 %v1180
      %1228 = vmatpush.msra.mxu0 %v1178
      %1229 = vmatpush.msra.mxu0 %v1176
      %1230 = vmatmul.f32.gmra.mxu0 %v1192
      %v1231 = vpop.f32.mrf.mxu0
      %v1232 = vadd.f32 0.0, %v1231
      %1233 = vdwg.mxu0
      %v1236 = vrot.slane %v1232, 4
      %vm1237 = vcmask 1043456
      %v1238 = vsel %vm1237, %v1212, %v1236
      %v1240 = vadd.f32 %v1149, %v1238
      %s1241 = scalar_lea.vmem %s4, 4
      %v1242 = vld [vmem:[%s1241] sm:$0xf]
      %v1244 = vsel %vm1151, %v1242, 0
      %1246 = vmatpush.msra.mxu0 0.0
      %1247 = vmatpush.msra.mxu0 0.0
      %1248 = vmatpush.msra.mxu0 0.0
      %1249 = vmatpush.msra.mxu0 0.0
      %1250 = vmatpush.msra.mxu0 0.0
      %1251 = vmatpush.msra.mxu0 0.0
      %1252 = vmatpush.msra.mxu0 0.0
      %1253 = vmatpush.msra.mxu0 0.0
      %1254 = vmatpush.msra.mxu0 0.0
      %1255 = vmatpush.msra.mxu0 0.0
      %1256 = vmatpush.msra.mxu0 0.0
      %1257 = vmatpush.msra.mxu0 0.0
      %1258 = vmatpush.msra.mxu0 %v1148
      %1259 = vmatpush.msra.mxu0 %v1147
      %1260 = vmatpush.msra.mxu0 %v1146
      %1261 = vmatpush.msra.mxu0 %v1145
      %1262 = vmatmul.f32.gmra.mxu0 %v1244
      %v1263 = vpop.f32.mrf.mxu0
      %v1264 = vadd.f32 0.0, %v1263
      %1265 = vdwg.mxu0
      %s1266 = scalar_lea.vmem %s6, 128
      %v1267 = vld [vmem:[%s1266] sm:$0xff]
      %v1268 = vld [vmem:[%s1266 + $0x8] sm:$0xff]
      %v1269 = vld [vmem:[%s1266 + $0x10] sm:$0xff]
      %v1270 = vld [vmem:[%s1266 + $0x18] sm:$0xff]
      %v1271 = vld [vmem:[%s1266 + $0x20] sm:$0xff]
      %v1272 = vld [vmem:[%s1266 + $0x28] sm:$0xff]
      %v1273 = vld [vmem:[%s1266 + $0x30] sm:$0xff]
      %v1274 = vld [vmem:[%s1266 + $0x38] sm:$0xff]
      %v1275 = vld [vmem:[%s1266 + $0x40] sm:$0xff]
      %v1276 = vld [vmem:[%s1266 + $0x48] sm:$0xff]
      %v1277 = vld [vmem:[%s1266 + $0x50] sm:$0xff]
      %v1278 = vld [vmem:[%s1266 + $0x58] sm:$0xff]
      %v1279 = vld [vmem:[%s1266 + $0x60] sm:$0xff]
      %v1280 = vld [vmem:[%s1266 + $0x68] sm:$0xff]
      %v1281 = vld [vmem:[%s1266 + $0x70] sm:$0xff]
      %v1282 = vld [vmem:[%s1266 + $0x78] sm:$0xff]
      %v1284 = vsel %vm295, %v1264, 0
      %1286 = vmatpush.msra.mxu0 0.0
      %1287 = vmatpush.msra.mxu0 0.0
      %1288 = vmatpush.msra.mxu0 0.0
      %1289 = vmatpush.msra.mxu0 0.0
      %1290 = vmatpush.msra.mxu0 0.0
      %1291 = vmatpush.msra.mxu0 0.0
      %1292 = vmatpush.msra.mxu0 0.0
      %1293 = vmatpush.msra.mxu0 0.0
      %1294 = vmatpush.msra.mxu0 %v1281
      %1295 = vmatpush.msra.mxu0 %v1279
      %1296 = vmatpush.msra.mxu0 %v1277
      %1297 = vmatpush.msra.mxu0 %v1275
      %1298 = vmatpush.msra.mxu0 %v1273
      %1299 = vmatpush.msra.mxu0 %v1271
      %1300 = vmatpush.msra.mxu0 %v1269
      %1301 = vmatpush.msra.mxu0 %v1267
      %1302 = vmatmul.f32.gmra.mxu0 %v1284
      %v1303 = vpop.f32.mrf.mxu0
      %v1304 = vadd.f32 0.0, %v1303
      %1305 = vdwg.mxu0
      %1306 = vmatpush.msra.mxu0 0.0
      %1307 = vmatpush.msra.mxu0 0.0
      %1308 = vmatpush.msra.mxu0 0.0
      %1309 = vmatpush.msra.mxu0 0.0
      %1310 = vmatpush.msra.mxu0 0.0
      %1311 = vmatpush.msra.mxu0 0.0
      %1312 = vmatpush.msra.mxu0 0.0
      %1313 = vmatpush.msra.mxu0 0.0
      %1314 = vmatpush.msra.mxu0 %v1282
      %1315 = vmatpush.msra.mxu0 %v1280
      %1316 = vmatpush.msra.mxu0 %v1278
      %1317 = vmatpush.msra.mxu0 %v1276
      %1318 = vmatpush.msra.mxu0 %v1274
      %1319 = vmatpush.msra.mxu0 %v1272
      %1320 = vmatpush.msra.mxu0 %v1270
      %1321 = vmatpush.msra.mxu0 %v1268
      %1322 = vmatmul.f32.gmra.mxu0 %v1284
      %v1323 = vpop.f32.mrf.mxu0
      %v1324 = vadd.f32 0.0, %v1323
      %1325 = vdwg.mxu0
      %v1328 = vrot.slane %v1324, 4
      %v1329 = vsel %vm1237, %v1304, %v1328
      %v1331 = vadd.f32 %v1240, %v1329
      %s1332 = scalar_lea.vmem %s4, 8
      %v1333 = vld [vmem:[%s1332] sm:$0xf]
      %v1335 = vsel %vm1151, %v1333, 0
      %1337 = vmatpush.msra.mxu0 0.0
      %1338 = vmatpush.msra.mxu0 0.0
      %1339 = vmatpush.msra.mxu0 0.0
      %1340 = vmatpush.msra.mxu0 0.0
      %1341 = vmatpush.msra.mxu0 0.0
      %1342 = vmatpush.msra.mxu0 0.0
      %1343 = vmatpush.msra.mxu0 0.0
      %1344 = vmatpush.msra.mxu0 0.0
      %1345 = vmatpush.msra.mxu0 0.0
      %1346 = vmatpush.msra.mxu0 0.0
      %1347 = vmatpush.msra.mxu0 0.0
      %1348 = vmatpush.msra.mxu0 0.0
      %1349 = vmatpush.msra.mxu0 %v1148
      %1350 = vmatpush.msra.mxu0 %v1147
      %1351 = vmatpush.msra.mxu0 %v1146
      %1352 = vmatpush.msra.mxu0 %v1145
      %1353 = vmatmul.f32.gmra.mxu0 %v1335
      %v1354 = vpop.f32.mrf.mxu0
      %v1355 = vadd.f32 0.0, %v1354
      %1356 = vdwg.mxu0
      %s1357 = scalar_lea.vmem %s6, 256
      %v1358 = vld [vmem:[%s1357] sm:$0xff]
      %v1359 = vld [vmem:[%s1357 + $0x8] sm:$0xff]
      %v1360 = vld [vmem:[%s1357 + $0x10] sm:$0xff]
      %v1361 = vld [vmem:[%s1357 + $0x18] sm:$0xff]
      %v1362 = vld [vmem:[%s1357 + $0x20] sm:$0xff]
      %v1363 = vld [vmem:[%s1357 + $0x28] sm:$0xff]
      %v1364 = vld [vmem:[%s1357 + $0x30] sm:$0xff]
      %v1365 = vld [vmem:[%s1357 + $0x38] sm:$0xff]
      %v1366 = vld [vmem:[%s1357 + $0x40] sm:$0xff]
      %v1367 = vld [vmem:[%s1357 + $0x48] sm:$0xff]
      %v1368 = vld [vmem:[%s1357 + $0x50] sm:$0xff]
      %v1369 = vld [vmem:[%s1357 + $0x58] sm:$0xff]
      %v1370 = vld [vmem:[%s1357 + $0x60] sm:$0xff]
      %v1371 = vld [vmem:[%s1357 + $0x68] sm:$0xff]
      %v1372 = vld [vmem:[%s1357 + $0x70] sm:$0xff]
      %v1373 = vld [vmem:[%s1357 + $0x78] sm:$0xff]
      %v1375 = vsel %vm295, %v1355, 0
      %1377 = vmatpush.msra.mxu0 0.0
      %1378 = vmatpush.msra.mxu0 0.0
      %1379 = vmatpush.msra.mxu0 0.0
      %1380 = vmatpush.msra.mxu0 0.0
      %1381 = vmatpush.msra.mxu0 0.0
      %1382 = vmatpush.msra.mxu0 0.0
      %1383 = vmatpush.msra.mxu0 0.0
      %1384 = vmatpush.msra.mxu0 0.0
      %1385 = vmatpush.msra.mxu0 %v1372
      %1386 = vmatpush.msra.mxu0 %v1370
      %1387 = vmatpush.msra.mxu0 %v1368
      %1388 = vmatpush.msra.mxu0 %v1366
      %1389 = vmatpush.msra.mxu0 %v1364
      %1390 = vmatpush.msra.mxu0 %v1362
      %1391 = vmatpush.msra.mxu0 %v1360
      %1392 = vmatpush.msra.mxu0 %v1358
      %1393 = vmatmul.f32.gmra.mxu0 %v1375
      %v1394 = vpop.f32.mrf.mxu0
      %v1395 = vadd.f32 0.0, %v1394
      %1396 = vdwg.mxu0
      %1397 = vmatpush.msra.mxu0 0.0
      %1398 = vmatpush.msra.mxu0 0.0
      %1399 = vmatpush.msra.mxu0 0.0
      %1400 = vmatpush.msra.mxu0 0.0
      %1401 = vmatpush.msra.mxu0 0.0
      %1402 = vmatpush.msra.mxu0 0.0
      %1403 = vmatpush.msra.mxu0 0.0
      %1404 = vmatpush.msra.mxu0 0.0
      %1405 = vmatpush.msra.mxu0 %v1373
      %1406 = vmatpush.msra.mxu0 %v1371
      %1407 = vmatpush.msra.mxu0 %v1369
      %1408 = vmatpush.msra.mxu0 %v1367
      %1409 = vmatpush.msra.mxu0 %v1365
      %1410 = vmatpush.msra.mxu0 %v1363
      %1411 = vmatpush.msra.mxu0 %v1361
      %1412 = vmatpush.msra.mxu0 %v1359
      %1413 = vmatmul.f32.gmra.mxu0 %v1375
      %v1414 = vpop.f32.mrf.mxu0
      %v1415 = vadd.f32 0.0, %v1414
      %1416 = vdwg.mxu0
      %v1419 = vrot.slane %v1415, 4
      %v1420 = vsel %vm1237, %v1395, %v1419
      %v1422 = vadd.f32 %v1331, %v1420
      %s1423 = scalar_lea.vmem %s4, 12
      %v1424 = vld [vmem:[%s1423] sm:$0xf]
      %v1426 = vsel %vm1151, %v1424, 0
      %1428 = vmatpush.msra.mxu0 0.0
      %1429 = vmatpush.msra.mxu0 0.0
      %1430 = vmatpush.msra.mxu0 0.0
      %1431 = vmatpush.msra.mxu0 0.0
      %1432 = vmatpush.msra.mxu0 0.0
      %1433 = vmatpush.msra.mxu0 0.0
      %1434 = vmatpush.msra.mxu0 0.0
      %1435 = vmatpush.msra.mxu0 0.0
      %1436 = vmatpush.msra.mxu0 0.0
      %1437 = vmatpush.msra.mxu0 0.0
      %1438 = vmatpush.msra.mxu0 0.0
      %1439 = vmatpush.msra.mxu0 0.0
      %1440 = vmatpush.msra.mxu0 %v1148
      %1441 = vmatpush.msra.mxu0 %v1147
      %1442 = vmatpush.msra.mxu0 %v1146
      %1443 = vmatpush.msra.mxu0 %v1145
      %1444 = vmatmul.f32.gmra.mxu0 %v1426
      %v1445 = vpop.f32.mrf.mxu0
      %v1446 = vadd.f32 0.0, %v1445
      %1447 = vdwg.mxu0
      %s1448 = scalar_lea.vmem %s6, 384
      %v1449 = vld [vmem:[%s1448] sm:$0xff]
      %v1450 = vld [vmem:[%s1448 + $0x8] sm:$0xff]
      %v1451 = vld [vmem:[%s1448 + $0x10] sm:$0xff]
      %v1452 = vld [vmem:[%s1448 + $0x18] sm:$0xff]
      %v1453 = vld [vmem:[%s1448 + $0x20] sm:$0xff]
      %v1454 = vld [vmem:[%s1448 + $0x28] sm:$0xff]
      %v1455 = vld [vmem:[%s1448 + $0x30] sm:$0xff]
      %v1456 = vld [vmem:[%s1448 + $0x38] sm:$0xff]
      %v1457 = vld [vmem:[%s1448 + $0x40] sm:$0xff]
      %v1458 = vld [vmem:[%s1448 + $0x48] sm:$0xff]
      %v1459 = vld [vmem:[%s1448 + $0x50] sm:$0xff]
      %v1460 = vld [vmem:[%s1448 + $0x58] sm:$0xff]
      %v1461 = vld [vmem:[%s1448 + $0x60] sm:$0xff]
      %v1462 = vld [vmem:[%s1448 + $0x68] sm:$0xff]
      %v1463 = vld [vmem:[%s1448 + $0x70] sm:$0xff]
      %v1464 = vld [vmem:[%s1448 + $0x78] sm:$0xff]
      %v1466 = vsel %vm295, %v1446, 0
      %1468 = vmatpush.msra.mxu0 0.0
      %1469 = vmatpush.msra.mxu0 0.0
      %1470 = vmatpush.msra.mxu0 0.0
      %1471 = vmatpush.msra.mxu0 0.0
      %1472 = vmatpush.msra.mxu0 0.0
      %1473 = vmatpush.msra.mxu0 0.0
      %1474 = vmatpush.msra.mxu0 0.0
      %1475 = vmatpush.msra.mxu0 0.0
      %1476 = vmatpush.msra.mxu0 %v1463
      %1477 = vmatpush.msra.mxu0 %v1461
      %1478 = vmatpush.msra.mxu0 %v1459
      %1479 = vmatpush.msra.mxu0 %v1457
      %1480 = vmatpush.msra.mxu0 %v1455
      %1481 = vmatpush.msra.mxu0 %v1453
      %1482 = vmatpush.msra.mxu0 %v1451
      %1483 = vmatpush.msra.mxu0 %v1449
      %1484 = vmatmul.f32.gmra.mxu0 %v1466
      %v1485 = vpop.f32.mrf.mxu0
      %v1486 = vadd.f32 0.0, %v1485
      %1487 = vdwg.mxu0
      %1488 = vmatpush.msra.mxu0 0.0
      %1489 = vmatpush.msra.mxu0 0.0
      %1490 = vmatpush.msra.mxu0 0.0
      %1491 = vmatpush.msra.mxu0 0.0
      %1492 = vmatpush.msra.mxu0 0.0
      %1493 = vmatpush.msra.mxu0 0.0
      %1494 = vmatpush.msra.mxu0 0.0
      %1495 = vmatpush.msra.mxu0 0.0
      %1496 = vmatpush.msra.mxu0 %v1464
      %1497 = vmatpush.msra.mxu0 %v1462
      %1498 = vmatpush.msra.mxu0 %v1460
      %1499 = vmatpush.msra.mxu0 %v1458
      %1500 = vmatpush.msra.mxu0 %v1456
      %1501 = vmatpush.msra.mxu0 %v1454
      %1502 = vmatpush.msra.mxu0 %v1452
      %1503 = vmatpush.msra.mxu0 %v1450
      %1504 = vmatmul.f32.gmra.mxu0 %v1466
      %v1505 = vpop.f32.mrf.mxu0
      %v1506 = vadd.f32 0.0, %v1505
      %1507 = vdwg.mxu0
      %v1510 = vrot.slane %v1506, 4
      %v1511 = vsel %vm1237, %v1486, %v1510
      %v1513 = vadd.f32 %v1422, %v1511
      %s1514 = scalar_lea.vmem %s4, 16
      %v1515 = vld [vmem:[%s1514] sm:$0xf]
      %v1517 = vsel %vm1151, %v1515, 0
      %1519 = vmatpush.msra.mxu0 0.0
      %1520 = vmatpush.msra.mxu0 0.0
      %1521 = vmatpush.msra.mxu0 0.0
      %1522 = vmatpush.msra.mxu0 0.0
      %1523 = vmatpush.msra.mxu0 0.0
      %1524 = vmatpush.msra.mxu0 0.0
      %1525 = vmatpush.msra.mxu0 0.0
      %1526 = vmatpush.msra.mxu0 0.0
      %1527 = vmatpush.msra.mxu0 0.0
      %1528 = vmatpush.msra.mxu0 0.0
      %1529 = vmatpush.msra.mxu0 0.0
      %1530 = vmatpush.msra.mxu0 0.0
      %1531 = vmatpush.msra.mxu0 %v1148
      %1532 = vmatpush.msra.mxu0 %v1147
      %1533 = vmatpush.msra.mxu0 %v1146
      %1534 = vmatpush.msra.mxu0 %v1145
      %1535 = vmatmul.f32.gmra.mxu0 %v1517
      %v1536 = vpop.f32.mrf.mxu0
      %v1537 = vadd.f32 0.0, %v1536
      %1538 = vdwg.mxu0
      %s1539 = scalar_lea.vmem %s6, 512
      %v1540 = vld [vmem:[%s1539] sm:$0xff]
      %v1541 = vld [vmem:[%s1539 + $0x8] sm:$0xff]
      %v1542 = vld [vmem:[%s1539 + $0x10] sm:$0xff]
      %v1543 = vld [vmem:[%s1539 + $0x18] sm:$0xff]
      %v1544 = vld [vmem:[%s1539 + $0x20] sm:$0xff]
      %v1545 = vld [vmem:[%s1539 + $0x28] sm:$0xff]
      %v1546 = vld [vmem:[%s1539 + $0x30] sm:$0xff]
      %v1547 = vld [vmem:[%s1539 + $0x38] sm:$0xff]
      %v1548 = vld [vmem:[%s1539 + $0x40] sm:$0xff]
      %v1549 = vld [vmem:[%s1539 + $0x48] sm:$0xff]
      %v1550 = vld [vmem:[%s1539 + $0x50] sm:$0xff]
      %v1551 = vld [vmem:[%s1539 + $0x58] sm:$0xff]
      %v1552 = vld [vmem:[%s1539 + $0x60] sm:$0xff]
      %v1553 = vld [vmem:[%s1539 + $0x68] sm:$0xff]
      %v1554 = vld [vmem:[%s1539 + $0x70] sm:$0xff]
      %v1555 = vld [vmem:[%s1539 + $0x78] sm:$0xff]
      %v1557 = vsel %vm295, %v1537, 0
      %1559 = vmatpush.msra.mxu0 0.0
      %1560 = vmatpush.msra.mxu0 0.0
      %1561 = vmatpush.msra.mxu0 0.0
      %1562 = vmatpush.msra.mxu0 0.0
      %1563 = vmatpush.msra.mxu0 0.0
      %1564 = vmatpush.msra.mxu0 0.0
      %1565 = vmatpush.msra.mxu0 0.0
      %1566 = vmatpush.msra.mxu0 0.0
      %1567 = vmatpush.msra.mxu0 %v1554
      %1568 = vmatpush.msra.mxu0 %v1552
      %1569 = vmatpush.msra.mxu0 %v1550
      %1570 = vmatpush.msra.mxu0 %v1548
      %1571 = vmatpush.msra.mxu0 %v1546
      %1572 = vmatpush.msra.mxu0 %v1544
      %1573 = vmatpush.msra.mxu0 %v1542
      %1574 = vmatpush.msra.mxu0 %v1540
      %1575 = vmatmul.f32.gmra.mxu0 %v1557
      %v1576 = vpop.f32.mrf.mxu0
      %v1577 = vadd.f32 0.0, %v1576
      %1578 = vdwg.mxu0
      %1579 = vmatpush.msra.mxu0 0.0
      %1580 = vmatpush.msra.mxu0 0.0
      %1581 = vmatpush.msra.mxu0 0.0
      %1582 = vmatpush.msra.mxu0 0.0
      %1583 = vmatpush.msra.mxu0 0.0
      %1584 = vmatpush.msra.mxu0 0.0
      %1585 = vmatpush.msra.mxu0 0.0
      %1586 = vmatpush.msra.mxu0 0.0
      %1587 = vmatpush.msra.mxu0 %v1555
      %1588 = vmatpush.msra.mxu0 %v1553
      %1589 = vmatpush.msra.mxu0 %v1551
      %1590 = vmatpush.msra.mxu0 %v1549
      %1591 = vmatpush.msra.mxu0 %v1547
      %1592 = vmatpush.msra.mxu0 %v1545
      %1593 = vmatpush.msra.mxu0 %v1543
      %1594 = vmatpush.msra.mxu0 %v1541
      %1595 = vmatmul.f32.gmra.mxu0 %v1557
      %v1596 = vpop.f32.mrf.mxu0
      %v1597 = vadd.f32 0.0, %v1596
      %1598 = vdwg.mxu0
      %v1601 = vrot.slane %v1597, 4
      %v1602 = vsel %vm1237, %v1577, %v1601
      %v1604 = vadd.f32 %v1513, %v1602
      %s1605 = scalar_lea.vmem %s4, 20
      %v1606 = vld [vmem:[%s1605] sm:$0xf]
      %v1608 = vsel %vm1151, %v1606, 0
      %1610 = vmatpush.msra.mxu0 0.0
      %1611 = vmatpush.msra.mxu0 0.0
      %1612 = vmatpush.msra.mxu0 0.0
      %1613 = vmatpush.msra.mxu0 0.0
      %1614 = vmatpush.msra.mxu0 0.0
      %1615 = vmatpush.msra.mxu0 0.0
      %1616 = vmatpush.msra.mxu0 0.0
      %1617 = vmatpush.msra.mxu0 0.0
      %1618 = vmatpush.msra.mxu0 0.0
      %1619 = vmatpush.msra.mxu0 0.0
      %1620 = vmatpush.msra.mxu0 0.0
      %1621 = vmatpush.msra.mxu0 0.0
      %1622 = vmatpush.msra.mxu0 %v1148
      %1623 = vmatpush.msra.mxu0 %v1147
      %1624 = vmatpush.msra.mxu0 %v1146
      %1625 = vmatpush.msra.mxu0 %v1145
      %1626 = vmatmul.f32.gmra.mxu0 %v1608
      %v1627 = vpop.f32.mrf.mxu0
      %v1628 = vadd.f32 0.0, %v1627
      %1629 = vdwg.mxu0
      %s1630 = scalar_lea.vmem %s6, 640
      %v1631 = vld [vmem:[%s1630] sm:$0xff]
      %v1632 = vld [vmem:[%s1630 + $0x8] sm:$0xff]
      %v1633 = vld [vmem:[%s1630 + $0x10] sm:$0xff]
      %v1634 = vld [vmem:[%s1630 + $0x18] sm:$0xff]
      %v1635 = vld [vmem:[%s1630 + $0x20] sm:$0xff]
      %v1636 = vld [vmem:[%s1630 + $0x28] sm:$0xff]
      %v1637 = vld [vmem:[%s1630 + $0x30] sm:$0xff]
      %v1638 = vld [vmem:[%s1630 + $0x38] sm:$0xff]
      %v1639 = vld [vmem:[%s1630 + $0x40] sm:$0xff]
      %v1640 = vld [vmem:[%s1630 + $0x48] sm:$0xff]
      %v1641 = vld [vmem:[%s1630 + $0x50] sm:$0xff]
      %v1642 = vld [vmem:[%s1630 + $0x58] sm:$0xff]
      %v1643 = vld [vmem:[%s1630 + $0x60] sm:$0xff]
      %v1644 = vld [vmem:[%s1630 + $0x68] sm:$0xff]
      %v1645 = vld [vmem:[%s1630 + $0x70] sm:$0xff]
      %v1646 = vld [vmem:[%s1630 + $0x78] sm:$0xff]
      %v1648 = vsel %vm295, %v1628, 0
      %1650 = vmatpush.msra.mxu0 0.0
      %1651 = vmatpush.msra.mxu0 0.0
      %1652 = vmatpush.msra.mxu0 0.0
      %1653 = vmatpush.msra.mxu0 0.0
      %1654 = vmatpush.msra.mxu0 0.0
      %1655 = vmatpush.msra.mxu0 0.0
      %1656 = vmatpush.msra.mxu0 0.0
      %1657 = vmatpush.msra.mxu0 0.0
      %1658 = vmatpush.msra.mxu0 %v1645
      %1659 = vmatpush.msra.mxu0 %v1643
      %1660 = vmatpush.msra.mxu0 %v1641
      %1661 = vmatpush.msra.mxu0 %v1639
      %1662 = vmatpush.msra.mxu0 %v1637
      %1663 = vmatpush.msra.mxu0 %v1635
      %1664 = vmatpush.msra.mxu0 %v1633
      %1665 = vmatpush.msra.mxu0 %v1631
      %1666 = vmatmul.f32.gmra.mxu0 %v1648
      %v1667 = vpop.f32.mrf.mxu0
      %v1668 = vadd.f32 0.0, %v1667
      %1669 = vdwg.mxu0
      %1670 = vmatpush.msra.mxu0 0.0
      %1671 = vmatpush.msra.mxu0 0.0
      %1672 = vmatpush.msra.mxu0 0.0
      %1673 = vmatpush.msra.mxu0 0.0
      %1674 = vmatpush.msra.mxu0 0.0
      %1675 = vmatpush.msra.mxu0 0.0
      %1676 = vmatpush.msra.mxu0 0.0
      %1677 = vmatpush.msra.mxu0 0.0
      %1678 = vmatpush.msra.mxu0 %v1646
      %1679 = vmatpush.msra.mxu0 %v1644
      %1680 = vmatpush.msra.mxu0 %v1642
      %1681 = vmatpush.msra.mxu0 %v1640
      %1682 = vmatpush.msra.mxu0 %v1638
      %1683 = vmatpush.msra.mxu0 %v1636
      %1684 = vmatpush.msra.mxu0 %v1634
      %1685 = vmatpush.msra.mxu0 %v1632
      %1686 = vmatmul.f32.gmra.mxu0 %v1648
      %v1687 = vpop.f32.mrf.mxu0
      %v1688 = vadd.f32 0.0, %v1687
      %1689 = vdwg.mxu0
      %v1692 = vrot.slane %v1688, 4
      %v1693 = vsel %vm1237, %v1668, %v1692
      %v1695 = vadd.f32 %v1604, %v1693
      %s1696 = scalar_lea.vmem %s4, 24
      %v1697 = vld [vmem:[%s1696] sm:$0xf]
      %v1699 = vsel %vm1151, %v1697, 0
      %1701 = vmatpush.msra.mxu0 0.0
      %1702 = vmatpush.msra.mxu0 0.0
      %1703 = vmatpush.msra.mxu0 0.0
      %1704 = vmatpush.msra.mxu0 0.0
      %1705 = vmatpush.msra.mxu0 0.0
      %1706 = vmatpush.msra.mxu0 0.0
      %1707 = vmatpush.msra.mxu0 0.0
      %1708 = vmatpush.msra.mxu0 0.0
      %1709 = vmatpush.msra.mxu0 0.0
      %1710 = vmatpush.msra.mxu0 0.0
      %1711 = vmatpush.msra.mxu0 0.0
      %1712 = vmatpush.msra.mxu0 0.0
      %1713 = vmatpush.msra.mxu0 %v1148
      %1714 = vmatpush.msra.mxu0 %v1147
      %1715 = vmatpush.msra.mxu0 %v1146
      %1716 = vmatpush.msra.mxu0 %v1145
      %1717 = vmatmul.f32.gmra.mxu0 %v1699
      %v1718 = vpop.f32.mrf.mxu0
      %v1719 = vadd.f32 0.0, %v1718
      %1720 = vdwg.mxu0
      %s1721 = scalar_lea.vmem %s6, 768
      %v1722 = vld [vmem:[%s1721] sm:$0xff]
      %v1723 = vld [vmem:[%s1721 + $0x8] sm:$0xff]
      %v1724 = vld [vmem:[%s1721 + $0x10] sm:$0xff]
      %v1725 = vld [vmem:[%s1721 + $0x18] sm:$0xff]
      %v1726 = vld [vmem:[%s1721 + $0x20] sm:$0xff]
      %v1727 = vld [vmem:[%s1721 + $0x28] sm:$0xff]
      %v1728 = vld [vmem:[%s1721 + $0x30] sm:$0xff]
      %v1729 = vld [vmem:[%s1721 + $0x38] sm:$0xff]
      %v1730 = vld [vmem:[%s1721 + $0x40] sm:$0xff]
      %v1731 = vld [vmem:[%s1721 + $0x48] sm:$0xff]
      %v1732 = vld [vmem:[%s1721 + $0x50] sm:$0xff]
      %v1733 = vld [vmem:[%s1721 + $0x58] sm:$0xff]
      %v1734 = vld [vmem:[%s1721 + $0x60] sm:$0xff]
      %v1735 = vld [vmem:[%s1721 + $0x68] sm:$0xff]
      %v1736 = vld [vmem:[%s1721 + $0x70] sm:$0xff]
      %v1737 = vld [vmem:[%s1721 + $0x78] sm:$0xff]
      %v1739 = vsel %vm295, %v1719, 0
      %1741 = vmatpush.msra.mxu0 0.0
      %1742 = vmatpush.msra.mxu0 0.0
      %1743 = vmatpush.msra.mxu0 0.0
      %1744 = vmatpush.msra.mxu0 0.0
      %1745 = vmatpush.msra.mxu0 0.0
      %1746 = vmatpush.msra.mxu0 0.0
      %1747 = vmatpush.msra.mxu0 0.0
      %1748 = vmatpush.msra.mxu0 0.0
      %1749 = vmatpush.msra.mxu0 %v1736
      %1750 = vmatpush.msra.mxu0 %v1734
      %1751 = vmatpush.msra.mxu0 %v1732
      %1752 = vmatpush.msra.mxu0 %v1730
      %1753 = vmatpush.msra.mxu0 %v1728
      %1754 = vmatpush.msra.mxu0 %v1726
      %1755 = vmatpush.msra.mxu0 %v1724
      %1756 = vmatpush.msra.mxu0 %v1722
      %1757 = vmatmul.f32.gmra.mxu0 %v1739
      %v1758 = vpop.f32.mrf.mxu0
      %v1759 = vadd.f32 0.0, %v1758
      %1760 = vdwg.mxu0
      %1761 = vmatpush.msra.mxu0 0.0
      %1762 = vmatpush.msra.mxu0 0.0
      %1763 = vmatpush.msra.mxu0 0.0
      %1764 = vmatpush.msra.mxu0 0.0
      %1765 = vmatpush.msra.mxu0 0.0
      %1766 = vmatpush.msra.mxu0 0.0
      %1767 = vmatpush.msra.mxu0 0.0
      %1768 = vmatpush.msra.mxu0 0.0
      %1769 = vmatpush.msra.mxu0 %v1737
      %1770 = vmatpush.msra.mxu0 %v1735
      %1771 = vmatpush.msra.mxu0 %v1733
      %1772 = vmatpush.msra.mxu0 %v1731
      %1773 = vmatpush.msra.mxu0 %v1729
      %1774 = vmatpush.msra.mxu0 %v1727
      %1775 = vmatpush.msra.mxu0 %v1725
      %1776 = vmatpush.msra.mxu0 %v1723
      %1777 = vmatmul.f32.gmra.mxu0 %v1739
      %v1778 = vpop.f32.mrf.mxu0
      %v1779 = vadd.f32 0.0, %v1778
      %1780 = vdwg.mxu0
      %v1783 = vrot.slane %v1779, 4
      %v1784 = vsel %vm1237, %v1759, %v1783
      %v1786 = vadd.f32 %v1695, %v1784
      %s1787 = scalar_lea.vmem %s4, 28
      %v1788 = vld [vmem:[%s1787] sm:$0xf]
      %v1790 = vsel %vm1151, %v1788, 0
      %1792 = vmatpush.msra.mxu0 0.0
      %1793 = vmatpush.msra.mxu0 0.0
      %1794 = vmatpush.msra.mxu0 0.0
      %1795 = vmatpush.msra.mxu0 0.0
      %1796 = vmatpush.msra.mxu0 0.0
      %1797 = vmatpush.msra.mxu0 0.0
      %1798 = vmatpush.msra.mxu0 0.0
      %1799 = vmatpush.msra.mxu0 0.0
      %1800 = vmatpush.msra.mxu0 0.0
      %1801 = vmatpush.msra.mxu0 0.0
      %1802 = vmatpush.msra.mxu0 0.0
      %1803 = vmatpush.msra.mxu0 0.0
      %1804 = vmatpush.msra.mxu0 %v1148
      %1805 = vmatpush.msra.mxu0 %v1147
      %1806 = vmatpush.msra.mxu0 %v1146
      %1807 = vmatpush.msra.mxu0 %v1145
      %1808 = vmatmul.f32.gmra.mxu0 %v1790
      %v1809 = vpop.f32.mrf.mxu0
      %v1810 = vadd.f32 0.0, %v1809
      %1811 = vdwg.mxu0
      %s1812 = scalar_lea.vmem %s6, 896
      %v1813 = vld [vmem:[%s1812] sm:$0xff]
      %v1814 = vld [vmem:[%s1812 + $0x8] sm:$0xff]
      %v1815 = vld [vmem:[%s1812 + $0x10] sm:$0xff]
      %v1816 = vld [vmem:[%s1812 + $0x18] sm:$0xff]
      %v1817 = vld [vmem:[%s1812 + $0x20] sm:$0xff]
      %v1818 = vld [vmem:[%s1812 + $0x28] sm:$0xff]
      %v1819 = vld [vmem:[%s1812 + $0x30] sm:$0xff]
      %v1820 = vld [vmem:[%s1812 + $0x38] sm:$0xff]
      %v1821 = vld [vmem:[%s1812 + $0x40] sm:$0xff]
      %v1822 = vld [vmem:[%s1812 + $0x48] sm:$0xff]
      %v1823 = vld [vmem:[%s1812 + $0x50] sm:$0xff]
      %v1824 = vld [vmem:[%s1812 + $0x58] sm:$0xff]
      %v1825 = vld [vmem:[%s1812 + $0x60] sm:$0xff]
      %v1826 = vld [vmem:[%s1812 + $0x68] sm:$0xff]
      %v1827 = vld [vmem:[%s1812 + $0x70] sm:$0xff]
      %v1828 = vld [vmem:[%s1812 + $0x78] sm:$0xff]
      %v1830 = vsel %vm295, %v1810, 0
      %1832 = vmatpush.msra.mxu0 0.0
      %1833 = vmatpush.msra.mxu0 0.0
      %1834 = vmatpush.msra.mxu0 0.0
      %1835 = vmatpush.msra.mxu0 0.0
      %1836 = vmatpush.msra.mxu0 0.0
      %1837 = vmatpush.msra.mxu0 0.0
      %1838 = vmatpush.msra.mxu0 0.0
      %1839 = vmatpush.msra.mxu0 0.0
      %1840 = vmatpush.msra.mxu0 %v1827
      %1841 = vmatpush.msra.mxu0 %v1825
      %1842 = vmatpush.msra.mxu0 %v1823
      %1843 = vmatpush.msra.mxu0 %v1821
      %1844 = vmatpush.msra.mxu0 %v1819
      %1845 = vmatpush.msra.mxu0 %v1817
      %1846 = vmatpush.msra.mxu0 %v1815
      %1847 = vmatpush.msra.mxu0 %v1813
      %1848 = vmatmul.f32.gmra.mxu0 %v1830
      %v1849 = vpop.f32.mrf.mxu0
      %v1850 = vadd.f32 0.0, %v1849
      %1851 = vdwg.mxu0
      %1852 = vmatpush.msra.mxu0 0.0
      %1853 = vmatpush.msra.mxu0 0.0
      %1854 = vmatpush.msra.mxu0 0.0
      %1855 = vmatpush.msra.mxu0 0.0
      %1856 = vmatpush.msra.mxu0 0.0
      %1857 = vmatpush.msra.mxu0 0.0
      %1858 = vmatpush.msra.mxu0 0.0
      %1859 = vmatpush.msra.mxu0 0.0
      %1860 = vmatpush.msra.mxu0 %v1828
      %1861 = vmatpush.msra.mxu0 %v1826
      %1862 = vmatpush.msra.mxu0 %v1824
      %1863 = vmatpush.msra.mxu0 %v1822
      %1864 = vmatpush.msra.mxu0 %v1820
      %1865 = vmatpush.msra.mxu0 %v1818
      %1866 = vmatpush.msra.mxu0 %v1816
      %1867 = vmatpush.msra.mxu0 %v1814
      %1868 = vmatmul.f32.gmra.mxu0 %v1830
      %v1869 = vpop.f32.mrf.mxu0
      %v1870 = vadd.f32 0.0, %v1869
      %1871 = vdwg.mxu0
      %v1874 = vrot.slane %v1870, 4
      %v1875 = vsel %vm1237, %v1850, %v1874
      %v1877 = vadd.f32 %v1786, %v1875
      %s1878 = scalar_lea.vmem %s4, 32
      %v1879 = vld [vmem:[%s1878] sm:$0xf]
      %v1881 = vsel %vm1151, %v1879, 0
      %1883 = vmatpush.msra.mxu0 0.0
      %1884 = vmatpush.msra.mxu0 0.0
      %1885 = vmatpush.msra.mxu0 0.0
      %1886 = vmatpush.msra.mxu0 0.0
      %1887 = vmatpush.msra.mxu0 0.0
      %1888 = vmatpush.msra.mxu0 0.0
      %1889 = vmatpush.msra.mxu0 0.0
      %1890 = vmatpush.msra.mxu0 0.0
      %1891 = vmatpush.msra.mxu0 0.0
      %1892 = vmatpush.msra.mxu0 0.0
      %1893 = vmatpush.msra.mxu0 0.0
      %1894 = vmatpush.msra.mxu0 0.0
      %1895 = vmatpush.msra.mxu0 %v1148
      %1896 = vmatpush.msra.mxu0 %v1147
      %1897 = vmatpush.msra.mxu0 %v1146
      %1898 = vmatpush.msra.mxu0 %v1145
      %1899 = vmatmul.f32.gmra.mxu0 %v1881
      %v1900 = vpop.f32.mrf.mxu0
      %v1901 = vadd.f32 0.0, %v1900
      %1902 = vdwg.mxu0
      %s1903 = scalar_lea.vmem %s6, 1024
      %v1904 = vld [vmem:[%s1903] sm:$0xff]
      %v1905 = vld [vmem:[%s1903 + $0x8] sm:$0xff]
      %v1906 = vld [vmem:[%s1903 + $0x10] sm:$0xff]
      %v1907 = vld [vmem:[%s1903 + $0x18] sm:$0xff]
      %v1908 = vld [vmem:[%s1903 + $0x20] sm:$0xff]
      %v1909 = vld [vmem:[%s1903 + $0x28] sm:$0xff]
      %v1910 = vld [vmem:[%s1903 + $0x30] sm:$0xff]
      %v1911 = vld [vmem:[%s1903 + $0x38] sm:$0xff]
      %v1912 = vld [vmem:[%s1903 + $0x40] sm:$0xff]
      %v1913 = vld [vmem:[%s1903 + $0x48] sm:$0xff]
      %v1914 = vld [vmem:[%s1903 + $0x50] sm:$0xff]
      %v1915 = vld [vmem:[%s1903 + $0x58] sm:$0xff]
      %v1916 = vld [vmem:[%s1903 + $0x60] sm:$0xff]
      %v1917 = vld [vmem:[%s1903 + $0x68] sm:$0xff]
      %v1918 = vld [vmem:[%s1903 + $0x70] sm:$0xff]
      %v1919 = vld [vmem:[%s1903 + $0x78] sm:$0xff]
      %v1921 = vsel %vm295, %v1901, 0
      %1923 = vmatpush.msra.mxu0 0.0
      %1924 = vmatpush.msra.mxu0 0.0
      %1925 = vmatpush.msra.mxu0 0.0
      %1926 = vmatpush.msra.mxu0 0.0
      %1927 = vmatpush.msra.mxu0 0.0
      %1928 = vmatpush.msra.mxu0 0.0
      %1929 = vmatpush.msra.mxu0 0.0
      %1930 = vmatpush.msra.mxu0 0.0
      %1931 = vmatpush.msra.mxu0 %v1918
      %1932 = vmatpush.msra.mxu0 %v1916
      %1933 = vmatpush.msra.mxu0 %v1914
      %1934 = vmatpush.msra.mxu0 %v1912
      %1935 = vmatpush.msra.mxu0 %v1910
      %1936 = vmatpush.msra.mxu0 %v1908
      %1937 = vmatpush.msra.mxu0 %v1906
      %1938 = vmatpush.msra.mxu0 %v1904
      %1939 = vmatmul.f32.gmra.mxu0 %v1921
      %v1940 = vpop.f32.mrf.mxu0
      %v1941 = vadd.f32 0.0, %v1940
      %1942 = vdwg.mxu0
      %1943 = vmatpush.msra.mxu0 0.0
      %1944 = vmatpush.msra.mxu0 0.0
      %1945 = vmatpush.msra.mxu0 0.0
      %1946 = vmatpush.msra.mxu0 0.0
      %1947 = vmatpush.msra.mxu0 0.0
      %1948 = vmatpush.msra.mxu0 0.0
      %1949 = vmatpush.msra.mxu0 0.0
      %1950 = vmatpush.msra.mxu0 0.0
      %1951 = vmatpush.msra.mxu0 %v1919
      %1952 = vmatpush.msra.mxu0 %v1917
      %1953 = vmatpush.msra.mxu0 %v1915
      %1954 = vmatpush.msra.mxu0 %v1913
      %1955 = vmatpush.msra.mxu0 %v1911
      %1956 = vmatpush.msra.mxu0 %v1909
      %1957 = vmatpush.msra.mxu0 %v1907
      %1958 = vmatpush.msra.mxu0 %v1905
      %1959 = vmatmul.f32.gmra.mxu0 %v1921
      %v1960 = vpop.f32.mrf.mxu0
      %v1961 = vadd.f32 0.0, %v1960
      %1962 = vdwg.mxu0
      %v1965 = vrot.slane %v1961, 4
      %v1966 = vsel %vm1237, %v1941, %v1965
      %v1968 = vadd.f32 %v1877, %v1966
      %1969 = vst [vmem:[%s278] sm:$0xff] %v1968
      %p1970 = scmp.lt.s32.totalorder %s18, 1
      %s1971 = scalar_select %p1970, %s18, 1
      %s1972 = smul.addr %s1971, 2
      %s1973 = smul.addr %s1972, 4
      %s1974 = scalar_lea.vmem %s7, %s1973
      // Predicated region
      $region49: #{conv_deconv_forward.5} parent=47 // pred_check
        %p1975 = pneg %p188
      $region50: #{conv_deconv_forward.5} parent=47 // pred_check_branch
        %1977 = sbr.rel (%p1975) target = $region52
      $region51: #{conv_deconv_forward.5} parent=47 // pred_region
        _
      $region52: #{conv_deconv_forward.5} parent=47 // pred_fallthru
        _
    $region48: #{conv_deconv_forward.5} parent=5 // pred_fallthru
      _
    %p1978 = scmp.le.s32.totalorder 2, %s13
    // Predicated region
    $region53: #{conv_deconv_forward.5} parent=5 // pred_check
      %p1979 = pneg %p1978
    $region54: #{conv_deconv_forward.5} parent=5 // pred_check_branch
      %1981 = sbr.rel (%p1979) target = $region56
    $region55: #{conv_deconv_forward.5} parent=5 // pred_region
      %s1982 = ssub.s32 %s13, 2
      // Predicated region
      $region57: #{conv_deconv_forward.5} parent=55 // pred_check
        %p1983 = pneg %p194
      $region58: #{conv_deconv_forward.5} parent=55 // pred_check_branch
        %1985 = sbr.rel (%p1983) target = $region60
      $region59: #{conv_deconv_forward.5} parent=55 // pred_region
        %p1986 = scmp.lt.s32.totalorder %s19, 1
        %s1987 = scalar_select %p1986, %s19, 1
        %s1988 = smul.addr %s1987, 2
        %s1989 = smul.addr %s1988, 4
        %s1990 = scalar_lea.vmem %s7, %s1989
      $region60: #{conv_deconv_forward.5} parent=55 // pred_fallthru
        _
    $region56: #{conv_deconv_forward.5} parent=5 // pred_fallthru
      _
  $region6: #{conv_deconv_forward.5} parent=0 // loop_footer
    %s17 = sadd.s32 1, %s13
  $region7: #{conv_deconv_forward.5} parent=0 // loop_footer_branch
    %12 = sbr.rel target = $region3
  $region8: #{conv_deconv_forward.5} parent=0 // loop_exit
    _

// kernel: conv_deconv_forward.3
$region0: #{conv_deconv_forward.3}
  #allocation0 [shape = 'u32[]', space=smem, size = 0x4, offset = 0x4, fixed_abs, tag = 'smem constant byte address 0x4 - core index']
  #allocation1 [shape = 'u32[72,128]{1,0:T(1,128)}', space=vmem, size = 0x9000, scoped, tag = 'internal scratch']
  %s0 = inlined_call_operand.vmem [shape: f32[2,4,256], index: 0, kind: input, shape index: {}]
  %s1 = inlined_call_operand.vmem [shape: f32[9,32,4], index: 1, kind: input, shape index: {}]
  %s2 = inlined_call_operand.vmem [shape: f32[32,64], index: 2, kind: input, shape index: {}]
  %s3 = inlined_call_operand.vmem [shape: f32[9,256,64], index: 3, kind: input, shape index: {}]
  %s4 = inlined_call_operand.vmem [shape: f32[9,64,32], index: 4, kind: input, shape index: {}]
  %s5 = inlined_call_operand.vmem [shape: f32[64,16], index: 5, kind: input, shape index: {}]
  %s6 = inlined_call_operand.vmem [shape: f32[9,64,16], index: 6, kind: input, shape index: {}]
  %s7 = inlined_call_operand.vmem [shape: f32[2,64,16], index: 7, kind: output, shape index: {}]
  %s8 = sld [smem:[#allocation0]]
  $region61: #{conv_deconv_forward.3} parent=0
    _
  %s10 = ssub.s32 1, %s8
  %s11 = scalar_select 0, %s10, %s8
  loop: start=0, step=1, limit=4
  $region2: #{conv_deconv_forward.3} parent=0 // loop_pre_header
    _
  $region3: #{conv_deconv_forward.3} parent=0 // loop_header
    %s13 = sphi 0, %s17
    %p14 = scmp.ge.s32.totalorder %s13, 4
    %s23 = sphi 0, %s25
    %s26 = sphi 0, %s23
    %s27 = sphi 0, %s26
    %s43 = sphi 0, %s27
    %s47 = sphi 0, %s47
    %s49 = sphi 0, %s47
    %s50 = sphi 0, %s49
    %s64 = sphi 0, %s50
    %s68 = sphi 0, %s68
    %s70 = sphi 0, %s68
    %s71 = sphi 0, %s70
    %s85 = sphi 0, %s71
    %s89 = sphi 0, %s89
    %s91 = sphi 0, %s89
    %s92 = sphi 0, %s91
    %s106 = sphi 0, %s92
    %s110 = sphi 0, %s110
    %s112 = sphi 0, %s110
    %s113 = sphi 0, %s112
    %s127 = sphi 0, %s113
    %s131 = sphi 0, %s131
    %s133 = sphi 0, %s131
    %s134 = sphi 0, %s133
    %s148 = sphi 0, %s134
    %s152 = sphi 0, %s152
    %s154 = sphi 0, %s152
    %s155 = sphi 0, %s154
    %s169 = sphi 0, %s155
    %s175 = sphi 0, %s177
    %s178 = sphi 0, %s175
    %s179 = sphi 0, %s178
    %s195 = sphi 0, %s179
  $region4: #{conv_deconv_forward.3} parent=0 // loop_header_branch
    %16 = sbr.rel (%p14) target = $region8
  $region5: #{conv_deconv_forward.3} parent=0 // loop_body
    %s18 = ssub.s32 %s13, 1
    %s19 = ssub.s32 %s13, 2
    %s20 = sadd.s32 %s13, 1
    %s21 = ssub.s32 %s13, %s20
    %p22 = scmp.eq.s32.totalorder %s21, 0
    %s24 = sadd.s32 %s23, 1
    %s25 = scalar_select %p22, %s23, %s24
    %p28 = pneg %p22
    %p29 = scmp.eq.s32.totalorder %s13, 1
    %p30 = por %p28, %p29
    %p31 = scmp.ne.s32.totalorder %s23, %s26
    %p32 = scmp.eq.s32.totalorder %s13, 0
    %p33 = por %p31, %p32
    %p34 = scmp.ne.s32.totalorder %s23, %s26
    %p35 = scmp.eq.s32.totalorder %s18, 1
    %p36 = por %p34, %p35
    %p37 = scmp.ne.s32.totalorder %s26, %s27
    %p38 = scmp.eq.s32.totalorder %s18, 0
    %p39 = por %p37, %p38
    %p40 = scmp.ne.s32.totalorder %s26, %s27
    %p41 = scmp.eq.s32.totalorder %s19, 1
    %p42 = por %p40, %p41
    %p44 = scmp.ne.s32.totalorder %s27, %s43
    %p45 = scmp.eq.s32.totalorder %s19, 0
    %p46 = por %p44, %p45
    %s48 = sadd.s32 %s47, 1
    %p51 = scmp.eq.s32.totalorder %s13, 1
    %p52 = scmp.ne.s32.totalorder %s47, %s49
    %p53 = scmp.eq.s32.totalorder %s13, 0
    %p54 = por %p52, %p53
    %p55 = scmp.ne.s32.totalorder %s47, %s49
    %p56 = scmp.eq.s32.totalorder %s18, 1
    %p57 = por %p55, %p56
    %p58 = scmp.ne.s32.totalorder %s49, %s50
    %p59 = scmp.eq.s32.totalorder %s18, 0
    %p60 = por %p58, %p59
    %p61 = scmp.ne.s32.totalorder %s49, %s50
    %p62 = scmp.eq.s32.totalorder %s19, 1
    %p63 = por %p61, %p62
    %p65 = scmp.ne.s32.totalorder %s50, %s64
    %p66 = scmp.eq.s32.totalorder %s19, 0
    %p67 = por %p65, %p66
    %s69 = sadd.s32 %s68, 1
    %p72 = scmp.eq.s32.totalorder %s13, 1
    %p73 = scmp.ne.s32.totalorder %s68, %s70
    %p74 = scmp.eq.s32.totalorder %s13, 0
    %p75 = por %p73, %p74
    %p76 = scmp.ne.s32.totalorder %s68, %s70
    %p77 = scmp.eq.s32.totalorder %s18, 1
    %p78 = por %p76, %p77
    %p79 = scmp.ne.s32.totalorder %s70, %s71
    %p80 = scmp.eq.s32.totalorder %s18, 0
    %p81 = por %p79, %p80
    %p82 = scmp.ne.s32.totalorder %s70, %s71
    %p83 = scmp.eq.s32.totalorder %s19, 1
    %p84 = por %p82, %p83
    %p86 = scmp.ne.s32.totalorder %s71, %s85
    %p87 = scmp.eq.s32.totalorder %s19, 0
    %p88 = por %p86, %p87
    %s90 = sadd.s32 %s89, 1
    %p93 = scmp.eq.s32.totalorder %s13, 1
    %p94 = scmp.ne.s32.totalorder %s89, %s91
    %p95 = scmp.eq.s32.totalorder %s13, 0
    %p96 = por %p94, %p95
    %p97 = scmp.ne.s32.totalorder %s89, %s91
    %p98 = scmp.eq.s32.totalorder %s18, 1
    %p99 = por %p97, %p98
    %p100 = scmp.ne.s32.totalorder %s91, %s92
    %p101 = scmp.eq.s32.totalorder %s18, 0
    %p102 = por %p100, %p101
    %p103 = scmp.ne.s32.totalorder %s91, %s92
    %p104 = scmp.eq.s32.totalorder %s19, 1
    %p105 = por %p103, %p104
    %p107 = scmp.ne.s32.totalorder %s92, %s106
    %p108 = scmp.eq.s32.totalorder %s19, 0
    %p109 = por %p107, %p108
    %s111 = sadd.s32 %s110, 1
    %p114 = scmp.eq.s32.totalorder %s13, 1
    %p115 = scmp.ne.s32.totalorder %s110, %s112
    %p116 = scmp.eq.s32.totalorder %s13, 0
    %p117 = por %p115, %p116
    %p118 = scmp.ne.s32.totalorder %s110, %s112
    %p119 = scmp.eq.s32.totalorder %s18, 1
    %p120 = por %p118, %p119
    %p121 = scmp.ne.s32.totalorder %s112, %s113
    %p122 = scmp.eq.s32.totalorder %s18, 0
    %p123 = por %p121, %p122
    %p124 = scmp.ne.s32.totalorder %s112, %s113
    %p125 = scmp.eq.s32.totalorder %s19, 1
    %p126 = por %p124, %p125
    %p128 = scmp.ne.s32.totalorder %s113, %s127
    %p129 = scmp.eq.s32.totalorder %s19, 0
    %p130 = por %p128, %p129
    %s132 = sadd.s32 %s131, 1
    %p135 = scmp.eq.s32.totalorder %s13, 1
    %p136 = scmp.ne.s32.totalorder %s131, %s133
    %p137 = scmp.eq.s32.totalorder %s13, 0
    %p138 = por %p136, %p137
    %p139 = scmp.ne.s32.totalorder %s131, %s133
    %p140 = scmp.eq.s32.totalorder %s18, 1
    %p141 = por %p139, %p140
    %p142 = scmp.ne.s32.totalorder %s133, %s134
    %p143 = scmp.eq.s32.totalorder %s18, 0
    %p144 = por %p142, %p143
    %p145 = scmp.ne.s32.totalorder %s133, %s134
    %p146 = scmp.eq.s32.totalorder %s19, 1
    %p147 = por %p145, %p146
    %p149 = scmp.ne.s32.totalorder %s134, %s148
    %p150 = scmp.eq.s32.totalorder %s19, 0
    %p151 = por %p149, %p150
    %s153 = sadd.s32 %s152, 1
    %p156 = scmp.eq.s32.totalorder %s13, 1
    %p157 = scmp.ne.s32.totalorder %s152, %s154
    %p158 = scmp.eq.s32.totalorder %s13, 0
    %p159 = por %p157, %p158
    %p160 = scmp.ne.s32.totalorder %s152, %s154
    %p161 = scmp.eq.s32.totalorder %s18, 1
    %p162 = por %p160, %p161
    %p163 = scmp.ne.s32.totalorder %s154, %s155
    %p164 = scmp.eq.s32.totalorder %s18, 0
    %p165 = por %p163, %p164
    %p166 = scmp.ne.s32.totalorder %s154, %s155
    %p167 = scmp.eq.s32.totalorder %s19, 1
    %p168 = por %p166, %p167
    %p170 = scmp.ne.s32.totalorder %s155, %s169
    %p171 = scmp.eq.s32.totalorder %s19, 0
    %p172 = por %p170, %p171
    %s173 = ssub.s32 %s13, %s20
    %p174 = scmp.eq.s32.totalorder %s173, 0
    %s176 = sadd.s32 %s175, 1
    %s177 = scalar_select %p174, %s175, %s176
    %p180 = pneg %p174
    %p181 = scmp.eq.s32.totalorder %s13, 1
    %p182 = por %p180, %p181
    %p183 = scmp.ne.s32.totalorder %s175, %s178
    %p184 = scmp.eq.s32.totalorder %s13, 0
    %p185 = por %p183, %p184
    %p186 = scmp.ne.s32.totalorder %s175, %s178
    %p187 = scmp.eq.s32.totalorder %s18, 1
    %p188 = por %p186, %p187
    %p189 = scmp.ne.s32.totalorder %s178, %s179
    %p190 = scmp.eq.s32.totalorder %s18, 0
    %p191 = por %p189, %p190
    %p192 = scmp.ne.s32.totalorder %s178, %s179
    %p193 = scmp.eq.s32.totalorder %s19, 1
    %p194 = por %p192, %p193
    %p196 = scmp.ne.s32.totalorder %s179, %s195
    %p197 = scmp.eq.s32.totalorder %s19, 0
    %p198 = por %p196, %p197
    %p199 = scmp.le.s32.totalorder 1, %s13
    %p200 = scmp.lt.s32.totalorder %s13, 3
    %p201 = pnand %p199, %p200
    %p202 = pneg %p201
    // Predicated region
    $region9: #{conv_deconv_forward.3} parent=5 // pred_check
      _
    $region10: #{conv_deconv_forward.3} parent=5 // pred_check_branch
      %204 = sbr.rel (%p201) target = $region12
    $region11: #{conv_deconv_forward.3} parent=5 // pred_region
      %s205 = ssub.s32 %s13, 1
      // Predicated region
      $region13: #{conv_deconv_forward.3} parent=11 // pred_check
        %p206 = pneg %p60
      $region14: #{conv_deconv_forward.3} parent=11 // pred_check_branch
        %208 = sbr.rel (%p206) target = $region16
      $region15: #{conv_deconv_forward.3} parent=11 // pred_region
        _
      $region16: #{conv_deconv_forward.3} parent=11 // pred_fallthru
        _
      // Predicated region
      $region17: #{conv_deconv_forward.3} parent=11 // pred_check
        %p209 = pneg %p81
      $region18: #{conv_deconv_forward.3} parent=11 // pred_check_branch
        %211 = sbr.rel (%p209) target = $region20
      $region19: #{conv_deconv_forward.3} parent=11 // pred_region
        _
      $region20: #{conv_deconv_forward.3} parent=11 // pred_fallthru
        _
      // Predicated region
      $region21: #{conv_deconv_forward.3} parent=11 // pred_check
        %p212 = pneg %p102
      $region22: #{conv_deconv_forward.3} parent=11 // pred_check_branch
        %214 = sbr.rel (%p212) target = $region24
      $region23: #{conv_deconv_forward.3} parent=11 // pred_region
        _
      $region24: #{conv_deconv_forward.3} parent=11 // pred_fallthru
        _
      // Predicated region
      $region25: #{conv_deconv_forward.3} parent=11 // pred_check
        %p215 = pneg %p123
      $region26: #{conv_deconv_forward.3} parent=11 // pred_check_branch
        %217 = sbr.rel (%p215) target = $region28
      $region27: #{conv_deconv_forward.3} parent=11 // pred_region
        _
      $region28: #{conv_deconv_forward.3} parent=11 // pred_fallthru
        _
      // Predicated region
      $region29: #{conv_deconv_forward.3} parent=11 // pred_check
        %p218 = pneg %p144
      $region30: #{conv_deconv_forward.3} parent=11 // pred_check_branch
        %220 = sbr.rel (%p218) target = $region32
      $region31: #{conv_deconv_forward.3} parent=11 // pred_region
        _
      $region32: #{conv_deconv_forward.3} parent=11 // pred_fallthru
        _
      // Predicated region
      $region33: #{conv_deconv_forward.3} parent=11 // pred_check
        %p221 = pneg %p165
      $region34: #{conv_deconv_forward.3} parent=11 // pred_check_branch
        %223 = sbr.rel (%p221) target = $region36
      $region35: #{conv_deconv_forward.3} parent=11 // pred_region
        _
      $region36: #{conv_deconv_forward.3} parent=11 // pred_fallthru
        _
    $region12: #{conv_deconv_forward.3} parent=5 // pred_fallthru
      _
    %p224 = scmp.lt.s32.totalorder %s13, 2
    // Predicated region
    $region37: #{conv_deconv_forward.3} parent=5 // pred_check
      %p225 = pneg %p224
    $region38: #{conv_deconv_forward.3} parent=5 // pred_check_branch
      %227 = sbr.rel (%p225) target = $region40
    $region39: #{conv_deconv_forward.3} parent=5 // pred_region
      // Predicated region
      $region41: #{conv_deconv_forward.3} parent=39 // pred_check
        %p228 = pneg %p33
      $region42: #{conv_deconv_forward.3} parent=39 // pred_check_branch
        %230 = sbr.rel (%p228) target = $region44
      $region43: #{conv_deconv_forward.3} parent=39 // pred_region
        %p231 = scmp.lt.s32.totalorder %s13, 1
        %s232 = scalar_select %p231, %s13, 1
        %s233 = smul.addr %s232, 2
        %s234 = smul.addr %s233, 4
        %s235 = scalar_lea.vmem %s0, %s234
      $region44: #{conv_deconv_forward.3} parent=39 // pred_fallthru
        _
    $region40: #{conv_deconv_forward.3} parent=5 // pred_fallthru
      _
    %p236 = scmp.le.s32.totalorder 1, %s13
    %p237 = scmp.lt.s32.totalorder %s13, 3
    %p238 = pnand %p236, %p237
    %p239 = pneg %p238
    // Predicated region
    $region45: #{conv_deconv_forward.3} parent=5 // pred_check
      _
    $region46: #{conv_deconv_forward.3} parent=5 // pred_check_branch
      %241 = sbr.rel (%p238) target = $region48
    $region47: #{conv_deconv_forward.3} parent=5 // pred_region
      %s242 = ssub.s32 %s13, 1
      %p243 = scmp.lt.s32.totalorder %s18, 1
      %s244 = scalar_select %p243, %s18, 1
      %s245 = smul.addr %s244, 2
      %s246 = smul.addr %s245, 4
      %s247 = scalar_lea.vmem %s0, %s246
      %p248 = pneg %p39
      %p249 = pneg %p36
      %p250 = pneg %p60
      %p251 = pneg %p57
      %p252 = pneg %p81
      %p253 = pneg %p78
      %p254 = pneg %p102
      %p255 = pneg %p99
      %p256 = pneg %p123
      %p257 = pneg %p120
      %p258 = pneg %p144
      %p259 = pneg %p141
      %p260 = pneg %p165
      %p261 = pneg %p162
      %p262 = pneg %p191
      %p263 = pneg %p188
      %p264 = scmp.lt.s32.totalorder %s18, 1
      %s265 = scalar_select %p264, %s18, 1
      %s266 = smul.addr %s265, 8
      %s267 = smul.addr %s266, 8
      %s268 = scalar_lea.vmem %s7, %s267
      %p269 = scmp.lt.s32.totalorder %s18, 1
      %s270 = scalar_select %p269, %s18, 1
      %s271 = smul.addr %s270, 2
      %s272 = smul.addr %s271, 4
      %s273 = scalar_lea.vmem %s0, %s272
      %p274 = scmp.lt.s32.totalorder %s18, 1
      %s275 = scalar_select %p274, %s18, 1
      %s276 = smul.addr %s275, 8
      %s277 = smul.addr %s276, 8
      %s278 = scalar_lea.vmem %s7, %s277
      %v279 = vld [vmem:[%s273] sm:$0xff]
      %v280 = vld [vmem:[%s2] sm:$0xff]
      %v281 = vld [vmem:[%s2 + $0x8] sm:$0xff]
      %v282 = vld [vmem:[%s2 + $0x10] sm:$0xff]
      %v283 = vld [vmem:[%s2 + $0x18] sm:$0xff]
      %v284 = vld [vmem:[%s3] sm:$0xff]
      %v285 = vld [vmem:[%s3 + $0x8] sm:$0xff]
      %v286 = vld [vmem:[%s3 + $0x10] sm:$0xff]
      %v287 = vld [vmem:[%s3 + $0x18] sm:$0xff]
      %v288 = vld [vmem:[%s3 + $0x20] sm:$0xff]
      %v289 = vld [vmem:[%s3 + $0x28] sm:$0xff]
      %v290 = vld [vmem:[%s3 + $0x30] sm:$0xff]
      %v291 = vld [vmem:[%s3 + $0x38] sm:$0xff]
      %v292 = vld [vmem:[%s3 + $0x40] sm:$0xff]
      %v293 = vld [vmem:[%s3 + $0x48] sm:$0xff]
      %v294 = vld [vmem:[%s3 + $0x50] sm:$0xff]
      %v295 = vld [vmem:[%s3 + $0x58] sm:$0xff]
      %v296 = vld [vmem:[%s3 + $0x60] sm:$0xff]
      %v297 = vld [vmem:[%s3 + $0x68] sm:$0xff]
      %v298 = vld [vmem:[%s3 + $0x70] sm:$0xff]
      %v299 = vld [vmem:[%s3 + $0x78] sm:$0xff]
      %v300 = vld [vmem:[%s3 + $0x80] sm:$0xff]
      %v301 = vld [vmem:[%s3 + $0x88] sm:$0xff]
      %v302 = vld [vmem:[%s3 + $0x90] sm:$0xff]
      %v303 = vld [vmem:[%s3 + $0x98] sm:$0xff]
      %v304 = vld [vmem:[%s3 + $0xa0] sm:$0xff]
      %v305 = vld [vmem:[%s3 + $0xa8] sm:$0xff]
      %v306 = vld [vmem:[%s3 + $0xb0] sm:$0xff]
      %v307 = vld [vmem:[%s3 + $0xb8] sm:$0xff]
      %v308 = vld [vmem:[%s3 + $0xc0] sm:$0xff]
      %v309 = vld [vmem:[%s3 + $0xc8] sm:$0xff]
      %v310 = vld [vmem:[%s3 + $0xd0] sm:$0xff]
      %v311 = vld [vmem:[%s3 + $0xd8] sm:$0xff]
      %v312 = vld [vmem:[%s3 + $0xe0] sm:$0xff]
      %v313 = vld [vmem:[%s3 + $0xe8] sm:$0xff]
      %v314 = vld [vmem:[%s3 + $0xf0] sm:$0xff]
      %v315 = vld [vmem:[%s3 + $0xf8] sm:$0xff]
      %317 = vst [vmem:[#allocation1] ss:$2 sm:$0xff] %v279
      %v318 = vld.sshfl [vmem:[#allocation1] sm:$0xff pattern:$0x75316420]
      %v319 = vld.sshfl [vmem:[#allocation1 + $0x8] sm:$0xff pattern:$0x75316420]
      %322 = vmatpush.msra.mxu0 %v299
      %323 = vmatpush.msra.mxu0 %v298
      %324 = vmatpush.msra.mxu0 %v297
      %325 = vmatpush.msra.mxu0 %v296
      %326 = vmatpush.msra.mxu0 %v295
      %327 = vmatpush.msra.mxu0 %v294
      %328 = vmatpush.msra.mxu0 %v293
      %329 = vmatpush.msra.mxu0 %v292
      %330 = vmatpush.msra.mxu0 %v291
      %331 = vmatpush.msra.mxu0 %v290
      %332 = vmatpush.msra.mxu0 %v289
      %333 = vmatpush.msra.mxu0 %v288
      %334 = vmatpush.msra.mxu0 %v287
      %335 = vmatpush.msra.mxu0 %v286
      %336 = vmatpush.msra.mxu0 %v285
      %337 = vmatpush.msra.mxu0 %v284
      %338 = vmatmul.f32.gmra.mxu0 %v318
      %v339 = vpop.f32.mrf.mxu0
      %v340 = vadd.f32 0.0, %v339
      %341 = vdwg.mxu0
      %342 = vmatpush.msra.mxu0 %v315
      %343 = vmatpush.msra.mxu0 %v314
      %344 = vmatpush.msra.mxu0 %v313
      %345 = vmatpush.msra.mxu0 %v312
      %346 = vmatpush.msra.mxu0 %v311
      %347 = vmatpush.msra.mxu0 %v310
      %348 = vmatpush.msra.mxu0 %v309
      %349 = vmatpush.msra.mxu0 %v308
      %350 = vmatpush.msra.mxu0 %v307
      %351 = vmatpush.msra.mxu0 %v306
      %352 = vmatpush.msra.mxu0 %v305
      %353 = vmatpush.msra.mxu0 %v304
      %354 = vmatpush.msra.mxu0 %v303
      %355 = vmatpush.msra.mxu0 %v302
      %356 = vmatpush.msra.mxu0 %v301
      %357 = vmatpush.msra.mxu0 %v300
      %358 = vmatmul.f32.gmra.mxu0 %v319
      %v359 = vpop.f32.mrf.mxu0
      %v360 = vadd.f32 %v340, %v359
      %361 = vdwg.mxu0
      %v362 = vld [vmem:[%s1] sm:$0xff]
      %v363 = vld [vmem:[%s1 + $0x8] sm:$0xff]
      %v364 = vld [vmem:[%s1 + $0x10] sm:$0xff]
      %v365 = vld [vmem:[%s1 + $0x18] sm:$0xff]
      %vm366 = vcmask 31744
      %v368 = vsel %vm366, %v362, 0
      %v371 = vsel %vm366, %v363, 0
      %v374 = vsel %vm366, %v364, 0
      %v377 = vsel %vm366, %v365, 0
      %vm379 = vcmask 1043456
      %v381 = vsel %vm379, %v360, 0
      %383 = vmatpush.msra.mxu0 0.0
      %384 = vmatpush.msra.mxu0 0.0
      %385 = vmatpush.msra.mxu0 0.0
      %386 = vmatpush.msra.mxu0 0.0
      %387 = vmatpush.msra.mxu0 0.0
      %388 = vmatpush.msra.mxu0 0.0
      %389 = vmatpush.msra.mxu0 0.0
      %390 = vmatpush.msra.mxu0 0.0
      %391 = vmatpush.msra.mxu0 0.0
      %392 = vmatpush.msra.mxu0 0.0
      %393 = vmatpush.msra.mxu0 0.0
      %394 = vmatpush.msra.mxu0 0.0
      %395 = vmatpush.msra.mxu0 0.0
      %396 = vmatpush.msra.mxu0 0.0
      %397 = vmatpush.msra.mxu0 0.0
      %398 = vmatpush.msra.mxu0 %v381
      %399 = vmatmul.f32.gmra.mxu0 %v368
      %v400 = vpop.f32.mrf.mxu0
      %v401 = vadd.f32 0.0, %v400
      %402 = vmatmul.f32.gmra.mxu0 %v371
      %v403 = vpop.f32.mrf.mxu0
      %v404 = vadd.f32 0.0, %v403
      %405 = vmatmul.f32.gmra.mxu0 %v374
      %v406 = vpop.f32.mrf.mxu0
      %v407 = vadd.f32 0.0, %v406
      %408 = vmatmul.f32.gmra.mxu0 %v377
      %v409 = vpop.f32.mrf.mxu0
      %v410 = vadd.f32 0.0, %v409
      %411 = vdwg.mxu0
      %v412 = vadd.f32 %v280, %v401
      %v413 = vadd.f32 %v281, %v404
      %v414 = vadd.f32 %v282, %v407
      %v415 = vadd.f32 %v283, %v410
      %s416 = scalar_lea.vmem %s3, 256
      %v417 = vld [vmem:[%s416] sm:$0xff]
      %v418 = vld [vmem:[%s416 + $0x8] sm:$0xff]
      %v419 = vld [vmem:[%s416 + $0x10] sm:$0xff]
      %v420 = vld [vmem:[%s416 + $0x18] sm:$0xff]
      %v421 = vld [vmem:[%s416 + $0x20] sm:$0xff]
      %v422 = vld [vmem:[%s416 + $0x28] sm:$0xff]
      %v423 = vld [vmem:[%s416 + $0x30] sm:$0xff]
      %v424 = vld [vmem:[%s416 + $0x38] sm:$0xff]
      %v425 = vld [vmem:[%s416 + $0x40] sm:$0xff]
      %v426 = vld [vmem:[%s416 + $0x48] sm:$0xff]
      %v427 = vld [vmem:[%s416 + $0x50] sm:$0xff]
      %v428 = vld [vmem:[%s416 + $0x58] sm:$0xff]
      %v429 = vld [vmem:[%s416 + $0x60] sm:$0xff]
      %v430 = vld [vmem:[%s416 + $0x68] sm:$0xff]
      %v431 = vld [vmem:[%s416 + $0x70] sm:$0xff]
      %v432 = vld [vmem:[%s416 + $0x78] sm:$0xff]
      %v433 = vld [vmem:[%s416 + $0x80] sm:$0xff]
      %v434 = vld [vmem:[%s416 + $0x88] sm:$0xff]
      %v435 = vld [vmem:[%s416 + $0x90] sm:$0xff]
      %v436 = vld [vmem:[%s416 + $0x98] sm:$0xff]
      %v437 = vld [vmem:[%s416 + $0xa0] sm:$0xff]
      %v438 = vld [vmem:[%s416 + $0xa8] sm:$0xff]
      %v439 = vld [vmem:[%s416 + $0xb0] sm:$0xff]
      %v440 = vld [vmem:[%s416 + $0xb8] sm:$0xff]
      %v441 = vld [vmem:[%s416 + $0xc0] sm:$0xff]
      %v442 = vld [vmem:[%s416 + $0xc8] sm:$0xff]
      %v443 = vld [vmem:[%s416 + $0xd0] sm:$0xff]
      %v444 = vld [vmem:[%s416 + $0xd8] sm:$0xff]
      %v445 = vld [vmem:[%s416 + $0xe0] sm:$0xff]
      %v446 = vld [vmem:[%s416 + $0xe8] sm:$0xff]
      %v447 = vld [vmem:[%s416 + $0xf0] sm:$0xff]
      %v448 = vld [vmem:[%s416 + $0xf8] sm:$0xff]
      %449 = vst [vmem:[#allocation1] ss:$2 sm:$0xff] %v279
      %v450 = vld.sshfl [vmem:[#allocation1] sm:$0xff pattern:$0x75316420]
      %v451 = vld.sshfl [vmem:[#allocation1 + $0x8] sm:$0xff pattern:$0x75316420]
      %454 = vmatpush.msra.mxu0 %v432
      %455 = vmatpush.msra.mxu0 %v431
      %456 = vmatpush.msra.mxu0 %v430
      %457 = vmatpush.msra.mxu0 %v429
      %458 = vmatpush.msra.mxu0 %v428
      %459 = vmatpush.msra.mxu0 %v427
      %460 = vmatpush.msra.mxu0 %v426
      %461 = vmatpush.msra.mxu0 %v425
      %462 = vmatpush.msra.mxu0 %v424
      %463 = vmatpush.msra.mxu0 %v423
      %464 = vmatpush.msra.mxu0 %v422
      %465 = vmatpush.msra.mxu0 %v421
      %466 = vmatpush.msra.mxu0 %v420
      %467 = vmatpush.msra.mxu0 %v419
      %468 = vmatpush.msra.mxu0 %v418
      %469 = vmatpush.msra.mxu0 %v417
      %470 = vmatmul.f32.gmra.mxu0 %v450
      %v471 = vpop.f32.mrf.mxu0
      %v472 = vadd.f32 0.0, %v471
      %473 = vdwg.mxu0
      %474 = vmatpush.msra.mxu0 %v448
      %475 = vmatpush.msra.mxu0 %v447
      %476 = vmatpush.msra.mxu0 %v446
      %477 = vmatpush.msra.mxu0 %v445
      %478 = vmatpush.msra.mxu0 %v444
      %479 = vmatpush.msra.mxu0 %v443
      %480 = vmatpush.msra.mxu0 %v442
      %481 = vmatpush.msra.mxu0 %v441
      %482 = vmatpush.msra.mxu0 %v440
      %483 = vmatpush.msra.mxu0 %v439
      %484 = vmatpush.msra.mxu0 %v438
      %485 = vmatpush.msra.mxu0 %v437
      %486 = vmatpush.msra.mxu0 %v436
      %487 = vmatpush.msra.mxu0 %v435
      %488 = vmatpush.msra.mxu0 %v434
      %489 = vmatpush.msra.mxu0 %v433
      %490 = vmatmul.f32.gmra.mxu0 %v451
      %v491 = vpop.f32.mrf.mxu0
      %v492 = vadd.f32 %v472, %v491
      %493 = vdwg.mxu0
      %s494 = scalar_lea.vmem %s1, 32
      %v495 = vld [vmem:[%s494] sm:$0xff]
      %v496 = vld [vmem:[%s494 + $0x8] sm:$0xff]
      %v497 = vld [vmem:[%s494 + $0x10] sm:$0xff]
      %v498 = vld [vmem:[%s494 + $0x18] sm:$0xff]
      %v500 = vsel %vm366, %v495, 0
      %v503 = vsel %vm366, %v496, 0
      %v506 = vsel %vm366, %v497, 0
      %v509 = vsel %vm366, %v498, 0
      %v512 = vsel %vm379, %v492, 0
      %514 = vmatpush.msra.mxu0 0.0
      %515 = vmatpush.msra.mxu0 0.0
      %516 = vmatpush.msra.mxu0 0.0
      %517 = vmatpush.msra.mxu0 0.0
      %518 = vmatpush.msra.mxu0 0.0
      %519 = vmatpush.msra.mxu0 0.0
      %520 = vmatpush.msra.mxu0 0.0
      %521 = vmatpush.msra.mxu0 0.0
      %522 = vmatpush.msra.mxu0 0.0
      %523 = vmatpush.msra.mxu0 0.0
      %524 = vmatpush.msra.mxu0 0.0
      %525 = vmatpush.msra.mxu0 0.0
      %526 = vmatpush.msra.mxu0 0.0
      %527 = vmatpush.msra.mxu0 0.0
      %528 = vmatpush.msra.mxu0 0.0
      %529 = vmatpush.msra.mxu0 %v512
      %530 = vmatmul.f32.gmra.mxu0 %v500
      %v531 = vpop.f32.mrf.mxu0
      %v532 = vadd.f32 0.0, %v531
      %533 = vmatmul.f32.gmra.mxu0 %v503
      %v534 = vpop.f32.mrf.mxu0
      %v535 = vadd.f32 0.0, %v534
      %536 = vmatmul.f32.gmra.mxu0 %v506
      %v537 = vpop.f32.mrf.mxu0
      %v538 = vadd.f32 0.0, %v537
      %539 = vmatmul.f32.gmra.mxu0 %v509
      %v540 = vpop.f32.mrf.mxu0
      %v541 = vadd.f32 0.0, %v540
      %542 = vdwg.mxu0
      %v543 = vadd.f32 %v412, %v532
      %v544 = vadd.f32 %v413, %v535
      %v545 = vadd.f32 %v414, %v538
      %v546 = vadd.f32 %v415, %v541
      %s547 = scalar_lea.vmem %s3, 512
      %v548 = vld [vmem:[%s547] sm:$0xff]
      %v549 = vld [vmem:[%s547 + $0x8] sm:$0xff]
      %v550 = vld [vmem:[%s547 + $0x10] sm:$0xff]
      %v551 = vld [vmem:[%s547 + $0x18] sm:$0xff]
      %v552 = vld [vmem:[%s547 + $0x20] sm:$0xff]
      %v553 = vld [vmem:[%s547 + $0x28] sm:$0xff]
      %v554 = vld [vmem:[%s547 + $0x30] sm:$0xff]
      %v555 = vld [vmem:[%s547 + $0x38] sm:$0xff]
      %v556 = vld [vmem:[%s547 + $0x40] sm:$0xff]
      %v557 = vld [vmem:[%s547 + $0x48] sm:$0xff]
      %v558 = vld [vmem:[%s547 + $0x50] sm:$0xff]
      %v559 = vld [vmem:[%s547 + $0x58] sm:$0xff]
      %v560 = vld [vmem:[%s547 + $0x60] sm:$0xff]
      %v561 = vld [vmem:[%s547 + $0x68] sm:$0xff]
      %v562 = vld [vmem:[%s547 + $0x70] sm:$0xff]
      %v563 = vld [vmem:[%s547 + $0x78] sm:$0xff]
      %v564 = vld [vmem:[%s547 + $0x80] sm:$0xff]
      %v565 = vld [vmem:[%s547 + $0x88] sm:$0xff]
      %v566 = vld [vmem:[%s547 + $0x90] sm:$0xff]
      %v567 = vld [vmem:[%s547 + $0x98] sm:$0xff]
      %v568 = vld [vmem:[%s547 + $0xa0] sm:$0xff]
      %v569 = vld [vmem:[%s547 + $0xa8] sm:$0xff]
      %v570 = vld [vmem:[%s547 + $0xb0] sm:$0xff]
      %v571 = vld [vmem:[%s547 + $0xb8] sm:$0xff]
      %v572 = vld [vmem:[%s547 + $0xc0] sm:$0xff]
      %v573 = vld [vmem:[%s547 + $0xc8] sm:$0xff]
      %v574 = vld [vmem:[%s547 + $0xd0] sm:$0xff]
      %v575 = vld [vmem:[%s547 + $0xd8] sm:$0xff]
      %v576 = vld [vmem:[%s547 + $0xe0] sm:$0xff]
      %v577 = vld [vmem:[%s547 + $0xe8] sm:$0xff]
      %v578 = vld [vmem:[%s547 + $0xf0] sm:$0xff]
      %v579 = vld [vmem:[%s547 + $0xf8] sm:$0xff]
      %580 = vst [vmem:[#allocation1] ss:$2 sm:$0xff] %v279
      %v581 = vld.sshfl [vmem:[#allocation1] sm:$0xff pattern:$0x75316420]
      %v582 = vld.sshfl [vmem:[#allocation1 + $0x8] sm:$0xff pattern:$0x75316420]
      %585 = vmatpush.msra.mxu0 %v563
      %586 = vmatpush.msra.mxu0 %v562
      %587 = vmatpush.msra.mxu0 %v561
      %588 = vmatpush.msra.mxu0 %v560
      %589 = vmatpush.msra.mxu0 %v559
      %590 = vmatpush.msra.mxu0 %v558
      %591 = vmatpush.msra.mxu0 %v557
      %592 = vmatpush.msra.mxu0 %v556
      %593 = vmatpush.msra.mxu0 %v555
      %594 = vmatpush.msra.mxu0 %v554
      %595 = vmatpush.msra.mxu0 %v553
      %596 = vmatpush.msra.mxu0 %v552
      %597 = vmatpush.msra.mxu0 %v551
      %598 = vmatpush.msra.mxu0 %v550
      %599 = vmatpush.msra.mxu0 %v549
      %600 = vmatpush.msra.mxu0 %v548
      %601 = vmatmul.f32.gmra.mxu0 %v581
      %v602 = vpop.f32.mrf.mxu0
      %v603 = vadd.f32 0.0, %v602
      %604 = vdwg.mxu0
      %605 = vmatpush.msra.mxu0 %v579
      %606 = vmatpush.msra.mxu0 %v578
      %607 = vmatpush.msra.mxu0 %v577
      %608 = vmatpush.msra.mxu0 %v576
      %609 = vmatpush.msra.mxu0 %v575
      %610 = vmatpush.msra.mxu0 %v574
      %611 = vmatpush.msra.mxu0 %v573
      %612 = vmatpush.msra.mxu0 %v572
      %613 = vmatpush.msra.mxu0 %v571
      %614 = vmatpush.msra.mxu0 %v570
      %615 = vmatpush.msra.mxu0 %v569
      %616 = vmatpush.msra.mxu0 %v568
      %617 = vmatpush.msra.mxu0 %v567
      %618 = vmatpush.msra.mxu0 %v566
      %619 = vmatpush.msra.mxu0 %v565
      %620 = vmatpush.msra.mxu0 %v564
      %621 = vmatmul.f32.gmra.mxu0 %v582
      %v622 = vpop.f32.mrf.mxu0
      %v623 = vadd.f32 %v603, %v622
      %624 = vdwg.mxu0
      %s625 = scalar_lea.vmem %s1, 64
      %v626 = vld [vmem:[%s625] sm:$0xff]
      %v627 = vld [vmem:[%s625 + $0x8] sm:$0xff]
      %v628 = vld [vmem:[%s625 + $0x10] sm:$0xff]
      %v629 = vld [vmem:[%s625 + $0x18] sm:$0xff]
      %v631 = vsel %vm366, %v626, 0
      %v634 = vsel %vm366, %v627, 0
      %v637 = vsel %vm366, %v628, 0
      %v640 = vsel %vm366, %v629, 0
      %v643 = vsel %vm379, %v623, 0
      %645 = vmatpush.msra.mxu0 0.0
      %646 = vmatpush.msra.mxu0 0.0
      %647 = vmatpush.msra.mxu0 0.0
      %648 = vmatpush.msra.mxu0 0.0
      %649 = vmatpush.msra.mxu0 0.0
      %650 = vmatpush.msra.mxu0 0.0
      %651 = vmatpush.msra.mxu0 0.0
      %652 = vmatpush.msra.mxu0 0.0
      %653 = vmatpush.msra.mxu0 0.0
      %654 = vmatpush.msra.mxu0 0.0
      %655 = vmatpush.msra.mxu0 0.0
      %656 = vmatpush.msra.mxu0 0.0
      %657 = vmatpush.msra.mxu0 0.0
      %658 = vmatpush.msra.mxu0 0.0
      %659 = vmatpush.msra.mxu0 0.0
      %660 = vmatpush.msra.mxu0 %v643
      %661 = vmatmul.f32.gmra.mxu0 %v631
      %v662 = vpop.f32.mrf.mxu0
      %v663 = vadd.f32 0.0, %v662
      %664 = vmatmul.f32.gmra.mxu0 %v634
      %v665 = vpop.f32.mrf.mxu0
      %v666 = vadd.f32 0.0, %v665
      %667 = vmatmul.f32.gmra.mxu0 %v637
      %v668 = vpop.f32.mrf.mxu0
      %v669 = vadd.f32 0.0, %v668
      %670 = vmatmul.f32.gmra.mxu0 %v640
      %v671 = vpop.f32.mrf.mxu0
      %v672 = vadd.f32 0.0, %v671
      %673 = vdwg.mxu0
      %v674 = vadd.f32 %v543, %v663
      %v675 = vadd.f32 %v544, %v666
      %v676 = vadd.f32 %v545, %v669
      %v677 = vadd.f32 %v546, %v672
      %s678 = scalar_lea.vmem %s3, 768
      %v679 = vld [vmem:[%s678] sm:$0xff]
      %v680 = vld [vmem:[%s678 + $0x8] sm:$0xff]
      %v681 = vld [vmem:[%s678 + $0x10] sm:$0xff]
      %v682 = vld [vmem:[%s678 + $0x18] sm:$0xff]
      %v683 = vld [vmem:[%s678 + $0x20] sm:$0xff]
      %v684 = vld [vmem:[%s678 + $0x28] sm:$0xff]
      %v685 = vld [vmem:[%s678 + $0x30] sm:$0xff]
      %v686 = vld [vmem:[%s678 + $0x38] sm:$0xff]
      %v687 = vld [vmem:[%s678 + $0x40] sm:$0xff]
      %v688 = vld [vmem:[%s678 + $0x48] sm:$0xff]
      %v689 = vld [vmem:[%s678 + $0x50] sm:$0xff]
      %v690 = vld [vmem:[%s678 + $0x58] sm:$0xff]
      %v691 = vld [vmem:[%s678 + $0x60] sm:$0xff]
      %v692 = vld [vmem:[%s678 + $0x68] sm:$0xff]
      %v693 = vld [vmem:[%s678 + $0x70] sm:$0xff]
      %v694 = vld [vmem:[%s678 + $0x78] sm:$0xff]
      %v695 = vld [vmem:[%s678 + $0x80] sm:$0xff]
      %v696 = vld [vmem:[%s678 + $0x88] sm:$0xff]
      %v697 = vld [vmem:[%s678 + $0x90] sm:$0xff]
      %v698 = vld [vmem:[%s678 + $0x98] sm:$0xff]
      %v699 = vld [vmem:[%s678 + $0xa0] sm:$0xff]
      %v700 = vld [vmem:[%s678 + $0xa8] sm:$0xff]
      %v701 = vld [vmem:[%s678 + $0xb0] sm:$0xff]
      %v702 = vld [vmem:[%s678 + $0xb8] sm:$0xff]
      %v703 = vld [vmem:[%s678 + $0xc0] sm:$0xff]
      %v704 = vld [vmem:[%s678 + $0xc8] sm:$0xff]
      %v705 = vld [vmem:[%s678 + $0xd0] sm:$0xff]
      %v706 = vld [vmem:[%s678 + $0xd8] sm:$0xff]
      %v707 = vld [vmem:[%s678 + $0xe0] sm:$0xff]
      %v708 = vld [vmem:[%s678 + $0xe8] sm:$0xff]
      %v709 = vld [vmem:[%s678 + $0xf0] sm:$0xff]
      %v710 = vld [vmem:[%s678 + $0xf8] sm:$0xff]
      %711 = vst [vmem:[#allocation1] ss:$2 sm:$0xff] %v279
      %v712 = vld.sshfl [vmem:[#allocation1] sm:$0xff pattern:$0x75316420]
      %v713 = vld.sshfl [vmem:[#allocation1 + $0x8] sm:$0xff pattern:$0x75316420]
      %716 = vmatpush.msra.mxu0 %v694
      %717 = vmatpush.msra.mxu0 %v693
      %718 = vmatpush.msra.mxu0 %v692
      %719 = vmatpush.msra.mxu0 %v691
      %720 = vmatpush.msra.mxu0 %v690
      %721 = vmatpush.msra.mxu0 %v689
      %722 = vmatpush.msra.mxu0 %v688
      %723 = vmatpush.msra.mxu0 %v687
      %724 = vmatpush.msra.mxu0 %v686
      %725 = vmatpush.msra.mxu0 %v685
      %726 = vmatpush.msra.mxu0 %v684
      %727 = vmatpush.msra.mxu0 %v683
      %728 = vmatpush.msra.mxu0 %v682
      %729 = vmatpush.msra.mxu0 %v681
      %730 = vmatpush.msra.mxu0 %v680
      %731 = vmatpush.msra.mxu0 %v679
      %732 = vmatmul.f32.gmra.mxu0 %v712
      %v733 = vpop.f32.mrf.mxu0
      %v734 = vadd.f32 0.0, %v733
      %735 = vdwg.mxu0
      %736 = vmatpush.msra.mxu0 %v710
      %737 = vmatpush.msra.mxu0 %v709
      %738 = vmatpush.msra.mxu0 %v708
      %739 = vmatpush.msra.mxu0 %v707
      %740 = vmatpush.msra.mxu0 %v706
      %741 = vmatpush.msra.mxu0 %v705
      %742 = vmatpush.msra.mxu0 %v704
      %743 = vmatpush.msra.mxu0 %v703
      %744 = vmatpush.msra.mxu0 %v702
      %745 = vmatpush.msra.mxu0 %v701
      %746 = vmatpush.msra.mxu0 %v700
      %747 = vmatpush.msra.mxu0 %v699
      %748 = vmatpush.msra.mxu0 %v698
      %749 = vmatpush.msra.mxu0 %v697
      %750 = vmatpush.msra.mxu0 %v696
      %751 = vmatpush.msra.mxu0 %v695
      %752 = vmatmul.f32.gmra.mxu0 %v713
      %v753 = vpop.f32.mrf.mxu0
      %v754 = vadd.f32 %v734, %v753
      %755 = vdwg.mxu0
      %s756 = scalar_lea.vmem %s1, 96
      %v757 = vld [vmem:[%s756] sm:$0xff]
      %v758 = vld [vmem:[%s756 + $0x8] sm:$0xff]
      %v759 = vld [vmem:[%s756 + $0x10] sm:$0xff]
      %v760 = vld [vmem:[%s756 + $0x18] sm:$0xff]
      %v762 = vsel %vm366, %v757, 0
      %v765 = vsel %vm366, %v758, 0
      %v768 = vsel %vm366, %v759, 0
      %v771 = vsel %vm366, %v760, 0
      %v774 = vsel %vm379, %v754, 0
      %776 = vmatpush.msra.mxu0 0.0
      %777 = vmatpush.msra.mxu0 0.0
      %778 = vmatpush.msra.mxu0 0.0
      %779 = vmatpush.msra.mxu0 0.0
      %780 = vmatpush.msra.mxu0 0.0
      %781 = vmatpush.msra.mxu0 0.0
      %782 = vmatpush.msra.mxu0 0.0
      %783 = vmatpush.msra.mxu0 0.0
      %784 = vmatpush.msra.mxu0 0.0
      %785 = vmatpush.msra.mxu0 0.0
      %786 = vmatpush.msra.mxu0 0.0
      %787 = vmatpush.msra.mxu0 0.0
      %788 = vmatpush.msra.mxu0 0.0
      %789 = vmatpush.msra.mxu0 0.0
      %790 = vmatpush.msra.mxu0 0.0
      %791 = vmatpush.msra.mxu0 %v774
      %792 = vmatmul.f32.gmra.mxu0 %v762
      %v793 = vpop.f32.mrf.mxu0
      %v794 = vadd.f32 0.0, %v793
      %795 = vmatmul.f32.gmra.mxu0 %v765
      %v796 = vpop.f32.mrf.mxu0
      %v797 = vadd.f32 0.0, %v796
      %798 = vmatmul.f32.gmra.mxu0 %v768
      %v799 = vpop.f32.mrf.mxu0
      %v800 = vadd.f32 0.0, %v799
      %801 = vmatmul.f32.gmra.mxu0 %v771
      %v802 = vpop.f32.mrf.mxu0
      %v803 = vadd.f32 0.0, %v802
      %804 = vdwg.mxu0
      %v805 = vadd.f32 %v674, %v794
      %v806 = vadd.f32 %v675, %v797
      %v807 = vadd.f32 %v676, %v800
      %v808 = vadd.f32 %v677, %v803
      %s809 = scalar_lea.vmem %s3, 1024
      %v810 = vld [vmem:[%s809] sm:$0xff]
      %v811 = vld [vmem:[%s809 + $0x8] sm:$0xff]
      %v812 = vld [vmem:[%s809 + $0x10] sm:$0xff]
      %v813 = vld [vmem:[%s809 + $0x18] sm:$0xff]
      %v814 = vld [vmem:[%s809 + $0x20] sm:$0xff]
      %v815 = vld [vmem:[%s809 + $0x28] sm:$0xff]
      %v816 = vld [vmem:[%s809 + $0x30] sm:$0xff]
      %v817 = vld [vmem:[%s809 + $0x38] sm:$0xff]
      %v818 = vld [vmem:[%s809 + $0x40] sm:$0xff]
      %v819 = vld [vmem:[%s809 + $0x48] sm:$0xff]
      %v820 = vld [vmem:[%s809 + $0x50] sm:$0xff]
      %v821 = vld [vmem:[%s809 + $0x58] sm:$0xff]
      %v822 = vld [vmem:[%s809 + $0x60] sm:$0xff]
      %v823 = vld [vmem:[%s809 + $0x68] sm:$0xff]
      %v824 = vld [vmem:[%s809 + $0x70] sm:$0xff]
      %v825 = vld [vmem:[%s809 + $0x78] sm:$0xff]
      %v826 = vld [vmem:[%s809 + $0x80] sm:$0xff]
      %v827 = vld [vmem:[%s809 + $0x88] sm:$0xff]
      %v828 = vld [vmem:[%s809 + $0x90] sm:$0xff]
      %v829 = vld [vmem:[%s809 + $0x98] sm:$0xff]
      %v830 = vld [vmem:[%s809 + $0xa0] sm:$0xff]
      %v831 = vld [vmem:[%s809 + $0xa8] sm:$0xff]
      %v832 = vld [vmem:[%s809 + $0xb0] sm:$0xff]
      %v833 = vld [vmem:[%s809 + $0xb8] sm:$0xff]
      %v834 = vld [vmem:[%s809 + $0xc0] sm:$0xff]
      %v835 = vld [vmem:[%s809 + $0xc8] sm:$0xff]
      %v836 = vld [vmem:[%s809 + $0xd0] sm:$0xff]
      %v837 = vld [vmem:[%s809 + $0xd8] sm:$0xff]
      %v838 = vld [vmem:[%s809 + $0xe0] sm:$0xff]
      %v839 = vld [vmem:[%s809 + $0xe8] sm:$0xff]
      %v840 = vld [vmem:[%s809 + $0xf0] sm:$0xff]
      %v841 = vld [vmem:[%s809 + $0xf8] sm:$0xff]
      %842 = vst [vmem:[#allocation1] ss:$2 sm:$0xff] %v279
      %v843 = vld.sshfl [vmem:[#allocation1] sm:$0xff pattern:$0x75316420]
      %v844 = vld.sshfl [vmem:[#allocation1 + $0x8] sm:$0xff pattern:$0x75316420]
      %847 = vmatpush.msra.mxu0 %v825
      %848 = vmatpush.msra.mxu0 %v824
      %849 = vmatpush.msra.mxu0 %v823
      %850 = vmatpush.msra.mxu0 %v822
      %851 = vmatpush.msra.mxu0 %v821
      %852 = vmatpush.msra.mxu0 %v820
      %853 = vmatpush.msra.mxu0 %v819
      %854 = vmatpush.msra.mxu0 %v818
      %855 = vmatpush.msra.mxu0 %v817
      %856 = vmatpush.msra.mxu0 %v816
      %857 = vmatpush.msra.mxu0 %v815
      %858 = vmatpush.msra.mxu0 %v814
      %859 = vmatpush.msra.mxu0 %v813
      %860 = vmatpush.msra.mxu0 %v812
      %861 = vmatpush.msra.mxu0 %v811
      %862 = vmatpush.msra.mxu0 %v810
      %863 = vmatmul.f32.gmra.mxu0 %v843
      %v864 = vpop.f32.mrf.mxu0
      %v865 = vadd.f32 0.0, %v864
      %866 = vdwg.mxu0
      %867 = vmatpush.msra.mxu0 %v841
      %868 = vmatpush.msra.mxu0 %v840
      %869 = vmatpush.msra.mxu0 %v839
      %870 = vmatpush.msra.mxu0 %v838
      %871 = vmatpush.msra.mxu0 %v837
      %872 = vmatpush.msra.mxu0 %v836
      %873 = vmatpush.msra.mxu0 %v835
      %874 = vmatpush.msra.mxu0 %v834
      %875 = vmatpush.msra.mxu0 %v833
      %876 = vmatpush.msra.mxu0 %v832
      %877 = vmatpush.msra.mxu0 %v831
      %878 = vmatpush.msra.mxu0 %v830
      %879 = vmatpush.msra.mxu0 %v829
      %880 = vmatpush.msra.mxu0 %v828
      %881 = vmatpush.msra.mxu0 %v827
      %882 = vmatpush.msra.mxu0 %v826
      %883 = vmatmul.f32.gmra.mxu0 %v844
      %v884 = vpop.f32.mrf.mxu0
      %v885 = vadd.f32 %v865, %v884
      %886 = vdwg.mxu0
      %s887 = scalar_lea.vmem %s1, 128
      %v888 = vld [vmem:[%s887] sm:$0xff]
      %v889 = vld [vmem:[%s887 + $0x8] sm:$0xff]
      %v890 = vld [vmem:[%s887 + $0x10] sm:$0xff]
      %v891 = vld [vmem:[%s887 + $0x18] sm:$0xff]
      %v893 = vsel %vm366, %v888, 0
      %v896 = vsel %vm366, %v889, 0
      %v899 = vsel %vm366, %v890, 0
      %v902 = vsel %vm366, %v891, 0
      %v905 = vsel %vm379, %v885, 0
      %907 = vmatpush.msra.mxu0 0.0
      %908 = vmatpush.msra.mxu0 0.0
      %909 = vmatpush.msra.mxu0 0.0
      %910 = vmatpush.msra.mxu0 0.0
      %911 = vmatpush.msra.mxu0 0.0
      %912 = vmatpush.msra.mxu0 0.0
      %913 = vmatpush.msra.mxu0 0.0
      %914 = vmatpush.msra.mxu0 0.0
      %915 = vmatpush.msra.mxu0 0.0
      %916 = vmatpush.msra.mxu0 0.0
      %917 = vmatpush.msra.mxu0 0.0
      %918 = vmatpush.msra.mxu0 0.0
      %919 = vmatpush.msra.mxu0 0.0
      %920 = vmatpush.msra.mxu0 0.0
      %921 = vmatpush.msra.mxu0 0.0
      %922 = vmatpush.msra.mxu0 %v905
      %923 = vmatmul.f32.gmra.mxu0 %v893
      %v924 = vpop.f32.mrf.mxu0
      %v925 = vadd.f32 0.0, %v924
      %926 = vmatmul.f32.gmra.mxu0 %v896
      %v927 = vpop.f32.mrf.mxu0
      %v928 = vadd.f32 0.0, %v927
      %929 = vmatmul.f32.gmra.mxu0 %v899
      %v930 = vpop.f32.mrf.mxu0
      %v931 = vadd.f32 0.0, %v930
      %932 = vmatmul.f32.gmra.mxu0 %v902
      %v933 = vpop.f32.mrf.mxu0
      %v934 = vadd.f32 0.0, %v933
      %935 = vdwg.mxu0
      %v936 = vadd.f32 %v805, %v925
      %v937 = vadd.f32 %v806, %v928
      %v938 = vadd.f32 %v807, %v931
      %v939 = vadd.f32 %v808, %v934
      %s940 = scalar_lea.vmem %s3, 1280
      %v941 = vld [vmem:[%s940] sm:$0xff]
      %v942 = vld [vmem:[%s940 + $0x8] sm:$0xff]
      %v943 = vld [vmem:[%s940 + $0x10] sm:$0xff]
      %v944 = vld [vmem:[%s940 + $0x18] sm:$0xff]
      %v945 = vld [vmem:[%s940 + $0x20] sm:$0xff]
      %v946 = vld [vmem:[%s940 + $0x28] sm:$0xff]
      %v947 = vld [vmem:[%s940 + $0x30] sm:$0xff]
      %v948 = vld [vmem:[%s940 + $0x38] sm:$0xff]
      %v949 = vld [vmem:[%s940 + $0x40] sm:$0xff]
      %v950 = vld [vmem:[%s940 + $0x48] sm:$0xff]
      %v951 = vld [vmem:[%s940 + $0x50] sm:$0xff]
      %v952 = vld [vmem:[%s940 + $0x58] sm:$0xff]
      %v953 = vld [vmem:[%s940 + $0x60] sm:$0xff]
      %v954 = vld [vmem:[%s940 + $0x68] sm:$0xff]
      %v955 = vld [vmem:[%s940 + $0x70] sm:$0xff]
      %v956 = vld [vmem:[%s940 + $0x78] sm:$0xff]
      %v957 = vld [vmem:[%s940 + $0x80] sm:$0xff]
      %v958 = vld [vmem:[%s940 + $0x88] sm:$0xff]
      %v959 = vld [vmem:[%s940 + $0x90] sm:$0xff]
      %v960 = vld [vmem:[%s940 + $0x98] sm:$0xff]
      %v961 = vld [vmem:[%s940 + $0xa0] sm:$0xff]
      %v962 = vld [vmem:[%s940 + $0xa8] sm:$0xff]
      %v963 = vld [vmem:[%s940 + $0xb0] sm:$0xff]
      %v964 = vld [vmem:[%s940 + $0xb8] sm:$0xff]
      %v965 = vld [vmem:[%s940 + $0xc0] sm:$0xff]
      %v966 = vld [vmem:[%s940 + $0xc8] sm:$0xff]
      %v967 = vld [vmem:[%s940 + $0xd0] sm:$0xff]
      %v968 = vld [vmem:[%s940 + $0xd8] sm:$0xff]
      %v969 = vld [vmem:[%s940 + $0xe0] sm:$0xff]
      %v970 = vld [vmem:[%s940 + $0xe8] sm:$0xff]
      %v971 = vld [vmem:[%s940 + $0xf0] sm:$0xff]
      %v972 = vld [vmem:[%s940 + $0xf8] sm:$0xff]
      %973 = vst [vmem:[#allocation1] ss:$2 sm:$0xff] %v279
      %v974 = vld.sshfl [vmem:[#allocation1] sm:$0xff pattern:$0x75316420]
      %v975 = vld.sshfl [vmem:[#allocation1 + $0x8] sm:$0xff pattern:$0x75316420]
      %978 = vmatpush.msra.mxu0 %v956
      %979 = vmatpush.msra.mxu0 %v955
      %980 = vmatpush.msra.mxu0 %v954
      %981 = vmatpush.msra.mxu0 %v953
      %982 = vmatpush.msra.mxu0 %v952
      %983 = vmatpush.msra.mxu0 %v951
      %984 = vmatpush.msra.mxu0 %v950
      %985 = vmatpush.msra.mxu0 %v949
      %986 = vmatpush.msra.mxu0 %v948
      %987 = vmatpush.msra.mxu0 %v947
      %988 = vmatpush.msra.mxu0 %v946
      %989 = vmatpush.msra.mxu0 %v945
      %990 = vmatpush.msra.mxu0 %v944
      %991 = vmatpush.msra.mxu0 %v943
      %992 = vmatpush.msra.mxu0 %v942
      %993 = vmatpush.msra.mxu0 %v941
      %994 = vmatmul.f32.gmra.mxu0 %v974
      %v995 = vpop.f32.mrf.mxu0
      %v996 = vadd.f32 0.0, %v995
      %997 = vdwg.mxu0
      %998 = vmatpush.msra.mxu0 %v972
      %999 = vmatpush.msra.mxu0 %v971
      %1000 = vmatpush.msra.mxu0 %v970
      %1001 = vmatpush.msra.mxu0 %v969
      %1002 = vmatpush.msra.mxu0 %v968
      %1003 = vmatpush.msra.mxu0 %v967
      %1004 = vmatpush.msra.mxu0 %v966
      %1005 = vmatpush.msra.mxu0 %v965
      %1006 = vmatpush.msra.mxu0 %v964
      %1007 = vmatpush.msra.mxu0 %v963
      %1008 = vmatpush.msra.mxu0 %v962
      %1009 = vmatpush.msra.mxu0 %v961
      %1010 = vmatpush.msra.mxu0 %v960
      %1011 = vmatpush.msra.mxu0 %v959
      %1012 = vmatpush.msra.mxu0 %v958
      %1013 = vmatpush.msra.mxu0 %v957
      %1014 = vmatmul.f32.gmra.mxu0 %v975
      %v1015 = vpop.f32.mrf.mxu0
      %v1016 = vadd.f32 %v996, %v1015
      %1017 = vdwg.mxu0
      %s1018 = scalar_lea.vmem %s1, 160
      %v1019 = vld [vmem:[%s1018] sm:$0xff]
      %v1020 = vld [vmem:[%s1018 + $0x8] sm:$0xff]
      %v1021 = vld [vmem:[%s1018 + $0x10] sm:$0xff]
      %v1022 = vld [vmem:[%s1018 + $0x18] sm:$0xff]
      %v1024 = vsel %vm366, %v1019, 0
      %v1027 = vsel %vm366, %v1020, 0
      %v1030 = vsel %vm366, %v1021, 0
      %v1033 = vsel %vm366, %v1022, 0
      %v1036 = vsel %vm379, %v1016, 0
      %1038 = vmatpush.msra.mxu0 0.0
      %1039 = vmatpush.msra.mxu0 0.0
      %1040 = vmatpush.msra.mxu0 0.0
      %1041 = vmatpush.msra.mxu0 0.0
      %1042 = vmatpush.msra.mxu0 0.0
      %1043 = vmatpush.msra.mxu0 0.0
      %1044 = vmatpush.msra.mxu0 0.0
      %1045 = vmatpush.msra.mxu0 0.0
      %1046 = vmatpush.msra.mxu0 0.0
      %1047 = vmatpush.msra.mxu0 0.0
      %1048 = vmatpush.msra.mxu0 0.0
      %1049 = vmatpush.msra.mxu0 0.0
      %1050 = vmatpush.msra.mxu0 0.0
      %1051 = vmatpush.msra.mxu0 0.0
      %1052 = vmatpush.msra.mxu0 0.0
      %1053 = vmatpush.msra.mxu0 %v1036
      %1054 = vmatmul.f32.gmra.mxu0 %v1024
      %v1055 = vpop.f32.mrf.mxu0
      %v1056 = vadd.f32 0.0, %v1055
      %1057 = vmatmul.f32.gmra.mxu0 %v1027
      %v1058 = vpop.f32.mrf.mxu0
      %v1059 = vadd.f32 0.0, %v1058
      %1060 = vmatmul.f32.gmra.mxu0 %v1030
      %v1061 = vpop.f32.mrf.mxu0
      %v1062 = vadd.f32 0.0, %v1061
      %1063 = vmatmul.f32.gmra.mxu0 %v1033
      %v1064 = vpop.f32.mrf.mxu0
      %v1065 = vadd.f32 0.0, %v1064
      %1066 = vdwg.mxu0
      %v1067 = vadd.f32 %v936, %v1056
      %v1068 = vadd.f32 %v937, %v1059
      %v1069 = vadd.f32 %v938, %v1062
      %v1070 = vadd.f32 %v939, %v1065
      %s1071 = scalar_lea.vmem %s3, 1536
      %v1072 = vld [vmem:[%s1071] sm:$0xff]
      %v1073 = vld [vmem:[%s1071 + $0x8] sm:$0xff]
      %v1074 = vld [vmem:[%s1071 + $0x10] sm:$0xff]
      %v1075 = vld [vmem:[%s1071 + $0x18] sm:$0xff]
      %v1076 = vld [vmem:[%s1071 + $0x20] sm:$0xff]
      %v1077 = vld [vmem:[%s1071 + $0x28] sm:$0xff]
      %v1078 = vld [vmem:[%s1071 + $0x30] sm:$0xff]
      %v1079 = vld [vmem:[%s1071 + $0x38] sm:$0xff]
      %v1080 = vld [vmem:[%s1071 + $0x40] sm:$0xff]
      %v1081 = vld [vmem:[%s1071 + $0x48] sm:$0xff]
      %v1082 = vld [vmem:[%s1071 + $0x50] sm:$0xff]
      %v1083 = vld [vmem:[%s1071 + $0x58] sm:$0xff]
      %v1084 = vld [vmem:[%s1071 + $0x60] sm:$0xff]
      %v1085 = vld [vmem:[%s1071 + $0x68] sm:$0xff]
      %v1086 = vld [vmem:[%s1071 + $0x70] sm:$0xff]
      %v1087 = vld [vmem:[%s1071 + $0x78] sm:$0xff]
      %v1088 = vld [vmem:[%s1071 + $0x80] sm:$0xff]
      %v1089 = vld [vmem:[%s1071 + $0x88] sm:$0xff]
      %v1090 = vld [vmem:[%s1071 + $0x90] sm:$0xff]
      %v1091 = vld [vmem:[%s1071 + $0x98] sm:$0xff]
      %v1092 = vld [vmem:[%s1071 + $0xa0] sm:$0xff]
      %v1093 = vld [vmem:[%s1071 + $0xa8] sm:$0xff]
      %v1094 = vld [vmem:[%s1071 + $0xb0] sm:$0xff]
      %v1095 = vld [vmem:[%s1071 + $0xb8] sm:$0xff]
      %v1096 = vld [vmem:[%s1071 + $0xc0] sm:$0xff]
      %v1097 = vld [vmem:[%s1071 + $0xc8] sm:$0xff]
      %v1098 = vld [vmem:[%s1071 + $0xd0] sm:$0xff]
      %v1099 = vld [vmem:[%s1071 + $0xd8] sm:$0xff]
      %v1100 = vld [vmem:[%s1071 + $0xe0] sm:$0xff]
      %v1101 = vld [vmem:[%s1071 + $0xe8] sm:$0xff]
      %v1102 = vld [vmem:[%s1071 + $0xf0] sm:$0xff]
      %v1103 = vld [vmem:[%s1071 + $0xf8] sm:$0xff]
      %1104 = vst [vmem:[#allocation1] ss:$2 sm:$0xff] %v279
      %v1105 = vld.sshfl [vmem:[#allocation1] sm:$0xff pattern:$0x75316420]
      %v1106 = vld.sshfl [vmem:[#allocation1 + $0x8] sm:$0xff pattern:$0x75316420]
      %1109 = vmatpush.msra.mxu0 %v1087
      %1110 = vmatpush.msra.mxu0 %v1086
      %1111 = vmatpush.msra.mxu0 %v1085
      %1112 = vmatpush.msra.mxu0 %v1084
      %1113 = vmatpush.msra.mxu0 %v1083
      %1114 = vmatpush.msra.mxu0 %v1082
      %1115 = vmatpush.msra.mxu0 %v1081
      %1116 = vmatpush.msra.mxu0 %v1080
      %1117 = vmatpush.msra.mxu0 %v1079
      %1118 = vmatpush.msra.mxu0 %v1078
      %1119 = vmatpush.msra.mxu0 %v1077
      %1120 = vmatpush.msra.mxu0 %v1076
      %1121 = vmatpush.msra.mxu0 %v1075
      %1122 = vmatpush.msra.mxu0 %v1074
      %1123 = vmatpush.msra.mxu0 %v1073
      %1124 = vmatpush.msra.mxu0 %v1072
      %1125 = vmatmul.f32.gmra.mxu0 %v1105
      %v1126 = vpop.f32.mrf.mxu0
      %v1127 = vadd.f32 0.0, %v1126
      %1128 = vdwg.mxu0
      %1129 = vmatpush.msra.mxu0 %v1103
      %1130 = vmatpush.msra.mxu0 %v1102
      %1131 = vmatpush.msra.mxu0 %v1101
      %1132 = vmatpush.msra.mxu0 %v1100
      %1133 = vmatpush.msra.mxu0 %v1099
      %1134 = vmatpush.msra.mxu0 %v1098
      %1135 = vmatpush.msra.mxu0 %v1097
      %1136 = vmatpush.msra.mxu0 %v1096
      %1137 = vmatpush.msra.mxu0 %v1095
      %1138 = vmatpush.msra.mxu0 %v1094
      %1139 = vmatpush.msra.mxu0 %v1093
      %1140 = vmatpush.msra.mxu0 %v1092
      %1141 = vmatpush.msra.mxu0 %v1091
      %1142 = vmatpush.msra.mxu0 %v1090
      %1143 = vmatpush.msra.mxu0 %v1089
      %1144 = vmatpush.msra.mxu0 %v1088
      %1145 = vmatmul.f32.gmra.mxu0 %v1106
      %v1146 = vpop.f32.mrf.mxu0
      %v1147 = vadd.f32 %v1127, %v1146
      %1148 = vdwg.mxu0
      %s1149 = scalar_lea.vmem %s1, 192
      %v1150 = vld [vmem:[%s1149] sm:$0xff]
      %v1151 = vld [vmem:[%s1149 + $0x8] sm:$0xff]
      %v1152 = vld [vmem:[%s1149 + $0x10] sm:$0xff]
      %v1153 = vld [vmem:[%s1149 + $0x18] sm:$0xff]
      %v1155 = vsel %vm366, %v1150, 0
      %v1158 = vsel %vm366, %v1151, 0
      %v1161 = vsel %vm366, %v1152, 0
      %v1164 = vsel %vm366, %v1153, 0
      %v1167 = vsel %vm379, %v1147, 0
      %1169 = vmatpush.msra.mxu0 0.0
      %1170 = vmatpush.msra.mxu0 0.0
      %1171 = vmatpush.msra.mxu0 0.0
      %1172 = vmatpush.msra.mxu0 0.0
      %1173 = vmatpush.msra.mxu0 0.0
      %1174 = vmatpush.msra.mxu0 0.0
      %1175 = vmatpush.msra.mxu0 0.0
      %1176 = vmatpush.msra.mxu0 0.0
      %1177 = vmatpush.msra.mxu0 0.0
      %1178 = vmatpush.msra.mxu0 0.0
      %1179 = vmatpush.msra.mxu0 0.0
      %1180 = vmatpush.msra.mxu0 0.0
      %1181 = vmatpush.msra.mxu0 0.0
      %1182 = vmatpush.msra.mxu0 0.0
      %1183 = vmatpush.msra.mxu0 0.0
      %1184 = vmatpush.msra.mxu0 %v1167
      %1185 = vmatmul.f32.gmra.mxu0 %v1155
      %v1186 = vpop.f32.mrf.mxu0
      %v1187 = vadd.f32 0.0, %v1186
      %1188 = vmatmul.f32.gmra.mxu0 %v1158
      %v1189 = vpop.f32.mrf.mxu0
      %v1190 = vadd.f32 0.0, %v1189
      %1191 = vmatmul.f32.gmra.mxu0 %v1161
      %v1192 = vpop.f32.mrf.mxu0
      %v1193 = vadd.f32 0.0, %v1192
      %1194 = vmatmul.f32.gmra.mxu0 %v1164
      %v1195 = vpop.f32.mrf.mxu0
      %v1196 = vadd.f32 0.0, %v1195
      %1197 = vdwg.mxu0
      %v1198 = vadd.f32 %v1067, %v1187
      %v1199 = vadd.f32 %v1068, %v1190
      %v1200 = vadd.f32 %v1069, %v1193
      %v1201 = vadd.f32 %v1070, %v1196
      %s1202 = scalar_lea.vmem %s3, 1792
      %v1203 = vld [vmem:[%s1202] sm:$0xff]
      %v1204 = vld [vmem:[%s1202 + $0x8] sm:$0xff]
      %v1205 = vld [vmem:[%s1202 + $0x10] sm:$0xff]
      %v1206 = vld [vmem:[%s1202 + $0x18] sm:$0xff]
      %v1207 = vld [vmem:[%s1202 + $0x20] sm:$0xff]
      %v1208 = vld [vmem:[%s1202 + $0x28] sm:$0xff]
      %v1209 = vld [vmem:[%s1202 + $0x30] sm:$0xff]
      %v1210 = vld [vmem:[%s1202 + $0x38] sm:$0xff]
      %v1211 = vld [vmem:[%s1202 + $0x40] sm:$0xff]
      %v1212 = vld [vmem:[%s1202 + $0x48] sm:$0xff]
      %v1213 = vld [vmem:[%s1202 + $0x50] sm:$0xff]
      %v1214 = vld [vmem:[%s1202 + $0x58] sm:$0xff]
      %v1215 = vld [vmem:[%s1202 + $0x60] sm:$0xff]
      %v1216 = vld [vmem:[%s1202 + $0x68] sm:$0xff]
      %v1217 = vld [vmem:[%s1202 + $0x70] sm:$0xff]
      %v1218 = vld [vmem:[%s1202 + $0x78] sm:$0xff]
      %v1219 = vld [vmem:[%s1202 + $0x80] sm:$0xff]
      %v1220 = vld [vmem:[%s1202 + $0x88] sm:$0xff]
      %v1221 = vld [vmem:[%s1202 + $0x90] sm:$0xff]
      %v1222 = vld [vmem:[%s1202 + $0x98] sm:$0xff]
      %v1223 = vld [vmem:[%s1202 + $0xa0] sm:$0xff]
      %v1224 = vld [vmem:[%s1202 + $0xa8] sm:$0xff]
      %v1225 = vld [vmem:[%s1202 + $0xb0] sm:$0xff]
      %v1226 = vld [vmem:[%s1202 + $0xb8] sm:$0xff]
      %v1227 = vld [vmem:[%s1202 + $0xc0] sm:$0xff]
      %v1228 = vld [vmem:[%s1202 + $0xc8] sm:$0xff]
      %v1229 = vld [vmem:[%s1202 + $0xd0] sm:$0xff]
      %v1230 = vld [vmem:[%s1202 + $0xd8] sm:$0xff]
      %v1231 = vld [vmem:[%s1202 + $0xe0] sm:$0xff]
      %v1232 = vld [vmem:[%s1202 + $0xe8] sm:$0xff]
      %v1233 = vld [vmem:[%s1202 + $0xf0] sm:$0xff]
      %v1234 = vld [vmem:[%s1202 + $0xf8] sm:$0xff]
      %1235 = vst [vmem:[#allocation1] ss:$2 sm:$0xff] %v279
      %v1236 = vld.sshfl [vmem:[#allocation1] sm:$0xff pattern:$0x75316420]
      %v1237 = vld.sshfl [vmem:[#allocation1 + $0x8] sm:$0xff pattern:$0x75316420]
      %1240 = vmatpush.msra.mxu0 %v1218
      %1241 = vmatpush.msra.mxu0 %v1217
      %1242 = vmatpush.msra.mxu0 %v1216
      %1243 = vmatpush.msra.mxu0 %v1215
      %1244 = vmatpush.msra.mxu0 %v1214
      %1245 = vmatpush.msra.mxu0 %v1213
      %1246 = vmatpush.msra.mxu0 %v1212
      %1247 = vmatpush.msra.mxu0 %v1211
      %1248 = vmatpush.msra.mxu0 %v1210
      %1249 = vmatpush.msra.mxu0 %v1209
      %1250 = vmatpush.msra.mxu0 %v1208
      %1251 = vmatpush.msra.mxu0 %v1207
      %1252 = vmatpush.msra.mxu0 %v1206
      %1253 = vmatpush.msra.mxu0 %v1205
      %1254 = vmatpush.msra.mxu0 %v1204
      %1255 = vmatpush.msra.mxu0 %v1203
      %1256 = vmatmul.f32.gmra.mxu0 %v1236
      %v1257 = vpop.f32.mrf.mxu0
      %v1258 = vadd.f32 0.0, %v1257
      %1259 = vdwg.mxu0
      %1260 = vmatpush.msra.mxu0 %v1234
      %1261 = vmatpush.msra.mxu0 %v1233
      %1262 = vmatpush.msra.mxu0 %v1232
      %1263 = vmatpush.msra.mxu0 %v1231
      %1264 = vmatpush.msra.mxu0 %v1230
      %1265 = vmatpush.msra.mxu0 %v1229
      %1266 = vmatpush.msra.mxu0 %v1228
      %1267 = vmatpush.msra.mxu0 %v1227
      %1268 = vmatpush.msra.mxu0 %v1226
      %1269 = vmatpush.msra.mxu0 %v1225
      %1270 = vmatpush.msra.mxu0 %v1224
      %1271 = vmatpush.msra.mxu0 %v1223
      %1272 = vmatpush.msra.mxu0 %v1222
      %1273 = vmatpush.msra.mxu0 %v1221
      %1274 = vmatpush.msra.mxu0 %v1220
      %1275 = vmatpush.msra.mxu0 %v1219
      %1276 = vmatmul.f32.gmra.mxu0 %v1237
      %v1277 = vpop.f32.mrf.mxu0
      %v1278 = vadd.f32 %v1258, %v1277
      %1279 = vdwg.mxu0
      %s1280 = scalar_lea.vmem %s1, 224
      %v1281 = vld [vmem:[%s1280] sm:$0xff]
      %v1282 = vld [vmem:[%s1280 + $0x8] sm:$0xff]
      %v1283 = vld [vmem:[%s1280 + $0x10] sm:$0xff]
      %v1284 = vld [vmem:[%s1280 + $0x18] sm:$0xff]
      %v1286 = vsel %vm366, %v1281, 0
      %v1289 = vsel %vm366, %v1282, 0
      %v1292 = vsel %vm366, %v1283, 0
      %v1295 = vsel %vm366, %v1284, 0
      %v1298 = vsel %vm379, %v1278, 0
      %1300 = vmatpush.msra.mxu0 0.0
      %1301 = vmatpush.msra.mxu0 0.0
      %1302 = vmatpush.msra.mxu0 0.0
      %1303 = vmatpush.msra.mxu0 0.0
      %1304 = vmatpush.msra.mxu0 0.0
      %1305 = vmatpush.msra.mxu0 0.0
      %1306 = vmatpush.msra.mxu0 0.0
      %1307 = vmatpush.msra.mxu0 0.0
      %1308 = vmatpush.msra.mxu0 0.0
      %1309 = vmatpush.msra.mxu0 0.0
      %1310 = vmatpush.msra.mxu0 0.0
      %1311 = vmatpush.msra.mxu0 0.0
      %1312 = vmatpush.msra.mxu0 0.0
      %1313 = vmatpush.msra.mxu0 0.0
      %1314 = vmatpush.msra.mxu0 0.0
      %1315 = vmatpush.msra.mxu0 %v1298
      %1316 = vmatmul.f32.gmra.mxu0 %v1286
      %v1317 = vpop.f32.mrf.mxu0
      %v1318 = vadd.f32 0.0, %v1317
      %1319 = vmatmul.f32.gmra.mxu0 %v1289
      %v1320 = vpop.f32.mrf.mxu0
      %v1321 = vadd.f32 0.0, %v1320
      %1322 = vmatmul.f32.gmra.mxu0 %v1292
      %v1323 = vpop.f32.mrf.mxu0
      %v1324 = vadd.f32 0.0, %v1323
      %1325 = vmatmul.f32.gmra.mxu0 %v1295
      %v1326 = vpop.f32.mrf.mxu0
      %v1327 = vadd.f32 0.0, %v1326
      %1328 = vdwg.mxu0
      %v1329 = vadd.f32 %v1198, %v1318
      %v1330 = vadd.f32 %v1199, %v1321
      %v1331 = vadd.f32 %v1200, %v1324
      %v1332 = vadd.f32 %v1201, %v1327
      %s1333 = scalar_lea.vmem %s3, 2048
      %v1334 = vld [vmem:[%s1333] sm:$0xff]
      %v1335 = vld [vmem:[%s1333 + $0x8] sm:$0xff]
      %v1336 = vld [vmem:[%s1333 + $0x10] sm:$0xff]
      %v1337 = vld [vmem:[%s1333 + $0x18] sm:$0xff]
      %v1338 = vld [vmem:[%s1333 + $0x20] sm:$0xff]
      %v1339 = vld [vmem:[%s1333 + $0x28] sm:$0xff]
      %v1340 = vld [vmem:[%s1333 + $0x30] sm:$0xff]
      %v1341 = vld [vmem:[%s1333 + $0x38] sm:$0xff]
      %v1342 = vld [vmem:[%s1333 + $0x40] sm:$0xff]
      %v1343 = vld [vmem:[%s1333 + $0x48] sm:$0xff]
      %v1344 = vld [vmem:[%s1333 + $0x50] sm:$0xff]
      %v1345 = vld [vmem:[%s1333 + $0x58] sm:$0xff]
      %v1346 = vld [vmem:[%s1333 + $0x60] sm:$0xff]
      %v1347 = vld [vmem:[%s1333 + $0x68] sm:$0xff]
      %v1348 = vld [vmem:[%s1333 + $0x70] sm:$0xff]
      %v1349 = vld [vmem:[%s1333 + $0x78] sm:$0xff]
      %v1350 = vld [vmem:[%s1333 + $0x80] sm:$0xff]
      %v1351 = vld [vmem:[%s1333 + $0x88] sm:$0xff]
      %v1352 = vld [vmem:[%s1333 + $0x90] sm:$0xff]
      %v1353 = vld [vmem:[%s1333 + $0x98] sm:$0xff]
      %v1354 = vld [vmem:[%s1333 + $0xa0] sm:$0xff]
      %v1355 = vld [vmem:[%s1333 + $0xa8] sm:$0xff]
      %v1356 = vld [vmem:[%s1333 + $0xb0] sm:$0xff]
      %v1357 = vld [vmem:[%s1333 + $0xb8] sm:$0xff]
      %v1358 = vld [vmem:[%s1333 + $0xc0] sm:$0xff]
      %v1359 = vld [vmem:[%s1333 + $0xc8] sm:$0xff]
      %v1360 = vld [vmem:[%s1333 + $0xd0] sm:$0xff]
      %v1361 = vld [vmem:[%s1333 + $0xd8] sm:$0xff]
      %v1362 = vld [vmem:[%s1333 + $0xe0] sm:$0xff]
      %v1363 = vld [vmem:[%s1333 + $0xe8] sm:$0xff]
      %v1364 = vld [vmem:[%s1333 + $0xf0] sm:$0xff]
      %v1365 = vld [vmem:[%s1333 + $0xf8] sm:$0xff]
      %1366 = vst [vmem:[#allocation1] ss:$2 sm:$0xff] %v279
      %v1367 = vld.sshfl [vmem:[#allocation1] sm:$0xff pattern:$0x75316420]
      %v1368 = vld.sshfl [vmem:[#allocation1 + $0x8] sm:$0xff pattern:$0x75316420]
      %1371 = vmatpush.msra.mxu0 %v1349
      %1372 = vmatpush.msra.mxu0 %v1348
      %1373 = vmatpush.msra.mxu0 %v1347
      %1374 = vmatpush.msra.mxu0 %v1346
      %1375 = vmatpush.msra.mxu0 %v1345
      %1376 = vmatpush.msra.mxu0 %v1344
      %1377 = vmatpush.msra.mxu0 %v1343
      %1378 = vmatpush.msra.mxu0 %v1342
      %1379 = vmatpush.msra.mxu0 %v1341
      %1380 = vmatpush.msra.mxu0 %v1340
      %1381 = vmatpush.msra.mxu0 %v1339
      %1382 = vmatpush.msra.mxu0 %v1338
      %1383 = vmatpush.msra.mxu0 %v1337
      %1384 = vmatpush.msra.mxu0 %v1336
      %1385 = vmatpush.msra.mxu0 %v1335
      %1386 = vmatpush.msra.mxu0 %v1334
      %1387 = vmatmul.f32.gmra.mxu0 %v1367
      %v1388 = vpop.f32.mrf.mxu0
      %v1389 = vadd.f32 0.0, %v1388
      %1390 = vdwg.mxu0
      %1391 = vmatpush.msra.mxu0 %v1365
      %1392 = vmatpush.msra.mxu0 %v1364
      %1393 = vmatpush.msra.mxu0 %v1363
      %1394 = vmatpush.msra.mxu0 %v1362
      %1395 = vmatpush.msra.mxu0 %v1361
      %1396 = vmatpush.msra.mxu0 %v1360
      %1397 = vmatpush.msra.mxu0 %v1359
      %1398 = vmatpush.msra.mxu0 %v1358
      %1399 = vmatpush.msra.mxu0 %v1357
      %1400 = vmatpush.msra.mxu0 %v1356
      %1401 = vmatpush.msra.mxu0 %v1355
      %1402 = vmatpush.msra.mxu0 %v1354
      %1403 = vmatpush.msra.mxu0 %v1353
      %1404 = vmatpush.msra.mxu0 %v1352
      %1405 = vmatpush.msra.mxu0 %v1351
      %1406 = vmatpush.msra.mxu0 %v1350
      %1407 = vmatmul.f32.gmra.mxu0 %v1368
      %v1408 = vpop.f32.mrf.mxu0
      %v1409 = vadd.f32 %v1389, %v1408
      %1410 = vdwg.mxu0
      %s1411 = scalar_lea.vmem %s1, 256
      %v1412 = vld [vmem:[%s1411] sm:$0xff]
      %v1413 = vld [vmem:[%s1411 + $0x8] sm:$0xff]
      %v1414 = vld [vmem:[%s1411 + $0x10] sm:$0xff]
      %v1415 = vld [vmem:[%s1411 + $0x18] sm:$0xff]
      %v1417 = vsel %vm366, %v1412, 0
      %v1420 = vsel %vm366, %v1413, 0
      %v1423 = vsel %vm366, %v1414, 0
      %v1426 = vsel %vm366, %v1415, 0
      %v1429 = vsel %vm379, %v1409, 0
      %1431 = vmatpush.msra.mxu0 0.0
      %1432 = vmatpush.msra.mxu0 0.0
      %1433 = vmatpush.msra.mxu0 0.0
      %1434 = vmatpush.msra.mxu0 0.0
      %1435 = vmatpush.msra.mxu0 0.0
      %1436 = vmatpush.msra.mxu0 0.0
      %1437 = vmatpush.msra.mxu0 0.0
      %1438 = vmatpush.msra.mxu0 0.0
      %1439 = vmatpush.msra.mxu0 0.0
      %1440 = vmatpush.msra.mxu0 0.0
      %1441 = vmatpush.msra.mxu0 0.0
      %1442 = vmatpush.msra.mxu0 0.0
      %1443 = vmatpush.msra.mxu0 0.0
      %1444 = vmatpush.msra.mxu0 0.0
      %1445 = vmatpush.msra.mxu0 0.0
      %1446 = vmatpush.msra.mxu0 %v1429
      %1447 = vmatmul.f32.gmra.mxu0 %v1417
      %v1448 = vpop.f32.mrf.mxu0
      %v1449 = vadd.f32 0.0, %v1448
      %1450 = vmatmul.f32.gmra.mxu0 %v1420
      %v1451 = vpop.f32.mrf.mxu0
      %v1452 = vadd.f32 0.0, %v1451
      %1453 = vmatmul.f32.gmra.mxu0 %v1423
      %v1454 = vpop.f32.mrf.mxu0
      %v1455 = vadd.f32 0.0, %v1454
      %1456 = vmatmul.f32.gmra.mxu0 %v1426
      %v1457 = vpop.f32.mrf.mxu0
      %v1458 = vadd.f32 0.0, %v1457
      %1459 = vdwg.mxu0
      %v1460 = vadd.f32 %v1329, %v1449
      %v1461 = vadd.f32 %v1330, %v1452
      %v1462 = vadd.f32 %v1331, %v1455
      %v1463 = vadd.f32 %v1332, %v1458
      %vm1464 = vcmp.gt.f32.partialorder %v1460, 0.0
      %vm1465 = vcmp.gt.f32.partialorder %v1461, 0.0
      %vm1466 = vcmp.gt.f32.partialorder %v1462, 0.0
      %vm1467 = vcmp.gt.f32.partialorder %v1463, 0.0
      %v1468 = vmul.f32 %v1460, 0.01
      %v1469 = vmul.f32 %v1461, 0.01
      %v1470 = vmul.f32 %v1462, 0.01
      %v1471 = vmul.f32 %v1463, 0.01
      %v1472 = vsel %vm1464, %v1460, %v1468
      %v1473 = vsel %vm1465, %v1461, %v1469
      %v1474 = vsel %vm1466, %v1462, %v1470
      %v1475 = vsel %vm1467, %v1463, %v1471
      %v1476 = vld [vmem:[%s5] sm:$0xff]
      %v1477 = vld [vmem:[%s5 + $0x8] sm:$0xff]
      %v1478 = vld [vmem:[%s5 + $0x10] sm:$0xff]
      %v1479 = vld [vmem:[%s5 + $0x18] sm:$0xff]
      %v1480 = vld [vmem:[%s5 + $0x20] sm:$0xff]
      %v1481 = vld [vmem:[%s5 + $0x28] sm:$0xff]
      %v1482 = vld [vmem:[%s5 + $0x30] sm:$0xff]
      %v1483 = vld [vmem:[%s5 + $0x38] sm:$0xff]
      %v1484 = vld [vmem:[%s6] sm:$0xff]
      %v1485 = vld [vmem:[%s6 + $0x8] sm:$0xff]
      %v1486 = vld [vmem:[%s6 + $0x10] sm:$0xff]
      %v1487 = vld [vmem:[%s6 + $0x18] sm:$0xff]
      %v1488 = vld [vmem:[%s6 + $0x20] sm:$0xff]
      %v1489 = vld [vmem:[%s6 + $0x28] sm:$0xff]
      %v1490 = vld [vmem:[%s6 + $0x30] sm:$0xff]
      %v1491 = vld [vmem:[%s6 + $0x38] sm:$0xff]
      %vm1492 = vcmask 523264
      %v1494 = vsel %vm1492, %v1472, 0
      %v1497 = vsel %vm1492, %v1473, 0
      %v1500 = vsel %vm1492, %v1474, 0
      %v1503 = vsel %vm1492, %v1475, 0
      %1505 = vmatpush.msra.mxu0 0.0
      %1506 = vmatpush.msra.mxu0 0.0
      %1507 = vmatpush.msra.mxu0 0.0
      %1508 = vmatpush.msra.mxu0 0.0
      %1509 = vmatpush.msra.mxu0 0.0
      %1510 = vmatpush.msra.mxu0 0.0
      %1511 = vmatpush.msra.mxu0 0.0
      %1512 = vmatpush.msra.mxu0 0.0
      %1513 = vmatpush.msra.mxu0 %v1491
      %1514 = vmatpush.msra.mxu0 %v1490
      %1515 = vmatpush.msra.mxu0 %v1489
      %1516 = vmatpush.msra.mxu0 %v1488
      %1517 = vmatpush.msra.mxu0 %v1487
      %1518 = vmatpush.msra.mxu0 %v1486
      %1519 = vmatpush.msra.mxu0 %v1485
      %1520 = vmatpush.msra.mxu0 %v1484
      %1521 = vmatmul.f32.gmra.mxu0 %v1494
      %v1522 = vpop.f32.mrf.mxu0
      %v1523 = vadd.f32 0.0, %v1522
      %1524 = vmatmul.f32.gmra.mxu0 %v1497
      %v1525 = vpop.f32.mrf.mxu0
      %v1526 = vadd.f32 0.0, %v1525
      %1527 = vmatmul.f32.gmra.mxu0 %v1500
      %v1528 = vpop.f32.mrf.mxu0
      %v1529 = vadd.f32 0.0, %v1528
      %1530 = vmatmul.f32.gmra.mxu0 %v1503
      %v1531 = vpop.f32.mrf.mxu0
      %v1532 = vadd.f32 0.0, %v1531
      %1533 = vdwg.mxu0
      %v1534 = vld [vmem:[%s4] sm:$0xff]
      %v1535 = vld [vmem:[%s4 + $0x8] sm:$0xff]
      %v1536 = vld [vmem:[%s4 + $0x10] sm:$0xff]
      %v1537 = vld [vmem:[%s4 + $0x18] sm:$0xff]
      %v1538 = vld [vmem:[%s4 + $0x20] sm:$0xff]
      %v1539 = vld [vmem:[%s4 + $0x28] sm:$0xff]
      %v1540 = vld [vmem:[%s4 + $0x30] sm:$0xff]
      %v1541 = vld [vmem:[%s4 + $0x38] sm:$0xff]
      %vm1542 = vcmask 261120
      %v1544 = vsel %vm1542, %v1534, 0
      %v1547 = vsel %vm1542, %v1535, 0
      %v1550 = vsel %vm1542, %v1536, 0
      %v1553 = vsel %vm1542, %v1537, 0
      %v1556 = vsel %vm1542, %v1538, 0
      %v1559 = vsel %vm1542, %v1539, 0
      %v1562 = vsel %vm1542, %v1540, 0
      %v1565 = vsel %vm1542, %v1541, 0
      %1567 = vmatpush.msra.mxu0 0.0
      %1568 = vmatpush.msra.mxu0 0.0
      %1569 = vmatpush.msra.mxu0 0.0
      %1570 = vmatpush.msra.mxu0 0.0
      %1571 = vmatpush.msra.mxu0 0.0
      %1572 = vmatpush.msra.mxu0 0.0
      %1573 = vmatpush.msra.mxu0 0.0
      %1574 = vmatpush.msra.mxu0 0.0
      %1575 = vmatpush.msra.mxu0 0.0
      %1576 = vmatpush.msra.mxu0 0.0
      %1577 = vmatpush.msra.mxu0 0.0
      %1578 = vmatpush.msra.mxu0 0.0
      %1579 = vmatpush.msra.mxu0 %v1532
      %1580 = vmatpush.msra.mxu0 %v1529
      %1581 = vmatpush.msra.mxu0 %v1526
      %1582 = vmatpush.msra.mxu0 %v1523
      %1583 = vmatmul.f32.gmra.mxu0 %v1544
      %v1584 = vpop.f32.mrf.mxu0
      %v1585 = vadd.f32 0.0, %v1584
      %1586 = vmatmul.f32.gmra.mxu0 %v1547
      %v1587 = vpop.f32.mrf.mxu0
      %v1588 = vadd.f32 0.0, %v1587
      %1589 = vmatmul.f32.gmra.mxu0 %v1550
      %v1590 = vpop.f32.mrf.mxu0
      %v1591 = vadd.f32 0.0, %v1590
      %1592 = vmatmul.f32.gmra.mxu0 %v1553
      %v1593 = vpop.f32.mrf.mxu0
      %v1594 = vadd.f32 0.0, %v1593
      %1595 = vmatmul.f32.gmra.mxu0 %v1556
      %v1596 = vpop.f32.mrf.mxu0
      %v1597 = vadd.f32 0.0, %v1596
      %1598 = vmatmul.f32.gmra.mxu0 %v1559
      %v1599 = vpop.f32.mrf.mxu0
      %v1600 = vadd.f32 0.0, %v1599
      %1601 = vmatmul.f32.gmra.mxu0 %v1562
      %v1602 = vpop.f32.mrf.mxu0
      %v1603 = vadd.f32 0.0, %v1602
      %1604 = vmatmul.f32.gmra.mxu0 %v1565
      %v1605 = vpop.f32.mrf.mxu0
      %v1606 = vadd.f32 0.0, %v1605
      %1607 = vdwg.mxu0
      %v1608 = vadd.f32 %v1476, %v1585
      %v1609 = vadd.f32 %v1477, %v1588
      %v1610 = vadd.f32 %v1478, %v1591
      %v1611 = vadd.f32 %v1479, %v1594
      %v1612 = vadd.f32 %v1480, %v1597
      %v1613 = vadd.f32 %v1481, %v1600
      %v1614 = vadd.f32 %v1482, %v1603
      %v1615 = vadd.f32 %v1483, %v1606
      %s1616 = scalar_lea.vmem %s6, 64
      %v1617 = vld [vmem:[%s1616] sm:$0xff]
      %v1618 = vld [vmem:[%s1616 + $0x8] sm:$0xff]
      %v1619 = vld [vmem:[%s1616 + $0x10] sm:$0xff]
      %v1620 = vld [vmem:[%s1616 + $0x18] sm:$0xff]
      %v1621 = vld [vmem:[%s1616 + $0x20] sm:$0xff]
      %v1622 = vld [vmem:[%s1616 + $0x28] sm:$0xff]
      %v1623 = vld [vmem:[%s1616 + $0x30] sm:$0xff]
      %v1624 = vld [vmem:[%s1616 + $0x38] sm:$0xff]
      %1625 = vmatpush.msra.mxu0 0.0
      %1626 = vmatpush.msra.mxu0 0.0
      %1627 = vmatpush.msra.mxu0 0.0
      %1628 = vmatpush.msra.mxu0 0.0
      %1629 = vmatpush.msra.mxu0 0.0
      %1630 = vmatpush.msra.mxu0 0.0
      %1631 = vmatpush.msra.mxu0 0.0
      %1632 = vmatpush.msra.mxu0 0.0
      %1633 = vmatpush.msra.mxu0 %v1624
      %1634 = vmatpush.msra.mxu0 %v1623
      %1635 = vmatpush.msra.mxu0 %v1622
      %1636 = vmatpush.msra.mxu0 %v1621
      %1637 = vmatpush.msra.mxu0 %v1620
      %1638 = vmatpush.msra.mxu0 %v1619
      %1639 = vmatpush.msra.mxu0 %v1618
      %1640 = vmatpush.msra.mxu0 %v1617
      %1641 = vmatmul.f32.gmra.mxu0 %v1494
      %v1642 = vpop.f32.mrf.mxu0
      %v1643 = vadd.f32 0.0, %v1642
      %1644 = vmatmul.f32.gmra.mxu0 %v1497
      %v1645 = vpop.f32.mrf.mxu0
      %v1646 = vadd.f32 0.0, %v1645
      %1647 = vmatmul.f32.gmra.mxu0 %v1500
      %v1648 = vpop.f32.mrf.mxu0
      %v1649 = vadd.f32 0.0, %v1648
      %1650 = vmatmul.f32.gmra.mxu0 %v1503
      %v1651 = vpop.f32.mrf.mxu0
      %v1652 = vadd.f32 0.0, %v1651
      %1653 = vdwg.mxu0
      %s1654 = scalar_lea.vmem %s4, 64
      %v1655 = vld [vmem:[%s1654] sm:$0xff]
      %v1656 = vld [vmem:[%s1654 + $0x8] sm:$0xff]
      %v1657 = vld [vmem:[%s1654 + $0x10] sm:$0xff]
      %v1658 = vld [vmem:[%s1654 + $0x18] sm:$0xff]
      %v1659 = vld [vmem:[%s1654 + $0x20] sm:$0xff]
      %v1660 = vld [vmem:[%s1654 + $0x28] sm:$0xff]
      %v1661 = vld [vmem:[%s1654 + $0x30] sm:$0xff]
      %v1662 = vld [vmem:[%s1654 + $0x38] sm:$0xff]
      %v1664 = vsel %vm1542, %v1655, 0
      %v1667 = vsel %vm1542, %v1656, 0
      %v1670 = vsel %vm1542, %v1657, 0
      %v1673 = vsel %vm1542, %v1658, 0
      %v1676 = vsel %vm1542, %v1659, 0
      %v1679 = vsel %vm1542, %v1660, 0
      %v1682 = vsel %vm1542, %v1661, 0
      %v1685 = vsel %vm1542, %v1662, 0
      %1687 = vmatpush.msra.mxu0 0.0
      %1688 = vmatpush.msra.mxu0 0.0
      %1689 = vmatpush.msra.mxu0 0.0
      %1690 = vmatpush.msra.mxu0 0.0
      %1691 = vmatpush.msra.mxu0 0.0
      %1692 = vmatpush.msra.mxu0 0.0
      %1693 = vmatpush.msra.mxu0 0.0
      %1694 = vmatpush.msra.mxu0 0.0
      %1695 = vmatpush.msra.mxu0 0.0
      %1696 = vmatpush.msra.mxu0 0.0
      %1697 = vmatpush.msra.mxu0 0.0
      %1698 = vmatpush.msra.mxu0 0.0
      %1699 = vmatpush.msra.mxu0 %v1652
      %1700 = vmatpush.msra.mxu0 %v1649
      %1701 = vmatpush.msra.mxu0 %v1646
      %1702 = vmatpush.msra.mxu0 %v1643
      %1703 = vmatmul.f32.gmra.mxu0 %v1664
      %v1704 = vpop.f32.mrf.mxu0
      %v1705 = vadd.f32 0.0, %v1704
      %1706 = vmatmul.f32.gmra.mxu0 %v1667
      %v1707 = vpop.f32.mrf.mxu0
      %v1708 = vadd.f32 0.0, %v1707
      %1709 = vmatmul.f32.gmra.mxu0 %v1670
      %v1710 = vpop.f32.mrf.mxu0
      %v1711 = vadd.f32 0.0, %v1710
      %1712 = vmatmul.f32.gmra.mxu0 %v1673
      %v1713 = vpop.f32.mrf.mxu0
      %v1714 = vadd.f32 0.0, %v1713
      %1715 = vmatmul.f32.gmra.mxu0 %v1676
      %v1716 = vpop.f32.mrf.mxu0
      %v1717 = vadd.f32 0.0, %v1716
      %1718 = vmatmul.f32.gmra.mxu0 %v1679
      %v1719 = vpop.f32.mrf.mxu0
      %v1720 = vadd.f32 0.0, %v1719
      %1721 = vmatmul.f32.gmra.mxu0 %v1682
      %v1722 = vpop.f32.mrf.mxu0
      %v1723 = vadd.f32 0.0, %v1722
      %1724 = vmatmul.f32.gmra.mxu0 %v1685
      %v1725 = vpop.f32.mrf.mxu0
      %v1726 = vadd.f32 0.0, %v1725
      %1727 = vdwg.mxu0
      %v1728 = vadd.f32 %v1608, %v1705
      %v1729 = vadd.f32 %v1609, %v1708
      %v1730 = vadd.f32 %v1610, %v1711
      %v1731 = vadd.f32 %v1611, %v1714
      %v1732 = vadd.f32 %v1612, %v1717
      %v1733 = vadd.f32 %v1613, %v1720
      %v1734 = vadd.f32 %v1614, %v1723
      %v1735 = vadd.f32 %v1615, %v1726
      %s1736 = scalar_lea.vmem %s6, 128
      %v1737 = vld [vmem:[%s1736] sm:$0xff]
      %v1738 = vld [vmem:[%s1736 + $0x8] sm:$0xff]
      %v1739 = vld [vmem:[%s1736 + $0x10] sm:$0xff]
      %v1740 = vld [vmem:[%s1736 + $0x18] sm:$0xff]
      %v1741 = vld [vmem:[%s1736 + $0x20] sm:$0xff]
      %v1742 = vld [vmem:[%s1736 + $0x28] sm:$0xff]
      %v1743 = vld [vmem:[%s1736 + $0x30] sm:$0xff]
      %v1744 = vld [vmem:[%s1736 + $0x38] sm:$0xff]
      %1745 = vmatpush.msra.mxu0 0.0
      %1746 = vmatpush.msra.mxu0 0.0
      %1747 = vmatpush.msra.mxu0 0.0
      %1748 = vmatpush.msra.mxu0 0.0
      %1749 = vmatpush.msra.mxu0 0.0
      %1750 = vmatpush.msra.mxu0 0.0
      %1751 = vmatpush.msra.mxu0 0.0
      %1752 = vmatpush.msra.mxu0 0.0
      %1753 = vmatpush.msra.mxu0 %v1744
      %1754 = vmatpush.msra.mxu0 %v1743
      %1755 = vmatpush.msra.mxu0 %v1742
      %1756 = vmatpush.msra.mxu0 %v1741
      %1757 = vmatpush.msra.mxu0 %v1740
      %1758 = vmatpush.msra.mxu0 %v1739
      %1759 = vmatpush.msra.mxu0 %v1738
      %1760 = vmatpush.msra.mxu0 %v1737
      %1761 = vmatmul.f32.gmra.mxu0 %v1494
      %v1762 = vpop.f32.mrf.mxu0
      %v1763 = vadd.f32 0.0, %v1762
      %1764 = vmatmul.f32.gmra.mxu0 %v1497
      %v1765 = vpop.f32.mrf.mxu0
      %v1766 = vadd.f32 0.0, %v1765
      %1767 = vmatmul.f32.gmra.mxu0 %v1500
      %v1768 = vpop.f32.mrf.mxu0
      %v1769 = vadd.f32 0.0, %v1768
      %1770 = vmatmul.f32.gmra.mxu0 %v1503
      %v1771 = vpop.f32.mrf.mxu0
      %v1772 = vadd.f32 0.0, %v1771
      %1773 = vdwg.mxu0
      %s1774 = scalar_lea.vmem %s4, 128
      %v1775 = vld [vmem:[%s1774] sm:$0xff]
      %v1776 = vld [vmem:[%s1774 + $0x8] sm:$0xff]
      %v1777 = vld [vmem:[%s1774 + $0x10] sm:$0xff]
      %v1778 = vld [vmem:[%s1774 + $0x18] sm:$0xff]
      %v1779 = vld [vmem:[%s1774 + $0x20] sm:$0xff]
      %v1780 = vld [vmem:[%s1774 + $0x28] sm:$0xff]
      %v1781 = vld [vmem:[%s1774 + $0x30] sm:$0xff]
      %v1782 = vld [vmem:[%s1774 + $0x38] sm:$0xff]
      %v1784 = vsel %vm1542, %v1775, 0
      %v1787 = vsel %vm1542, %v1776, 0
      %v1790 = vsel %vm1542, %v1777, 0
      %v1793 = vsel %vm1542, %v1778, 0
      %v1796 = vsel %vm1542, %v1779, 0
      %v1799 = vsel %vm1542, %v1780, 0
      %v1802 = vsel %vm1542, %v1781, 0
      %v1805 = vsel %vm1542, %v1782, 0
      %1807 = vmatpush.msra.mxu0 0.0
      %1808 = vmatpush.msra.mxu0 0.0
      %1809 = vmatpush.msra.mxu0 0.0
      %1810 = vmatpush.msra.mxu0 0.0
      %1811 = vmatpush.msra.mxu0 0.0
      %1812 = vmatpush.msra.mxu0 0.0
      %1813 = vmatpush.msra.mxu0 0.0
      %1814 = vmatpush.msra.mxu0 0.0
      %1815 = vmatpush.msra.mxu0 0.0
      %1816 = vmatpush.msra.mxu0 0.0
      %1817 = vmatpush.msra.mxu0 0.0
      %1818 = vmatpush.msra.mxu0 0.0
      %1819 = vmatpush.msra.mxu0 %v1772
      %1820 = vmatpush.msra.mxu0 %v1769
      %1821 = vmatpush.msra.mxu0 %v1766
      %1822 = vmatpush.msra.mxu0 %v1763
      %1823 = vmatmul.f32.gmra.mxu0 %v1784
      %v1824 = vpop.f32.mrf.mxu0
      %v1825 = vadd.f32 0.0, %v1824
      %1826 = vmatmul.f32.gmra.mxu0 %v1787
      %v1827 = vpop.f32.mrf.mxu0
      %v1828 = vadd.f32 0.0, %v1827
      %1829 = vmatmul.f32.gmra.mxu0 %v1790
      %v1830 = vpop.f32.mrf.mxu0
      %v1831 = vadd.f32 0.0, %v1830
      %1832 = vmatmul.f32.gmra.mxu0 %v1793
      %v1833 = vpop.f32.mrf.mxu0
      %v1834 = vadd.f32 0.0, %v1833
      %1835 = vmatmul.f32.gmra.mxu0 %v1796
      %v1836 = vpop.f32.mrf.mxu0
      %v1837 = vadd.f32 0.0, %v1836
      %1838 = vmatmul.f32.gmra.mxu0 %v1799
      %v1839 = vpop.f32.mrf.mxu0
      %v1840 = vadd.f32 0.0, %v1839
      %1841 = vmatmul.f32.gmra.mxu0 %v1802
      %v1842 = vpop.f32.mrf.mxu0
      %v1843 = vadd.f32 0.0, %v1842
      %1844 = vmatmul.f32.gmra.mxu0 %v1805
      %v1845 = vpop.f32.mrf.mxu0
      %v1846 = vadd.f32 0.0, %v1845
      %1847 = vdwg.mxu0
      %v1848 = vadd.f32 %v1728, %v1825
      %v1849 = vadd.f32 %v1729, %v1828
      %v1850 = vadd.f32 %v1730, %v1831
      %v1851 = vadd.f32 %v1731, %v1834
      %v1852 = vadd.f32 %v1732, %v1837
      %v1853 = vadd.f32 %v1733, %v1840
      %v1854 = vadd.f32 %v1734, %v1843
      %v1855 = vadd.f32 %v1735, %v1846
      %s1856 = scalar_lea.vmem %s6, 192
      %v1857 = vld [vmem:[%s1856] sm:$0xff]
      %v1858 = vld [vmem:[%s1856 + $0x8] sm:$0xff]
      %v1859 = vld [vmem:[%s1856 + $0x10] sm:$0xff]
      %v1860 = vld [vmem:[%s1856 + $0x18] sm:$0xff]
      %v1861 = vld [vmem:[%s1856 + $0x20] sm:$0xff]
      %v1862 = vld [vmem:[%s1856 + $0x28] sm:$0xff]
      %v1863 = vld [vmem:[%s1856 + $0x30] sm:$0xff]
      %v1864 = vld [vmem:[%s1856 + $0x38] sm:$0xff]
      %1865 = vmatpush.msra.mxu0 0.0
      %1866 = vmatpush.msra.mxu0 0.0
      %1867 = vmatpush.msra.mxu0 0.0
      %1868 = vmatpush.msra.mxu0 0.0
      %1869 = vmatpush.msra.mxu0 0.0
      %1870 = vmatpush.msra.mxu0 0.0
      %1871 = vmatpush.msra.mxu0 0.0
      %1872 = vmatpush.msra.mxu0 0.0
      %1873 = vmatpush.msra.mxu0 %v1864
      %1874 = vmatpush.msra.mxu0 %v1863
      %1875 = vmatpush.msra.mxu0 %v1862
      %1876 = vmatpush.msra.mxu0 %v1861
      %1877 = vmatpush.msra.mxu0 %v1860
      %1878 = vmatpush.msra.mxu0 %v1859
      %1879 = vmatpush.msra.mxu0 %v1858
      %1880 = vmatpush.msra.mxu0 %v1857
      %1881 = vmatmul.f32.gmra.mxu0 %v1494
      %v1882 = vpop.f32.mrf.mxu0
      %v1883 = vadd.f32 0.0, %v1882
      %1884 = vmatmul.f32.gmra.mxu0 %v1497
      %v1885 = vpop.f32.mrf.mxu0
      %v1886 = vadd.f32 0.0, %v1885
      %1887 = vmatmul.f32.gmra.mxu0 %v1500
      %v1888 = vpop.f32.mrf.mxu0
      %v1889 = vadd.f32 0.0, %v1888
      %1890 = vmatmul.f32.gmra.mxu0 %v1503
      %v1891 = vpop.f32.mrf.mxu0
      %v1892 = vadd.f32 0.0, %v1891
      %1893 = vdwg.mxu0
      %s1894 = scalar_lea.vmem %s4, 192
      %v1895 = vld [vmem:[%s1894] sm:$0xff]
      %v1896 = vld [vmem:[%s1894 + $0x8] sm:$0xff]
      %v1897 = vld [vmem:[%s1894 + $0x10] sm:$0xff]
      %v1898 = vld [vmem:[%s1894 + $0x18] sm:$0xff]
      %v1899 = vld [vmem:[%s1894 + $0x20] sm:$0xff]
      %v1900 = vld [vmem:[%s1894 + $0x28] sm:$0xff]
      %v1901 = vld [vmem:[%s1894 + $0x30] sm:$0xff]
      %v1902 = vld [vmem:[%s1894 + $0x38] sm:$0xff]
      %v1904 = vsel %vm1542, %v1895, 0
      %v1907 = vsel %vm1542, %v1896, 0
      %v1910 = vsel %vm1542, %v1897, 0
      %v1913 = vsel %vm1542, %v1898, 0
      %v1916 = vsel %vm1542, %v1899, 0
      %v1919 = vsel %vm1542, %v1900, 0
      %v1922 = vsel %vm1542, %v1901, 0
      %v1925 = vsel %vm1542, %v1902, 0
      %1927 = vmatpush.msra.mxu0 0.0
      %1928 = vmatpush.msra.mxu0 0.0
      %1929 = vmatpush.msra.mxu0 0.0
      %1930 = vmatpush.msra.mxu0 0.0
      %1931 = vmatpush.msra.mxu0 0.0
      %1932 = vmatpush.msra.mxu0 0.0
      %1933 = vmatpush.msra.mxu0 0.0
      %1934 = vmatpush.msra.mxu0 0.0
      %1935 = vmatpush.msra.mxu0 0.0
      %1936 = vmatpush.msra.mxu0 0.0
      %1937 = vmatpush.msra.mxu0 0.0
      %1938 = vmatpush.msra.mxu0 0.0
      %1939 = vmatpush.msra.mxu0 %v1892
      %1940 = vmatpush.msra.mxu0 %v1889
      %1941 = vmatpush.msra.mxu0 %v1886
      %1942 = vmatpush.msra.mxu0 %v1883
      %1943 = vmatmul.f32.gmra.mxu0 %v1904
      %v1944 = vpop.f32.mrf.mxu0
      %v1945 = vadd.f32 0.0, %v1944
      %1946 = vmatmul.f32.gmra.mxu0 %v1907
      %v1947 = vpop.f32.mrf.mxu0
      %v1948 = vadd.f32 0.0, %v1947
      %1949 = vmatmul.f32.gmra.mxu0 %v1910
      %v1950 = vpop.f32.mrf.mxu0
      %v1951 = vadd.f32 0.0, %v1950
      %1952 = vmatmul.f32.gmra.mxu0 %v1913
      %v1953 = vpop.f32.mrf.mxu0
      %v1954 = vadd.f32 0.0, %v1953
      %1955 = vmatmul.f32.gmra.mxu0 %v1916
      %v1956 = vpop.f32.mrf.mxu0
      %v1957 = vadd.f32 0.0, %v1956
      %1958 = vmatmul.f32.gmra.mxu0 %v1919
      %v1959 = vpop.f32.mrf.mxu0
      %v1960 = vadd.f32 0.0, %v1959
      %1961 = vmatmul.f32.gmra.mxu0 %v1922
      %v1962 = vpop.f32.mrf.mxu0
      %v1963 = vadd.f32 0.0, %v1962
      %1964 = vmatmul.f32.gmra.mxu0 %v1925
      %v1965 = vpop.f32.mrf.mxu0
      %v1966 = vadd.f32 0.0, %v1965
      %1967 = vdwg.mxu0
      %v1968 = vadd.f32 %v1848, %v1945
      %v1969 = vadd.f32 %v1849, %v1948
      %v1970 = vadd.f32 %v1850, %v1951
      %v1971 = vadd.f32 %v1851, %v1954
      %v1972 = vadd.f32 %v1852, %v1957
      %v1973 = vadd.f32 %v1853, %v1960
      %v1974 = vadd.f32 %v1854, %v1963
      %v1975 = vadd.f32 %v1855, %v1966
      %s1976 = scalar_lea.vmem %s6, 256
      %v1977 = vld [vmem:[%s1976] sm:$0xff]
      %v1978 = vld [vmem:[%s1976 + $0x8] sm:$0xff]
      %v1979 = vld [vmem:[%s1976 + $0x10] sm:$0xff]
      %v1980 = vld [vmem:[%s1976 + $0x18] sm:$0xff]
      %v1981 = vld [vmem:[%s1976 + $0x20] sm:$0xff]
      %v1982 = vld [vmem:[%s1976 + $0x28] sm:$0xff]
      %v1983 = vld [vmem:[%s1976 + $0x30] sm:$0xff]
      %v1984 = vld [vmem:[%s1976 + $0x38] sm:$0xff]
      %1985 = vmatpush.msra.mxu0 0.0
      %1986 = vmatpush.msra.mxu0 0.0
      %1987 = vmatpush.msra.mxu0 0.0
      %1988 = vmatpush.msra.mxu0 0.0
      %1989 = vmatpush.msra.mxu0 0.0
      %1990 = vmatpush.msra.mxu0 0.0
      %1991 = vmatpush.msra.mxu0 0.0
      %1992 = vmatpush.msra.mxu0 0.0
      %1993 = vmatpush.msra.mxu0 %v1984
      %1994 = vmatpush.msra.mxu0 %v1983
      %1995 = vmatpush.msra.mxu0 %v1982
      %1996 = vmatpush.msra.mxu0 %v1981
      %1997 = vmatpush.msra.mxu0 %v1980
      %1998 = vmatpush.msra.mxu0 %v1979
      %1999 = vmatpush.msra.mxu0 %v1978
      %2000 = vmatpush.msra.mxu0 %v1977
      %2001 = vmatmul.f32.gmra.mxu0 %v1494
      %v2002 = vpop.f32.mrf.mxu0
      %v2003 = vadd.f32 0.0, %v2002
      %2004 = vmatmul.f32.gmra.mxu0 %v1497
      %v2005 = vpop.f32.mrf.mxu0
      %v2006 = vadd.f32 0.0, %v2005
      %2007 = vmatmul.f32.gmra.mxu0 %v1500
      %v2008 = vpop.f32.mrf.mxu0
      %v2009 = vadd.f32 0.0, %v2008
      %2010 = vmatmul.f32.gmra.mxu0 %v1503
      %v2011 = vpop.f32.mrf.mxu0
      %v2012 = vadd.f32 0.0, %v2011
      %2013 = vdwg.mxu0
      %s2014 = scalar_lea.vmem %s4, 256
      %v2015 = vld [vmem:[%s2014] sm:$0xff]
      %v2016 = vld [vmem:[%s2014 + $0x8] sm:$0xff]
      %v2017 = vld [vmem:[%s2014 + $0x10] sm:$0xff]
      %v2018 = vld [vmem:[%s2014 + $0x18] sm:$0xff]
      %v2019 = vld [vmem:[%s2014 + $0x20] sm:$0xff]
      %v2020 = vld [vmem:[%s2014 + $0x28] sm:$0xff]
      %v2021 = vld [vmem:[%s2014 + $0x30] sm:$0xff]
      %v2022 = vld [vmem:[%s2014 + $0x38] sm:$0xff]
      %v2024 = vsel %vm1542, %v2015, 0
      %v2027 = vsel %vm1542, %v2016, 0
      %v2030 = vsel %vm1542, %v2017, 0
      %v2033 = vsel %vm1542, %v2018, 0
      %v2036 = vsel %vm1542, %v2019, 0
      %v2039 = vsel %vm1542, %v2020, 0
      %v2042 = vsel %vm1542, %v2021, 0
      %v2045 = vsel %vm1542, %v2022, 0
      %2047 = vmatpush.msra.mxu0 0.0
      %2048 = vmatpush.msra.mxu0 0.0
      %2049 = vmatpush.msra.mxu0 0.0
      %2050 = vmatpush.msra.mxu0 0.0
      %2051 = vmatpush.msra.mxu0 0.0
      %2052 = vmatpush.msra.mxu0 0.0
      %2053 = vmatpush.msra.mxu0 0.0
      %2054 = vmatpush.msra.mxu0 0.0
      %2055 = vmatpush.msra.mxu0 0.0
      %2056 = vmatpush.msra.mxu0 0.0
      %2057 = vmatpush.msra.mxu0 0.0
      %2058 = vmatpush.msra.mxu0 0.0
      %2059 = vmatpush.msra.mxu0 %v2012
      %2060 = vmatpush.msra.mxu0 %v2009
      %2061 = vmatpush.msra.mxu0 %v2006
      %2062 = vmatpush.msra.mxu0 %v2003
      %2063 = vmatmul.f32.gmra.mxu0 %v2024
      %v2064 = vpop.f32.mrf.mxu0
      %v2065 = vadd.f32 0.0, %v2064
      %2066 = vmatmul.f32.gmra.mxu0 %v2027
      %v2067 = vpop.f32.mrf.mxu0
      %v2068 = vadd.f32 0.0, %v2067
      %2069 = vmatmul.f32.gmra.mxu0 %v2030
      %v2070 = vpop.f32.mrf.mxu0
      %v2071 = vadd.f32 0.0, %v2070
      %2072 = vmatmul.f32.gmra.mxu0 %v2033
      %v2073 = vpop.f32.mrf.mxu0
      %v2074 = vadd.f32 0.0, %v2073
      %2075 = vmatmul.f32.gmra.mxu0 %v2036
      %v2076 = vpop.f32.mrf.mxu0
      %v2077 = vadd.f32 0.0, %v2076
      %2078 = vmatmul.f32.gmra.mxu0 %v2039
      %v2079 = vpop.f32.mrf.mxu0
      %v2080 = vadd.f32 0.0, %v2079
      %2081 = vmatmul.f32.gmra.mxu0 %v2042
      %v2082 = vpop.f32.mrf.mxu0
      %v2083 = vadd.f32 0.0, %v2082
      %2084 = vmatmul.f32.gmra.mxu0 %v2045
      %v2085 = vpop.f32.mrf.mxu0
      %v2086 = vadd.f32 0.0, %v2085
      %2087 = vdwg.mxu0
      %v2088 = vadd.f32 %v1968, %v2065
      %v2089 = vadd.f32 %v1969, %v2068
      %v2090 = vadd.f32 %v1970, %v2071
      %v2091 = vadd.f32 %v1971, %v2074
      %v2092 = vadd.f32 %v1972, %v2077
      %v2093 = vadd.f32 %v1973, %v2080
      %v2094 = vadd.f32 %v1974, %v2083
      %v2095 = vadd.f32 %v1975, %v2086
      %s2096 = scalar_lea.vmem %s6, 320
      %v2097 = vld [vmem:[%s2096] sm:$0xff]
      %v2098 = vld [vmem:[%s2096 + $0x8] sm:$0xff]
      %v2099 = vld [vmem:[%s2096 + $0x10] sm:$0xff]
      %v2100 = vld [vmem:[%s2096 + $0x18] sm:$0xff]
      %v2101 = vld [vmem:[%s2096 + $0x20] sm:$0xff]
      %v2102 = vld [vmem:[%s2096 + $0x28] sm:$0xff]
      %v2103 = vld [vmem:[%s2096 + $0x30] sm:$0xff]
      %v2104 = vld [vmem:[%s2096 + $0x38] sm:$0xff]
      %2105 = vmatpush.msra.mxu0 0.0
      %2106 = vmatpush.msra.mxu0 0.0
      %2107 = vmatpush.msra.mxu0 0.0
      %2108 = vmatpush.msra.mxu0 0.0
      %2109 = vmatpush.msra.mxu0 0.0
      %2110 = vmatpush.msra.mxu0 0.0
      %2111 = vmatpush.msra.mxu0 0.0
      %2112 = vmatpush.msra.mxu0 0.0
      %2113 = vmatpush.msra.mxu0 %v2104
      %2114 = vmatpush.msra.mxu0 %v2103
      %2115 = vmatpush.msra.mxu0 %v2102
      %2116 = vmatpush.msra.mxu0 %v2101
      %2117 = vmatpush.msra.mxu0 %v2100
      %2118 = vmatpush.msra.mxu0 %v2099
      %2119 = vmatpush.msra.mxu0 %v2098
      %2120 = vmatpush.msra.mxu0 %v2097
      %2121 = vmatmul.f32.gmra.mxu0 %v1494
      %v2122 = vpop.f32.mrf.mxu0
      %v2123 = vadd.f32 0.0, %v2122
      %2124 = vmatmul.f32.gmra.mxu0 %v1497
      %v2125 = vpop.f32.mrf.mxu0
      %v2126 = vadd.f32 0.0, %v2125
      %2127 = vmatmul.f32.gmra.mxu0 %v1500
      %v2128 = vpop.f32.mrf.mxu0
      %v2129 = vadd.f32 0.0, %v2128
      %2130 = vmatmul.f32.gmra.mxu0 %v1503
      %v2131 = vpop.f32.mrf.mxu0
      %v2132 = vadd.f32 0.0, %v2131
      %2133 = vdwg.mxu0
      %s2134 = scalar_lea.vmem %s4, 320
      %v2135 = vld [vmem:[%s2134] sm:$0xff]
      %v2136 = vld [vmem:[%s2134 + $0x8] sm:$0xff]
      %v2137 = vld [vmem:[%s2134 + $0x10] sm:$0xff]
      %v2138 = vld [vmem:[%s2134 + $0x18] sm:$0xff]
      %v2139 = vld [vmem:[%s2134 + $0x20] sm:$0xff]
      %v2140 = vld [vmem:[%s2134 + $0x28] sm:$0xff]
      %v2141 = vld [vmem:[%s2134 + $0x30] sm:$0xff]
      %v2142 = vld [vmem:[%s2134 + $0x38] sm:$0xff]
      %v2144 = vsel %vm1542, %v2135, 0
      %v2147 = vsel %vm1542, %v2136, 0
      %v2150 = vsel %vm1542, %v2137, 0
      %v2153 = vsel %vm1542, %v2138, 0
      %v2156 = vsel %vm1542, %v2139, 0
      %v2159 = vsel %vm1542, %v2140, 0
      %v2162 = vsel %vm1542, %v2141, 0
      %v2165 = vsel %vm1542, %v2142, 0
      %2167 = vmatpush.msra.mxu0 0.0
      %2168 = vmatpush.msra.mxu0 0.0
      %2169 = vmatpush.msra.mxu0 0.0
      %2170 = vmatpush.msra.mxu0 0.0
      %2171 = vmatpush.msra.mxu0 0.0
      %2172 = vmatpush.msra.mxu0 0.0
      %2173 = vmatpush.msra.mxu0 0.0
      %2174 = vmatpush.msra.mxu0 0.0
      %2175 = vmatpush.msra.mxu0 0.0
      %2176 = vmatpush.msra.mxu0 0.0
      %2177 = vmatpush.msra.mxu0 0.0
      %2178 = vmatpush.msra.mxu0 0.0
      %2179 = vmatpush.msra.mxu0 %v2132
      %2180 = vmatpush.msra.mxu0 %v2129
      %2181 = vmatpush.msra.mxu0 %v2126
      %2182 = vmatpush.msra.mxu0 %v2123
      %2183 = vmatmul.f32.gmra.mxu0 %v2144
      %v2184 = vpop.f32.mrf.mxu0
      %v2185 = vadd.f32 0.0, %v2184
      %2186 = vmatmul.f32.gmra.mxu0 %v2147
      %v2187 = vpop.f32.mrf.mxu0
      %v2188 = vadd.f32 0.0, %v2187
      %2189 = vmatmul.f32.gmra.mxu0 %v2150
      %v2190 = vpop.f32.mrf.mxu0
      %v2191 = vadd.f32 0.0, %v2190
      %2192 = vmatmul.f32.gmra.mxu0 %v2153
      %v2193 = vpop.f32.mrf.mxu0
      %v2194 = vadd.f32 0.0, %v2193
      %2195 = vmatmul.f32.gmra.mxu0 %v2156
      %v2196 = vpop.f32.mrf.mxu0
      %v2197 = vadd.f32 0.0, %v2196
      %2198 = vmatmul.f32.gmra.mxu0 %v2159
      %v2199 = vpop.f32.mrf.mxu0
      %v2200 = vadd.f32 0.0, %v2199
      %2201 = vmatmul.f32.gmra.mxu0 %v2162
      %v2202 = vpop.f32.mrf.mxu0
      %v2203 = vadd.f32 0.0, %v2202
      %2204 = vmatmul.f32.gmra.mxu0 %v2165
      %v2205 = vpop.f32.mrf.mxu0
      %v2206 = vadd.f32 0.0, %v2205
      %2207 = vdwg.mxu0
      %v2208 = vadd.f32 %v2088, %v2185
      %v2209 = vadd.f32 %v2089, %v2188
      %v2210 = vadd.f32 %v2090, %v2191
      %v2211 = vadd.f32 %v2091, %v2194
      %v2212 = vadd.f32 %v2092, %v2197
      %v2213 = vadd.f32 %v2093, %v2200
      %v2214 = vadd.f32 %v2094, %v2203
      %v2215 = vadd.f32 %v2095, %v2206
      %s2216 = scalar_lea.vmem %s6, 384
      %v2217 = vld [vmem:[%s2216] sm:$0xff]
      %v2218 = vld [vmem:[%s2216 + $0x8] sm:$0xff]
      %v2219 = vld [vmem:[%s2216 + $0x10] sm:$0xff]
      %v2220 = vld [vmem:[%s2216 + $0x18] sm:$0xff]
      %v2221 = vld [vmem:[%s2216 + $0x20] sm:$0xff]
      %v2222 = vld [vmem:[%s2216 + $0x28] sm:$0xff]
      %v2223 = vld [vmem:[%s2216 + $0x30] sm:$0xff]
      %v2224 = vld [vmem:[%s2216 + $0x38] sm:$0xff]
      %2225 = vmatpush.msra.mxu0 0.0
      %2226 = vmatpush.msra.mxu0 0.0
      %2227 = vmatpush.msra.mxu0 0.0
      %2228 = vmatpush.msra.mxu0 0.0
      %2229 = vmatpush.msra.mxu0 0.0
      %2230 = vmatpush.msra.mxu0 0.0
      %2231 = vmatpush.msra.mxu0 0.0
      %2232 = vmatpush.msra.mxu0 0.0
      %2233 = vmatpush.msra.mxu0 %v2224
      %2234 = vmatpush.msra.mxu0 %v2223
      %2235 = vmatpush.msra.mxu0 %v2222
      %2236 = vmatpush.msra.mxu0 %v2221
      %2237 = vmatpush.msra.mxu0 %v2220
      %2238 = vmatpush.msra.mxu0 %v2219
      %2239 = vmatpush.msra.mxu0 %v2218
      %2240 = vmatpush.msra.mxu0 %v2217
      %2241 = vmatmul.f32.gmra.mxu0 %v1494
      %v2242 = vpop.f32.mrf.mxu0
      %v2243 = vadd.f32 0.0, %v2242
      %2244 = vmatmul.f32.gmra.mxu0 %v1497
      %v2245 = vpop.f32.mrf.mxu0
      %v2246 = vadd.f32 0.0, %v2245
      %2247 = vmatmul.f32.gmra.mxu0 %v1500
      %v2248 = vpop.f32.mrf.mxu0
      %v2249 = vadd.f32 0.0, %v2248
      %2250 = vmatmul.f32.gmra.mxu0 %v1503
      %v2251 = vpop.f32.mrf.mxu0
      %v2252 = vadd.f32 0.0, %v2251
      %2253 = vdwg.mxu0
      %s2254 = scalar_lea.vmem %s4, 384
      %v2255 = vld [vmem:[%s2254] sm:$0xff]
      %v2256 = vld [vmem:[%s2254 + $0x8] sm:$0xff]
      %v2257 = vld [vmem:[%s2254 + $0x10] sm:$0xff]
      %v2258 = vld [vmem:[%s2254 + $0x18] sm:$0xff]
      %v2259 = vld [vmem:[%s2254 + $0x20] sm:$0xff]
      %v2260 = vld [vmem:[%s2254 + $0x28] sm:$0xff]
      %v2261 = vld [vmem:[%s2254 + $0x30] sm:$0xff]
      %v2262 = vld [vmem:[%s2254 + $0x38] sm:$0xff]
      %v2264 = vsel %vm1542, %v2255, 0
      %v2267 = vsel %vm1542, %v2256, 0
      %v2270 = vsel %vm1542, %v2257, 0
      %v2273 = vsel %vm1542, %v2258, 0
      %v2276 = vsel %vm1542, %v2259, 0
      %v2279 = vsel %vm1542, %v2260, 0
      %v2282 = vsel %vm1542, %v2261, 0
      %v2285 = vsel %vm1542, %v2262, 0
      %2287 = vmatpush.msra.mxu0 0.0
      %2288 = vmatpush.msra.mxu0 0.0
      %2289 = vmatpush.msra.mxu0 0.0
      %2290 = vmatpush.msra.mxu0 0.0
      %2291 = vmatpush.msra.mxu0 0.0
      %2292 = vmatpush.msra.mxu0 0.0
      %2293 = vmatpush.msra.mxu0 0.0
      %2294 = vmatpush.msra.mxu0 0.0
      %2295 = vmatpush.msra.mxu0 0.0
      %2296 = vmatpush.msra.mxu0 0.0
      %2297 = vmatpush.msra.mxu0 0.0
      %2298 = vmatpush.msra.mxu0 0.0
      %2299 = vmatpush.msra.mxu0 %v2252
      %2300 = vmatpush.msra.mxu0 %v2249
      %2301 = vmatpush.msra.mxu0 %v2246
      %2302 = vmatpush.msra.mxu0 %v2243
      %2303 = vmatmul.f32.gmra.mxu0 %v2264
      %v2304 = vpop.f32.mrf.mxu0
      %v2305 = vadd.f32 0.0, %v2304
      %2306 = vmatmul.f32.gmra.mxu0 %v2267
      %v2307 = vpop.f32.mrf.mxu0
      %v2308 = vadd.f32 0.0, %v2307
      %2309 = vmatmul.f32.gmra.mxu0 %v2270
      %v2310 = vpop.f32.mrf.mxu0
      %v2311 = vadd.f32 0.0, %v2310
      %2312 = vmatmul.f32.gmra.mxu0 %v2273
      %v2313 = vpop.f32.mrf.mxu0
      %v2314 = vadd.f32 0.0, %v2313
      %2315 = vmatmul.f32.gmra.mxu0 %v2276
      %v2316 = vpop.f32.mrf.mxu0
      %v2317 = vadd.f32 0.0, %v2316
      %2318 = vmatmul.f32.gmra.mxu0 %v2279
      %v2319 = vpop.f32.mrf.mxu0
      %v2320 = vadd.f32 0.0, %v2319
      %2321 = vmatmul.f32.gmra.mxu0 %v2282
      %v2322 = vpop.f32.mrf.mxu0
      %v2323 = vadd.f32 0.0, %v2322
      %2324 = vmatmul.f32.gmra.mxu0 %v2285
      %v2325 = vpop.f32.mrf.mxu0
      %v2326 = vadd.f32 0.0, %v2325
      %2327 = vdwg.mxu0
      %v2328 = vadd.f32 %v2208, %v2305
      %v2329 = vadd.f32 %v2209, %v2308
      %v2330 = vadd.f32 %v2210, %v2311
      %v2331 = vadd.f32 %v2211, %v2314
      %v2332 = vadd.f32 %v2212, %v2317
      %v2333 = vadd.f32 %v2213, %v2320
      %v2334 = vadd.f32 %v2214, %v2323
      %v2335 = vadd.f32 %v2215, %v2326
      %s2336 = scalar_lea.vmem %s6, 448
      %v2337 = vld [vmem:[%s2336] sm:$0xff]
      %v2338 = vld [vmem:[%s2336 + $0x8] sm:$0xff]
      %v2339 = vld [vmem:[%s2336 + $0x10] sm:$0xff]
      %v2340 = vld [vmem:[%s2336 + $0x18] sm:$0xff]
      %v2341 = vld [vmem:[%s2336 + $0x20] sm:$0xff]
      %v2342 = vld [vmem:[%s2336 + $0x28] sm:$0xff]
      %v2343 = vld [vmem:[%s2336 + $0x30] sm:$0xff]
      %v2344 = vld [vmem:[%s2336 + $0x38] sm:$0xff]
      %2345 = vmatpush.msra.mxu0 0.0
      %2346 = vmatpush.msra.mxu0 0.0
      %2347 = vmatpush.msra.mxu0 0.0
      %2348 = vmatpush.msra.mxu0 0.0
      %2349 = vmatpush.msra.mxu0 0.0
      %2350 = vmatpush.msra.mxu0 0.0
      %2351 = vmatpush.msra.mxu0 0.0
      %2352 = vmatpush.msra.mxu0 0.0
      %2353 = vmatpush.msra.mxu0 %v2344
      %2354 = vmatpush.msra.mxu0 %v2343
      %2355 = vmatpush.msra.mxu0 %v2342
      %2356 = vmatpush.msra.mxu0 %v2341
      %2357 = vmatpush.msra.mxu0 %v2340
      %2358 = vmatpush.msra.mxu0 %v2339
      %2359 = vmatpush.msra.mxu0 %v2338
      %2360 = vmatpush.msra.mxu0 %v2337
      %2361 = vmatmul.f32.gmra.mxu0 %v1494
      %v2362 = vpop.f32.mrf.mxu0
      %v2363 = vadd.f32 0.0, %v2362
      %2364 = vmatmul.f32.gmra.mxu0 %v1497
      %v2365 = vpop.f32.mrf.mxu0
      %v2366 = vadd.f32 0.0, %v2365
      %2367 = vmatmul.f32.gmra.mxu0 %v1500
      %v2368 = vpop.f32.mrf.mxu0
      %v2369 = vadd.f32 0.0, %v2368
      %2370 = vmatmul.f32.gmra.mxu0 %v1503
      %v2371 = vpop.f32.mrf.mxu0
      %v2372 = vadd.f32 0.0, %v2371
      %2373 = vdwg.mxu0
      %s2374 = scalar_lea.vmem %s4, 448
      %v2375 = vld [vmem:[%s2374] sm:$0xff]
      %v2376 = vld [vmem:[%s2374 + $0x8] sm:$0xff]
      %v2377 = vld [vmem:[%s2374 + $0x10] sm:$0xff]
      %v2378 = vld [vmem:[%s2374 + $0x18] sm:$0xff]
      %v2379 = vld [vmem:[%s2374 + $0x20] sm:$0xff]
      %v2380 = vld [vmem:[%s2374 + $0x28] sm:$0xff]
      %v2381 = vld [vmem:[%s2374 + $0x30] sm:$0xff]
      %v2382 = vld [vmem:[%s2374 + $0x38] sm:$0xff]
      %v2384 = vsel %vm1542, %v2375, 0
      %v2387 = vsel %vm1542, %v2376, 0
      %v2390 = vsel %vm1542, %v2377, 0
      %v2393 = vsel %vm1542, %v2378, 0
      %v2396 = vsel %vm1542, %v2379, 0
      %v2399 = vsel %vm1542, %v2380, 0
      %v2402 = vsel %vm1542, %v2381, 0
      %v2405 = vsel %vm1542, %v2382, 0
      %2407 = vmatpush.msra.mxu0 0.0
      %2408 = vmatpush.msra.mxu0 0.0
      %2409 = vmatpush.msra.mxu0 0.0
      %2410 = vmatpush.msra.mxu0 0.0
      %2411 = vmatpush.msra.mxu0 0.0
      %2412 = vmatpush.msra.mxu0 0.0
      %2413 = vmatpush.msra.mxu0 0.0
      %2414 = vmatpush.msra.mxu0 0.0
      %2415 = vmatpush.msra.mxu0 0.0
      %2416 = vmatpush.msra.mxu0 0.0
      %2417 = vmatpush.msra.mxu0 0.0
      %2418 = vmatpush.msra.mxu0 0.0
      %2419 = vmatpush.msra.mxu0 %v2372
      %2420 = vmatpush.msra.mxu0 %v2369
      %2421 = vmatpush.msra.mxu0 %v2366
      %2422 = vmatpush.msra.mxu0 %v2363
      %2423 = vmatmul.f32.gmra.mxu0 %v2384
      %v2424 = vpop.f32.mrf.mxu0
      %v2425 = vadd.f32 0.0, %v2424
      %2426 = vmatmul.f32.gmra.mxu0 %v2387
      %v2427 = vpop.f32.mrf.mxu0
      %v2428 = vadd.f32 0.0, %v2427
      %2429 = vmatmul.f32.gmra.mxu0 %v2390
      %v2430 = vpop.f32.mrf.mxu0
      %v2431 = vadd.f32 0.0, %v2430
      %2432 = vmatmul.f32.gmra.mxu0 %v2393
      %v2433 = vpop.f32.mrf.mxu0
      %v2434 = vadd.f32 0.0, %v2433
      %2435 = vmatmul.f32.gmra.mxu0 %v2396
      %v2436 = vpop.f32.mrf.mxu0
      %v2437 = vadd.f32 0.0, %v2436
      %2438 = vmatmul.f32.gmra.mxu0 %v2399
      %v2439 = vpop.f32.mrf.mxu0
      %v2440 = vadd.f32 0.0, %v2439
      %2441 = vmatmul.f32.gmra.mxu0 %v2402
      %v2442 = vpop.f32.mrf.mxu0
      %v2443 = vadd.f32 0.0, %v2442
      %2444 = vmatmul.f32.gmra.mxu0 %v2405
      %v2445 = vpop.f32.mrf.mxu0
      %v2446 = vadd.f32 0.0, %v2445
      %2447 = vdwg.mxu0
      %v2448 = vadd.f32 %v2328, %v2425
      %v2449 = vadd.f32 %v2329, %v2428
      %v2450 = vadd.f32 %v2330, %v2431
      %v2451 = vadd.f32 %v2331, %v2434
      %v2452 = vadd.f32 %v2332, %v2437
      %v2453 = vadd.f32 %v2333, %v2440
      %v2454 = vadd.f32 %v2334, %v2443
      %v2455 = vadd.f32 %v2335, %v2446
      %s2456 = scalar_lea.vmem %s6, 512
      %v2457 = vld [vmem:[%s2456] sm:$0xff]
      %v2458 = vld [vmem:[%s2456 + $0x8] sm:$0xff]
      %v2459 = vld [vmem:[%s2456 + $0x10] sm:$0xff]
      %v2460 = vld [vmem:[%s2456 + $0x18] sm:$0xff]
      %v2461 = vld [vmem:[%s2456 + $0x20] sm:$0xff]
      %v2462 = vld [vmem:[%s2456 + $0x28] sm:$0xff]
      %v2463 = vld [vmem:[%s2456 + $0x30] sm:$0xff]
      %v2464 = vld [vmem:[%s2456 + $0x38] sm:$0xff]
      %2465 = vmatpush.msra.mxu0 0.0
      %2466 = vmatpush.msra.mxu0 0.0
      %2467 = vmatpush.msra.mxu0 0.0
      %2468 = vmatpush.msra.mxu0 0.0
      %2469 = vmatpush.msra.mxu0 0.0
      %2470 = vmatpush.msra.mxu0 0.0
      %2471 = vmatpush.msra.mxu0 0.0
      %2472 = vmatpush.msra.mxu0 0.0
      %2473 = vmatpush.msra.mxu0 %v2464
      %2474 = vmatpush.msra.mxu0 %v2463
      %2475 = vmatpush.msra.mxu0 %v2462
      %2476 = vmatpush.msra.mxu0 %v2461
      %2477 = vmatpush.msra.mxu0 %v2460
      %2478 = vmatpush.msra.mxu0 %v2459
      %2479 = vmatpush.msra.mxu0 %v2458
      %2480 = vmatpush.msra.mxu0 %v2457
      %2481 = vmatmul.f32.gmra.mxu0 %v1494
      %v2482 = vpop.f32.mrf.mxu0
      %v2483 = vadd.f32 0.0, %v2482
      %2484 = vmatmul.f32.gmra.mxu0 %v1497
      %v2485 = vpop.f32.mrf.mxu0
      %v2486 = vadd.f32 0.0, %v2485
      %2487 = vmatmul.f32.gmra.mxu0 %v1500
      %v2488 = vpop.f32.mrf.mxu0
      %v2489 = vadd.f32 0.0, %v2488
      %2490 = vmatmul.f32.gmra.mxu0 %v1503
      %v2491 = vpop.f32.mrf.mxu0
      %v2492 = vadd.f32 0.0, %v2491
      %2493 = vdwg.mxu0
      %s2494 = scalar_lea.vmem %s4, 512
      %v2495 = vld [vmem:[%s2494] sm:$0xff]
      %v2496 = vld [vmem:[%s2494 + $0x8] sm:$0xff]
      %v2497 = vld [vmem:[%s2494 + $0x10] sm:$0xff]
      %v2498 = vld [vmem:[%s2494 + $0x18] sm:$0xff]
      %v2499 = vld [vmem:[%s2494 + $0x20] sm:$0xff]
      %v2500 = vld [vmem:[%s2494 + $0x28] sm:$0xff]
      %v2501 = vld [vmem:[%s2494 + $0x30] sm:$0xff]
      %v2502 = vld [vmem:[%s2494 + $0x38] sm:$0xff]
      %v2504 = vsel %vm1542, %v2495, 0
      %v2507 = vsel %vm1542, %v2496, 0
      %v2510 = vsel %vm1542, %v2497, 0
      %v2513 = vsel %vm1542, %v2498, 0
      %v2516 = vsel %vm1542, %v2499, 0
      %v2519 = vsel %vm1542, %v2500, 0
      %v2522 = vsel %vm1542, %v2501, 0
      %v2525 = vsel %vm1542, %v2502, 0
      %2527 = vmatpush.msra.mxu0 0.0
      %2528 = vmatpush.msra.mxu0 0.0
      %2529 = vmatpush.msra.mxu0 0.0
      %2530 = vmatpush.msra.mxu0 0.0
      %2531 = vmatpush.msra.mxu0 0.0
      %2532 = vmatpush.msra.mxu0 0.0
      %2533 = vmatpush.msra.mxu0 0.0
      %2534 = vmatpush.msra.mxu0 0.0
      %2535 = vmatpush.msra.mxu0 0.0
      %2536 = vmatpush.msra.mxu0 0.0
      %2537 = vmatpush.msra.mxu0 0.0
      %2538 = vmatpush.msra.mxu0 0.0
      %2539 = vmatpush.msra.mxu0 %v2492
      %2540 = vmatpush.msra.mxu0 %v2489
      %2541 = vmatpush.msra.mxu0 %v2486
      %2542 = vmatpush.msra.mxu0 %v2483
      %2543 = vmatmul.f32.gmra.mxu0 %v2504
      %v2544 = vpop.f32.mrf.mxu0
      %v2545 = vadd.f32 0.0, %v2544
      %2546 = vmatmul.f32.gmra.mxu0 %v2507
      %v2547 = vpop.f32.mrf.mxu0
      %v2548 = vadd.f32 0.0, %v2547
      %2549 = vmatmul.f32.gmra.mxu0 %v2510
      %v2550 = vpop.f32.mrf.mxu0
      %v2551 = vadd.f32 0.0, %v2550
      %2552 = vmatmul.f32.gmra.mxu0 %v2513
      %v2553 = vpop.f32.mrf.mxu0
      %v2554 = vadd.f32 0.0, %v2553
      %2555 = vmatmul.f32.gmra.mxu0 %v2516
      %v2556 = vpop.f32.mrf.mxu0
      %v2557 = vadd.f32 0.0, %v2556
      %2558 = vmatmul.f32.gmra.mxu0 %v2519
      %v2559 = vpop.f32.mrf.mxu0
      %v2560 = vadd.f32 0.0, %v2559
      %2561 = vmatmul.f32.gmra.mxu0 %v2522
      %v2562 = vpop.f32.mrf.mxu0
      %v2563 = vadd.f32 0.0, %v2562
      %2564 = vmatmul.f32.gmra.mxu0 %v2525
      %v2565 = vpop.f32.mrf.mxu0
      %v2566 = vadd.f32 0.0, %v2565
      %2567 = vdwg.mxu0
      %v2568 = vadd.f32 %v2448, %v2545
      %v2569 = vadd.f32 %v2449, %v2548
      %v2570 = vadd.f32 %v2450, %v2551
      %v2571 = vadd.f32 %v2451, %v2554
      %v2572 = vadd.f32 %v2452, %v2557
      %v2573 = vadd.f32 %v2453, %v2560
      %v2574 = vadd.f32 %v2454, %v2563
      %v2575 = vadd.f32 %v2455, %v2566
      %vm2576 = vcmask 130048
      %2577 = vst.msk [vmem:[%s278] sm:$0xff] %vm2576, %v2568
      %2578 = vst.msk [vmem:[%s278 + $0x8] sm:$0xff] %vm2576, %v2569
      %2579 = vst.msk [vmem:[%s278 + $0x10] sm:$0xff] %vm2576, %v2570
      %2580 = vst.msk [vmem:[%s278 + $0x18] sm:$0xff] %vm2576, %v2571
      %2581 = vst.msk [vmem:[%s278 + $0x20] sm:$0xff] %vm2576, %v2572
      %2582 = vst.msk [vmem:[%s278 + $0x28] sm:$0xff] %vm2576, %v2573
      %2583 = vst.msk [vmem:[%s278 + $0x30] sm:$0xff] %vm2576, %v2574
      %2584 = vst.msk [vmem:[%s278 + $0x38] sm:$0xff] %vm2576, %v2575
      %p2585 = scmp.lt.s32.totalorder %s18, 1
      %s2586 = scalar_select %p2585, %s18, 1
      %s2587 = smul.addr %s2586, 8
      %s2588 = smul.addr %s2587, 8
      %s2589 = scalar_lea.vmem %s7, %s2588
      // Predicated region
      $region49: #{conv_deconv_forward.3} parent=47 // pred_check
        %p2590 = pneg %p188
      $region50: #{conv_deconv_forward.3} parent=47 // pred_check_branch
        %2592 = sbr.rel (%p2590) target = $region52
      $region51: #{conv_deconv_forward.3} parent=47 // pred_region
        _
      $region52: #{conv_deconv_forward.3} parent=47 // pred_fallthru
        _
    $region48: #{conv_deconv_forward.3} parent=5 // pred_fallthru
      _
    %p2593 = scmp.le.s32.totalorder 2, %s13
    // Predicated region
    $region53: #{conv_deconv_forward.3} parent=5 // pred_check
      %p2594 = pneg %p2593
    $region54: #{conv_deconv_forward.3} parent=5 // pred_check_branch
      %2596 = sbr.rel (%p2594) target = $region56
    $region55: #{conv_deconv_forward.3} parent=5 // pred_region
      %s2597 = ssub.s32 %s13, 2
      // Predicated region
      $region57: #{conv_deconv_forward.3} parent=55 // pred_check
        %p2598 = pneg %p194
      $region58: #{conv_deconv_forward.3} parent=55 // pred_check_branch
        %2600 = sbr.rel (%p2598) target = $region60
      $region59: #{conv_deconv_forward.3} parent=55 // pred_region
        %p2601 = scmp.lt.s32.totalorder %s19, 1
        %s2602 = scalar_select %p2601, %s19, 1
        %s2603 = smul.addr %s2602, 8
        %s2604 = smul.addr %s2603, 8
        %s2605 = scalar_lea.vmem %s7, %s2604
      $region60: #{conv_deconv_forward.3} parent=55 // pred_fallthru
        _
    $region56: #{conv_deconv_forward.3} parent=5 // pred_fallthru
      _
  $region6: #{conv_deconv_forward.3} parent=0 // loop_footer
    %s17 = sadd.s32 1, %s13
  $region7: #{conv_deconv_forward.3} parent=0 // loop_footer_branch
    %12 = sbr.rel target = $region3
  $region8: #{conv_deconv_forward.3} parent=0 // loop_exit
    _

</llo_original>
